<compile_context>
chip_gen: v6e
topology: v6e:2x2x1
jax: 0.10.0
libtpu: 0.0.40
codegen_flags: <defaults>
</compile_context>

<pallas_src>
import functools

import jax
import jax.numpy as jnp
from jax.experimental import pallas as pl
from jax.experimental.pallas import tpu as pltpu


def _round_up(v, mult):
    return ((v + mult - 1) // mult) * mult


def vfe_kernel(x_ref, w_ref, shift_ref, out_ref, *,
               points_per_voxel, valid_points, max_out, cat_max):
    """One grid step = `tile_n` voxels worth of point rows, flattened to 2D.

    x_ref:     (TR, Cin)    caller dtype, TR = tile_n * points_per_voxel rows
    w_ref:     (Cin, Cout)  bf16, Linear weight with the BN scale pre-folded
    shift_ref: (1, Cout)    f32, folded BN shift = beta - mean * scale
    out_ref:   (TR, 2*Cout) concat mode | (tile_n, 1, Cout) compact-max mode
               | (TR, Cout) pointwise mode
    """
    m = points_per_voxel
    tr = x_ref.shape[0]
    cout = w_ref.shape[1]
    tile_n = tr // m

    # bf16 cast fused here (no wrapper-side HBM pass); MXU matmul, f32 accumulation.
    x = x_ref[...].astype(jnp.bfloat16)
    y = jnp.dot(x, w_ref[...], preferred_element_type=jnp.float32)
    # Folded BN shift + ReLU on the VPU.
    y = jnp.maximum(y + shift_ref[...], 0.0)                      # (TR, Cout) f32

    if not max_out:
        out_ref[...] = y.astype(out_ref.dtype)
        return

    # Per-voxel max over points: sublane (XLU) reduction. The (TR, Cout) ->
    # (tile_n, m, Cout) reshape is layout-preserving because the wrapper
    # guarantees m % 8 == 0 (it pads the point axis in the rare other case).
    y3 = y.reshape(tile_n, m, cout)
    if valid_points != m:
        # Padded point rows (they hold relu(shift) >= 0) must not win the max.
        pid = jax.lax.broadcasted_iota(jnp.int32, (1, m, 1), 1)
        y3 = jnp.where(pid < valid_points, y3, -jnp.inf)
    agg = jnp.max(y3, axis=1, keepdims=True)                      # (tile_n, 1, Cout)

    if not cat_max:
        # Compact per-voxel output block: (tile_n, 1, Cout). The keepdims layout
        # matches the output window, so no in-register squeeze/relayout is needed.
        out_ref[...] = agg.astype(out_ref.dtype)
        return

    rep = jnp.broadcast_to(agg, (tile_n, m, cout)).reshape(tr, cout)
    # Two static slice stores instead of a concatenate: no (TR, 2*Cout) temporary.
    out_ref[:, 0:cout] = y.astype(out_ref.dtype)
    out_ref[:, cout:2 * cout] = rep.astype(out_ref.dtype)


def vfe_layer(inputs, weight, bn_gamma, bn_beta, bn_mean, bn_var, *,
              eps=1e-3, max_out=True, cat_max=True,
              tile_rows=8192, out_dtype=jnp.float32):
    """VFELayer forward (inference BatchNorm folded into the linear weight).

    inputs: (N, M, Cin) point features per voxel.
    weight: (Cout, Cin) nn.Linear weight (bias=False).

    Returns (out_fp32 by default, matching @auto_fp16(out_fp32=True)):
      max_out=False:                pointwise features       (N, M, Cout)
      max_out=True, cat_max=False:  per-voxel max features   (N, Cout)
      max_out=True, cat_max=True:   concat([pointwise, max]) (N, M, 2*Cout)
    """
    n, m, cin = inputs.shape
    cout = weight.shape[0]

    # Fold inference BatchNorm1d into the linear weight (scale) and a shift.
    scale = bn_gamma / jnp.sqrt(bn_var + eps)                      # (Cout,)
    shift = (bn_beta - bn_mean * scale).astype(jnp.float32).reshape(1, cout)
    w = (weight.T * scale[None, :]).astype(jnp.bfloat16)           # (Cin, Cout)

    # The per-voxel max needs a layout-free (rows, C) <-> (voxels, points, C)
    # reshape in the kernel, which requires M to be a sublane multiple.
    needs_mpad = max_out and (m % 8 != 0)
    m_pad = _round_up(m, 8) if needs_mpad else m
    x = inputs
    if needs_mpad:
        # TODO(synk): one extra HBM pass over the (small) input; only taken for
        # M % 8 != 0. Padded point rows are masked out of the max in-kernel.
        x = jnp.pad(inputs, ((0, 0), (0, m_pad - m), (0, 0)))

    # Lane-friendly 2D view: rows = voxel*point (voxel-major), channels on lanes.
    # No bf16 cast and no voxel-axis padding here; ragged N is handled by Pallas
    # edge-block clipping (garbage rows belong only to out-of-range voxels).
    x2 = x.reshape(n * m_pad, cin)
    out_cols = (2 * cout) if (max_out and cat_max) else cout

    # --- Tile sizing ---------------------------------------------------------
    # Target >= ~8K point rows per grid step (amortizes ~0.35us/step pipeline
    # overhead), capped by a conservative VMEM budget: double-buffered, lane-
    # padded in/out windows plus ~4 f32 temporaries per row must stay well under
    # v7x's 64 MiB per TensorCore (v5e/v6e: 128 MiB physical).
    lane = 128
    in_row = lane * jnp.dtype(x2.dtype).itemsize          # lane-padded input window
    out_row = max(lane, out_cols) * jnp.dtype(out_dtype).itemsize
    tmp_row = 4 * lane * 4                                 # ~4 f32 temporaries / row
    if max_out and not cat_max:
        per_row = 2 * in_row + tmp_row                     # output window is per-voxel
    else:
        per_row = 2 * in_row + 2 * out_row + tmp_row
    budget_rows = max(8 * m_pad, (36 * 1024 * 1024) // per_row)
    target_rows = min(max(tile_rows, m_pad), budget_rows)

    tile_n = max(8, (target_rows // m_pad) // 8 * 8)
    tile_n = min(tile_n, _round_up(n, 8))
    n_tiles = pl.cdiv(n, tile_n)
    # v7x has 2 TensorCores per chip: keep >= 2 grid steps so the "parallel"
    # axis can shard across both when the whole input would fit one tile.
    if n_tiles == 1 and n >= 16:
        tile_n = max(8, _round_up(pl.cdiv(n, 2), 8))
        n_tiles = pl.cdiv(n, tile_n)
    tr = tile_n * m_pad

    if not max_out:
        out_shape_s = (n * m_pad, cout)
        out_spec = pl.BlockSpec((tr, cout), lambda i: (i, 0))
    elif not cat_max:
        out_shape_s = (n, 1, cout)
        out_spec = pl.BlockSpec((tile_n, 1, cout), lambda i: (i, 0, 0))
    else:
        out_shape_s = (n * m_pad, 2 * cout)
        out_spec = pl.BlockSpec((tr, 2 * cout), lambda i: (i, 0))

    out_bytes = 1
    for d in out_shape_s:
        out_bytes *= d
    out_bytes *= jnp.dtype(out_dtype).itemsize
    cost = pl.CostEstimate(
        flops=2 * n * m_pad * cin * cout,
        transcendentals=0,
        bytes_accessed=x2.size * x2.dtype.itemsize + w.size * 2 + shift.size * 4
        + out_bytes,
    )

    kernel = functools.partial(
        vfe_kernel, points_per_voxel=m_pad, valid_points=m,
        max_out=max_out, cat_max=cat_max)

    out2 = pl.pallas_call(
        kernel,
        out_shape=jax.ShapeDtypeStruct(out_shape_s, out_dtype),
        grid_spec=pltpu.PrefetchScalarGridSpec(
            num_scalar_prefetch=0,
            grid=(n_tiles,),
            in_specs=[
                pl.BlockSpec((tr, cin), lambda i: (i, 0)),
                pl.BlockSpec((cin, cout), lambda i: (0, 0)),
                pl.BlockSpec((1, cout), lambda i: (0, 0)),
            ],
            out_specs=out_spec,
        ),
        compiler_params=pltpu.CompilerParams(
            # Voxel tiles are independent -> shard across v7x's two TensorCores.
            dimension_semantics=("parallel",),
            # Above the 16/32 MiB scoped defaults, below v7x's 64 MiB physical
            # per-TensorCore VMEM (v5e/v6e have 128 MiB).
            vmem_limit_bytes=48 * 1024 * 1024,
        ),
        cost_estimate=cost,
    )(x2, w, shift)

    if not max_out:
        return out2.reshape(n, m_pad, cout)
    if not cat_max:
        return out2.reshape(n, cout)
    out3 = out2.reshape(n, m_pad, 2 * cout)
    return out3[:, :m] if needs_mpad else out3


def vfe_layer_ref(inputs, weight, bn_gamma, bn_beta, bn_mean, bn_var,
                  eps=1e-3, max_out=True, cat_max=True):
    """Pure-JAX reference mirroring the PyTorch forward (same bf16 I/O as kernel)."""
    scale = bn_gamma / jnp.sqrt(bn_var + eps)
    shift = bn_beta - bn_mean * scale
    w = (weight.T * scale[None, :]).astype(jnp.bfloat16)
    x = inputs.astype(jnp.bfloat16)
    y = jax.lax.dot_general(
        x, w, dimension_numbers=(((2,), (0,)), ((), ())),
        preferred_element_type=jnp.float32)
    pointwise = jax.nn.relu(y + shift[None, None, :])
    if not max_out:
        return pointwise
    aggregated = jnp.max(pointwise, axis=1, keepdims=True)
    if not cat_max:
        return aggregated[:, 0, :]
    repeated = jnp.broadcast_to(aggregated, pointwise.shape)
    return jnp.concatenate([pointwise, repeated], axis=-1)


if __name__ == "__main__":
    key = jax.random.PRNGKey(0)

    def make_case(k, n, m, cin, cout):
        k_in, k_w, k_g, k_b, k_m, k_v = jax.random.split(k, 6)
        inputs = jax.random.normal(k_in, (n, m, cin), dtype=jnp.float32)
        weight = jax.random.normal(k_w, (cout, cin), dtype=jnp.float32) * 0.1
        g = 1.0 + 0.1 * jax.random.normal(k_g, (cout,), dtype=jnp.float32)
        b = 0.1 * jax.random.normal(k_b, (cout,), dtype=jnp.float32)
        mu = 0.1 * jax.random.normal(k_m, (cout,), dtype=jnp.float32)
        var = jnp.abs(jax.random.normal(k_v, (cout,), dtype=jnp.float32)) + 0.5
        return inputs, weight, g, b, mu, var

    k1, k2 = jax.random.split(key)

    # Case 1: ragged voxel count (200 voxels, 104-voxel tiles -> 2 ragged tiles),
    # M=32 points, Cout=64 so the concatenated output is 128 lanes wide.
    N, M, CIN, COUT = 200, 32, 16, 64
    args1 = make_case(k1, N, M, CIN, COUT)

    out = jax.block_until_ready(vfe_layer(*args1))
    ref = vfe_layer_ref(*args1)
    assert out.shape == (N, M, 2 * COUT), out.shape
    assert jnp.allclose(out, ref, atol=2e-3, rtol=2e-3)

    # Compact per-voxel max variant (max_out=True, cat_max=False).
    out_agg = jax.block_until_ready(vfe_layer(*args1, cat_max=False))
    ref_agg = vfe_layer_ref(*args1, cat_max=False)
    assert out_agg.shape == (N, COUT), out_agg.shape
    assert jnp.allclose(out_agg, ref_agg, atol=2e-3, rtol=2e-3)

    # Pointwise-only variant (max_out=False).
    out_pw = jax.block_until_ready(vfe_layer(*args1, max_out=False))
    ref_pw = vfe_layer_ref(*args1, max_out=False)
    assert out_pw.shape == (N, M, COUT), out_pw.shape
    assert jnp.allclose(out_pw, ref_pw, atol=2e-3, rtol=2e-3)

    # Case 2: small M and a narrow, non-multiple-of-8 Cin, still ragged on N.
    args2 = make_case(k2, 40, 8, 10, 64)
    out2 = jax.block_until_ready(vfe_layer(*args2))
    ref2 = vfe_layer_ref(*args2)
    assert out2.shape == (40, 8, 128), out2.shape
    assert jnp.allclose(out2, ref2, atol=2e-3, rtol=2e-3)

    print("KERNEL_OK")
</pallas_src>

<mosaic_0001>
module attributes {stable_mosaic.version = 11 : i64} {
  func.func @vfe_kernel(%arg0: i32, %arg1: memref<3328x16xf32, #tpu.memory_space<vmem>>, %arg2: memref<16x64xbf16, #tpu.memory_space<vmem>>, %arg3: memref<1x64xf32, #tpu.memory_space<vmem>>, %arg4: memref<3328x128xf32, #tpu.memory_space<vmem>>) attributes {dimension_semantics = [#tpu.dimension_semantics<parallel>], iteration_bounds = array<i64: 2>, scalar_prefetch = 0 : i64, scratch_operands = 0 : i64, tpu.core_type = #tpu.core_type<tc>, window_params = [{transform_indices = @transform_0, window_bounds = array<i64: 3328, 16>}, {pipeline_mode = #tpu.pipeline_mode<synchronous>, transform_indices = @transform_1, window_bounds = array<i64: 16, 64>}, {pipeline_mode = #tpu.pipeline_mode<synchronous>, transform_indices = @transform_2, window_bounds = array<i64: 1, 64>}, {transform_indices = @transform_3, window_bounds = array<i64: 3328, 128>}]} {
    %c0 = arith.constant 0 : index
    %c0_0 = arith.constant 0 : index
    %0 = vector.load %arg1[%c0, %c0_0] : memref<3328x16xf32, #tpu.memory_space<vmem>>, vector<3328x16xf32>
    %1 = arith.truncf %0 : vector<3328x16xf32> to vector<3328x16xbf16>
    %c0_1 = arith.constant 0 : index
    %c0_2 = arith.constant 0 : index
    %2 = vector.load %arg2[%c0_1, %c0_2] : memref<16x64xbf16, #tpu.memory_space<vmem>>, vector<16x64xbf16>
    %cst = arith.constant dense<0.000000e+00> : vector<3328x64xf32>
    %3 = tpu.matmul %1, %2, %cst {dimension_numbers = #tpu.dot_dimension_numbers<[1], [0], [0], [1], [0, 0, 1, 1], [], []>} : vector<3328x16xbf16>, vector<16x64xbf16>, vector<3328x64xf32> -> vector<3328x64xf32>
    %c0_3 = arith.constant 0 : index
    %c0_4 = arith.constant 0 : index
    %4 = vector.load %arg3[%c0_3, %c0_4] : memref<1x64xf32, #tpu.memory_space<vmem>>, vector<1x64xf32>
    %5 = vector.broadcast %4 : vector<1x64xf32> to vector<3328x64xf32>
    %6 = arith.addf %3, %5 : vector<3328x64xf32>
    %cst_5 = arith.constant 0.000000e+00 : f32
    %7 = vector.broadcast %cst_5 : f32 to vector<3328x64xf32>
    %8 = arith.maximumf %6, %7 : vector<3328x64xf32>
    %9 = vector.shape_cast %8 : vector<3328x64xf32> to vector<104x32x64xf32>
    %cst_6 = arith.constant dense<0xFF800000> : vector<104x64xf32>
    %10 = vector.multi_reduction <maximumf>, %9, %cst_6 [1] : vector<104x32x64xf32> to vector<104x64xf32>
    %11 = vector.shape_cast %10 : vector<104x64xf32> to vector<104x1x64xf32>
    %12 = vector.shape_cast %11 : vector<104x1x64xf32> to vector<104x1x64xf32>
    %13 = vector.broadcast %12 : vector<104x1x64xf32> to vector<104x32x64xf32>
    %14 = vector.shape_cast %13 : vector<104x32x64xf32> to vector<3328x64xf32>
    %c0_7 = arith.constant 0 : index
    %c0_8 = arith.constant 0 : index
    %15 = vector.load %arg4[%c0_7, %c0_8] : memref<3328x128xf32, #tpu.memory_space<vmem>>, vector<3328x64xf32>
    tpu.vector_store %arg4[%c0_7, %c0_8], %8 {strides = array<i32>} : memref<3328x128xf32, #tpu.memory_space<vmem>>, vector<3328x64xf32>,
    %c0_9 = arith.constant 0 : index
    %c64 = arith.constant 64 : index
    %16 = vector.load %arg4[%c0_9, %c64] : memref<3328x128xf32, #tpu.memory_space<vmem>>, vector<3328x64xf32>
    tpu.vector_store %arg4[%c0_9, %c64], %14 {strides = array<i32>} : memref<3328x128xf32, #tpu.memory_space<vmem>>, vector<3328x64xf32>,
    return
  }
  func.func @transform_0(%arg0: i32) -> (i32, i32) {
    %c0_i32 = arith.constant 0 : i32
    %c0_i32_0 = arith.constant 0 : i32
    return %arg0, %c0_i32 : i32, i32
  }
  func.func @transform_1(%arg0: i32) -> (i32, i32) {
    %c0_i32 = arith.constant 0 : i32
    %c0_i32_0 = arith.constant 0 : i32
    %c0_i32_1 = arith.constant 0 : i32
    return %c0_i32, %c0_i32_0 : i32, i32
  }
  func.func @transform_2(%arg0: i32) -> (i32, i32) {
    %c0_i32 = arith.constant 0 : i32
    %c0_i32_0 = arith.constant 0 : i32
    %c0_i32_1 = arith.constant 0 : i32
    return %c0_i32, %c0_i32_0 : i32, i32
  }
  func.func @transform_3(%arg0: i32) -> (i32, i32) {
    %c0_i32 = arith.constant 0 : i32
    %c0_i32_0 = arith.constant 0 : i32
    return %arg0, %c0_i32 : i32, i32
  }
}

</mosaic_0001>

<llo_original>
// kernel: tpu_custom_call.1
$region0: #{tpu_custom_call.1}
  #allocation0 [shape = 'u32[]', space=smem, size = 0x4, offset = 0x4, fixed_abs, tag = 'smem constant byte address 0x4 - core index']
  #allocation1 [shape = 'u32[144,128]{1,0:T(1,128)}', space=vmem, size = 0x12000, scoped, tag = 'internal scratch']
  %s0 = inlined_call_operand.vmem [shape: f32[6400,16], index: 0, kind: input, shape index: {}]
  %s1 = inlined_call_operand.vmem [shape: bf16[16,64], index: 1, kind: input, shape index: {}]
  %s2 = inlined_call_operand.vmem [shape: f32[1,64], index: 2, kind: input, shape index: {}]
  %s3 = inlined_call_operand.hbm [shape: f32[6400,128], index: 3, kind: output, shape index: {}]
  %s4 = sld [smem:[#allocation0]]
  $region45: #{tpu_custom_call.1} parent=0
    _
  %s6 = ssub.s32 1, %s4
  %s7 = scalar_select 0, %s6, %s4
  $region1: #{tpu_custom_call.1} parent=0
    #allocation2 [shape = 'u8[3407872]{0}', space=vmem, size = 0x340000, scoped, tag = 'output window, operand 0']
    #allocation3 [shape = 's32[2]{0}', space=sflag, size = 0x8, scoped, tag = 'scoped memory for tpu_custom_call.1']
    %8 = vsyncpa [#allocation3], 0
    %s9 = scalar_lea.sflag [#allocation3], 1
    %10 = vsyncpa %s9, 0
    loop: start=0, step=1, limit=4
    $region2: #{tpu_custom_call.1} parent=1 // loop_pre_header
      _
    $region3: #{tpu_custom_call.1} parent=1 // loop_header
      %s12 = sphi 0, %s16
      %p13 = scmp.ge.s32.totalorder %s12, 4
      %s22 = sphi 0, %s24
      %s25 = sphi 0, %s22
      %s26 = sphi 0, %s25
      %s42 = sphi 0, %s26
      %s46 = sphi 0, %s46
      %s48 = sphi 0, %s46
      %s49 = sphi 0, %s48
      %s63 = sphi 0, %s49
      %s67 = sphi 0, %s67
      %s69 = sphi 0, %s67
      %s70 = sphi 0, %s69
      %s84 = sphi 0, %s70
      %s90 = sphi 0, %s92
      %s93 = sphi 0, %s90
      %s94 = sphi 0, %s93
      %s110 = sphi 0, %s94
    $region4: #{tpu_custom_call.1} parent=1 // loop_header_branch
      %15 = sbr.rel (%p13) target = $region8
    $region5: #{tpu_custom_call.1} parent=1 // loop_body
      %s17 = ssub.s32 %s12, 1
      %s18 = ssub.s32 %s12, 2
      %s19 = sadd.s32 %s12, 1
      %s20 = ssub.s32 %s12, %s19
      %p21 = scmp.eq.s32.totalorder %s20, 0
      %s23 = sadd.s32 %s22, 1
      %s24 = scalar_select %p21, %s22, %s23
      %p27 = pneg %p21
      %p28 = scmp.eq.s32.totalorder %s12, 1
      %p29 = por %p27, %p28
      %p30 = scmp.ne.s32.totalorder %s22, %s25
      %p31 = scmp.eq.s32.totalorder %s12, 0
      %p32 = por %p30, %p31
      %p33 = scmp.ne.s32.totalorder %s22, %s25
      %p34 = scmp.eq.s32.totalorder %s17, 1
      %p35 = por %p33, %p34
      %p36 = scmp.ne.s32.totalorder %s25, %s26
      %p37 = scmp.eq.s32.totalorder %s17, 0
      %p38 = por %p36, %p37
      %p39 = scmp.ne.s32.totalorder %s25, %s26
      %p40 = scmp.eq.s32.totalorder %s18, 1
      %p41 = por %p39, %p40
      %p43 = scmp.ne.s32.totalorder %s26, %s42
      %p44 = scmp.eq.s32.totalorder %s18, 0
      %p45 = por %p43, %p44
      %s47 = sadd.s32 %s46, 1
      %p50 = scmp.eq.s32.totalorder %s12, 1
      %p51 = scmp.ne.s32.totalorder %s46, %s48
      %p52 = scmp.eq.s32.totalorder %s12, 0
      %p53 = por %p51, %p52
      %p54 = scmp.ne.s32.totalorder %s46, %s48
      %p55 = scmp.eq.s32.totalorder %s17, 1
      %p56 = por %p54, %p55
      %p57 = scmp.ne.s32.totalorder %s48, %s49
      %p58 = scmp.eq.s32.totalorder %s17, 0
      %p59 = por %p57, %p58
      %p60 = scmp.ne.s32.totalorder %s48, %s49
      %p61 = scmp.eq.s32.totalorder %s18, 1
      %p62 = por %p60, %p61
      %p64 = scmp.ne.s32.totalorder %s49, %s63
      %p65 = scmp.eq.s32.totalorder %s18, 0
      %p66 = por %p64, %p65
      %s68 = sadd.s32 %s67, 1
      %p71 = scmp.eq.s32.totalorder %s12, 1
      %p72 = scmp.ne.s32.totalorder %s67, %s69
      %p73 = scmp.eq.s32.totalorder %s12, 0
      %p74 = por %p72, %p73
      %p75 = scmp.ne.s32.totalorder %s67, %s69
      %p76 = scmp.eq.s32.totalorder %s17, 1
      %p77 = por %p75, %p76
      %p78 = scmp.ne.s32.totalorder %s69, %s70
      %p79 = scmp.eq.s32.totalorder %s17, 0
      %p80 = por %p78, %p79
      %p81 = scmp.ne.s32.totalorder %s69, %s70
      %p82 = scmp.eq.s32.totalorder %s18, 1
      %p83 = por %p81, %p82
      %p85 = scmp.ne.s32.totalorder %s70, %s84
      %p86 = scmp.eq.s32.totalorder %s18, 0
      %p87 = por %p85, %p86
      %s88 = ssub.s32 %s12, %s19
      %p89 = scmp.eq.s32.totalorder %s88, 0
      %s91 = sadd.s32 %s90, 1
      %s92 = scalar_select %p89, %s90, %s91
      %p95 = pneg %p89
      %p96 = scmp.eq.s32.totalorder %s12, 1
      %p97 = por %p95, %p96
      %p98 = scmp.ne.s32.totalorder %s90, %s93
      %p99 = scmp.eq.s32.totalorder %s12, 0
      %p100 = por %p98, %p99
      %p101 = scmp.ne.s32.totalorder %s90, %s93
      %p102 = scmp.eq.s32.totalorder %s17, 1
      %p103 = por %p101, %p102
      %p104 = scmp.ne.s32.totalorder %s93, %s94
      %p105 = scmp.eq.s32.totalorder %s17, 0
      %p106 = por %p104, %p105
      %p107 = scmp.ne.s32.totalorder %s93, %s94
      %p108 = scmp.eq.s32.totalorder %s18, 1
      %p109 = por %p107, %p108
      %p111 = scmp.ne.s32.totalorder %s94, %s110
      %p112 = scmp.eq.s32.totalorder %s18, 0
      %p113 = por %p111, %p112
      %p114 = scmp.le.s32.totalorder 1, %s12
      %p115 = scmp.lt.s32.totalorder %s12, 3
      %p116 = pnand %p114, %p115
      %p117 = pneg %p116
      // Predicated region
      $region9: #{tpu_custom_call.1} parent=5 // pred_check
        _
      $region10: #{tpu_custom_call.1} parent=5 // pred_check_branch
        %119 = sbr.rel (%p116) target = $region12
      $region11: #{tpu_custom_call.1} parent=5 // pred_region
        %s120 = ssub.s32 %s12, 1
        // Predicated region
        $region13: #{tpu_custom_call.1} parent=11 // pred_check
          %p121 = pneg %p59
        $region14: #{tpu_custom_call.1} parent=11 // pred_check_branch
          %123 = sbr.rel (%p121) target = $region16
        $region15: #{tpu_custom_call.1} parent=11 // pred_region
          _
        $region16: #{tpu_custom_call.1} parent=11 // pred_fallthru
          _
        // Predicated region
        $region17: #{tpu_custom_call.1} parent=11 // pred_check
          %p124 = pneg %p80
        $region18: #{tpu_custom_call.1} parent=11 // pred_check_branch
          %126 = sbr.rel (%p124) target = $region20
        $region19: #{tpu_custom_call.1} parent=11 // pred_region
          _
        $region20: #{tpu_custom_call.1} parent=11 // pred_fallthru
          _
      $region12: #{tpu_custom_call.1} parent=5 // pred_fallthru
        _
      %p127 = scmp.lt.s32.totalorder %s12, 2
      // Predicated region
      $region21: #{tpu_custom_call.1} parent=5 // pred_check
        %p128 = pneg %p127
      $region22: #{tpu_custom_call.1} parent=5 // pred_check_branch
        %130 = sbr.rel (%p128) target = $region24
      $region23: #{tpu_custom_call.1} parent=5 // pred_region
        // Predicated region
        $region25: #{tpu_custom_call.1} parent=23 // pred_check
          %p131 = pneg %p32
        $region26: #{tpu_custom_call.1} parent=23 // pred_check_branch
          %133 = sbr.rel (%p131) target = $region28
        $region27: #{tpu_custom_call.1} parent=23 // pred_region
          %s134 = smul.u32 416, %s12
          %s135 = ssub.s32 800, %s134
          %p136 = scmp.lt.s32.totalorder %s135, 416
          %s137 = scalar_select %p136, %s135, 416
          %s138 = smul.u32 128, %s137
          %p139 = scmp.lt.s32.totalorder %s134, 799
          %s140 = scalar_select %p139, %s134, 799
          %s141 = smul.addr %s140, 8
          %s142 = scalar_lea.vmem %s0, %s141
          %s143 = smul.u32 416, %s12
          %s144 = ssub.s32 800, %s143
          %p145 = scmp.lt.s32.totalorder %s144, 416
          %s146 = scalar_select %p145, %s144, 416
          %s147 = smul.u32 128, %s146
        $region28: #{tpu_custom_call.1} parent=23 // pred_fallthru
          _
      $region24: #{tpu_custom_call.1} parent=5 // pred_fallthru
        _
      %p148 = scmp.le.s32.totalorder 1, %s12
      %p149 = scmp.lt.s32.totalorder %s12, 3
      %p150 = pnand %p148, %p149
      %p151 = pneg %p150
      // Predicated region
      $region29: #{tpu_custom_call.1} parent=5 // pred_check
        _
      $region30: #{tpu_custom_call.1} parent=5 // pred_check_branch
        %153 = sbr.rel (%p150) target = $region32
      $region31: #{tpu_custom_call.1} parent=5 // pred_region
        %s154 = ssub.s32 %s12, 1
        %s155 = smul.u32 416, %s17
        %s156 = ssub.s32 800, %s155
        %p157 = scmp.lt.s32.totalorder %s156, 416
        %s158 = scalar_select %p157, %s156, 416
        %s159 = smul.u32 128, %s158
        %p160 = scmp.lt.s32.totalorder %s155, 799
        %s161 = scalar_select %p160, %s155, 799
        %s162 = smul.addr %s161, 8
        %s163 = scalar_lea.vmem %s0, %s162
        %p164 = pneg %p38
        %p165 = pneg %p35
        %p166 = pneg %p59
        %p167 = pneg %p56
        %p168 = pneg %p80
        %p169 = pneg %p77
        %p170 = pneg %p106
        %p171 = pneg %p103
        %s172 = sand.u32 %s93, 1
        %s173 = scalar_lea.sflag [#allocation3], %s172
        %s174 = sand.u32 %s93, 1
        %s175 = smul.addr %s174, 3328
        %s176 = scalar_lea.vmem [#allocation2], %s175
        %s177 = smul.u32 416, %s17
        %s178 = ssub.s32 800, %s177
        %p179 = scmp.lt.s32.totalorder %s178, 416
        %s180 = scalar_select %p179, %s178, 416
        %s181 = smul.u32 128, %s180
        %p182 = scmp.lt.s32.totalorder %s177, 799
        %s183 = scalar_select %p182, %s177, 799
        %s184 = smul.addr %s183, 8
        %s185 = scalar_lea.vmem %s0, %s184
        %s186 = smul.u32 416, %s17
        %s187 = ssub.s32 800, %s186
        %p188 = scmp.lt.s32.totalorder %s187, 416
        %s189 = scalar_select %p188, %s187, 416
        %s190 = smul.u32 128, %s189
        %s191 = smul.u32 416, %s17
        %s192 = ssub.s32 800, %s191
        %p193 = scmp.lt.s32.totalorder %s192, 416
        %s194 = scalar_select %p193, %s192, 416
        %s195 = smul.u32 128, %s194
        %v197 = vld [vmem:[%s185] sm:$0xff]
        %v198 = vld [vmem:[%s185 + $0x8] sm:$0xff]
        %v199 = vld [vmem:[%s185 + $0x10] sm:$0xff]
        %v200 = vld [vmem:[%s185 + $0x18] sm:$0xff]
        %v201 = vld [vmem:[%s185 + $0x20] sm:$0xff]
        %v202 = vld [vmem:[%s185 + $0x28] sm:$0xff]
        %v203 = vld [vmem:[%s185 + $0x30] sm:$0xff]
        %v204 = vld [vmem:[%s185 + $0x38] sm:$0xff]
        %v205 = vld [vmem:[%s185 + $0x40] sm:$0xff]
        %v206 = vld [vmem:[%s185 + $0x48] sm:$0xff]
        %v207 = vld [vmem:[%s185 + $0x50] sm:$0xff]
        %v208 = vld [vmem:[%s185 + $0x58] sm:$0xff]
        %v209 = vld [vmem:[%s185 + $0x60] sm:$0xff]
        %v210 = vld [vmem:[%s185 + $0x68] sm:$0xff]
        %v211 = vld [vmem:[%s185 + $0x70] sm:$0xff]
        %v212 = vld [vmem:[%s185 + $0x78] sm:$0xff]
        %v213 = vld [vmem:[%s185 + $0x80] sm:$0xff]
        %v214 = vld [vmem:[%s185 + $0x88] sm:$0xff]
        %v215 = vld [vmem:[%s185 + $0x90] sm:$0xff]
        %v216 = vld [vmem:[%s185 + $0x98] sm:$0xff]
        %v217 = vld [vmem:[%s185 + $0xa0] sm:$0xff]
        %v218 = vld [vmem:[%s185 + $0xa8] sm:$0xff]
        %v219 = vld [vmem:[%s185 + $0xb0] sm:$0xff]
        %v220 = vld [vmem:[%s185 + $0xb8] sm:$0xff]
        %v221 = vld [vmem:[%s185 + $0xc0] sm:$0xff]
        %v222 = vld [vmem:[%s185 + $0xc8] sm:$0xff]
        %v223 = vld [vmem:[%s185 + $0xd0] sm:$0xff]
        %v224 = vld [vmem:[%s185 + $0xd8] sm:$0xff]
        %v225 = vld [vmem:[%s185 + $0xe0] sm:$0xff]
        %v226 = vld [vmem:[%s185 + $0xe8] sm:$0xff]
        %v227 = vld [vmem:[%s185 + $0xf0] sm:$0xff]
        %v228 = vld [vmem:[%s185 + $0xf8] sm:$0xff]
        %v229 = vld [vmem:[%s185 + $0x100] sm:$0xff]
        %v230 = vld [vmem:[%s185 + $0x108] sm:$0xff]
        %v231 = vld [vmem:[%s185 + $0x110] sm:$0xff]
        %v232 = vld [vmem:[%s185 + $0x118] sm:$0xff]
        %v233 = vld [vmem:[%s185 + $0x120] sm:$0xff]
        %v234 = vld [vmem:[%s185 + $0x128] sm:$0xff]
        %v235 = vld [vmem:[%s185 + $0x130] sm:$0xff]
        %v236 = vld [vmem:[%s185 + $0x138] sm:$0xff]
        %v237 = vld [vmem:[%s185 + $0x140] sm:$0xff]
        %v238 = vld [vmem:[%s185 + $0x148] sm:$0xff]
        %v239 = vld [vmem:[%s185 + $0x150] sm:$0xff]
        %v240 = vld [vmem:[%s185 + $0x158] sm:$0xff]
        %v241 = vld [vmem:[%s185 + $0x160] sm:$0xff]
        %v242 = vld [vmem:[%s185 + $0x168] sm:$0xff]
        %v243 = vld [vmem:[%s185 + $0x170] sm:$0xff]
        %v244 = vld [vmem:[%s185 + $0x178] sm:$0xff]
        %v245 = vld [vmem:[%s185 + $0x180] sm:$0xff]
        %v246 = vld [vmem:[%s185 + $0x188] sm:$0xff]
        %v247 = vld [vmem:[%s185 + $0x190] sm:$0xff]
        %v248 = vld [vmem:[%s185 + $0x198] sm:$0xff]
        %v249 = vld [vmem:[%s185 + $0x1a0] sm:$0xff]
        %v250 = vld [vmem:[%s185 + $0x1a8] sm:$0xff]
        %v251 = vld [vmem:[%s185 + $0x1b0] sm:$0xff]
        %v252 = vld [vmem:[%s185 + $0x1b8] sm:$0xff]
        %v253 = vld [vmem:[%s185 + $0x1c0] sm:$0xff]
        %v254 = vld [vmem:[%s185 + $0x1c8] sm:$0xff]
        %v255 = vld [vmem:[%s185 + $0x1d0] sm:$0xff]
        %v256 = vld [vmem:[%s185 + $0x1d8] sm:$0xff]
        %v257 = vld [vmem:[%s185 + $0x1e0] sm:$0xff]
        %v258 = vld [vmem:[%s185 + $0x1e8] sm:$0xff]
        %v259 = vld [vmem:[%s185 + $0x1f0] sm:$0xff]
        %v260 = vld [vmem:[%s185 + $0x1f8] sm:$0xff]
        %v261 = vld [vmem:[%s185 + $0x200] sm:$0xff]
        %v262 = vld [vmem:[%s185 + $0x208] sm:$0xff]
        %v263 = vld [vmem:[%s185 + $0x210] sm:$0xff]
        %v264 = vld [vmem:[%s185 + $0x218] sm:$0xff]
        %v265 = vld [vmem:[%s185 + $0x220] sm:$0xff]
        %v266 = vld [vmem:[%s185 + $0x228] sm:$0xff]
        %v267 = vld [vmem:[%s185 + $0x230] sm:$0xff]
        %v268 = vld [vmem:[%s185 + $0x238] sm:$0xff]
        %v269 = vld [vmem:[%s185 + $0x240] sm:$0xff]
        %v270 = vld [vmem:[%s185 + $0x248] sm:$0xff]
        %v271 = vld [vmem:[%s185 + $0x250] sm:$0xff]
        %v272 = vld [vmem:[%s185 + $0x258] sm:$0xff]
        %v273 = vld [vmem:[%s185 + $0x260] sm:$0xff]
        %v274 = vld [vmem:[%s185 + $0x268] sm:$0xff]
        %v275 = vld [vmem:[%s185 + $0x270] sm:$0xff]
        %v276 = vld [vmem:[%s185 + $0x278] sm:$0xff]
        %v277 = vld [vmem:[%s185 + $0x280] sm:$0xff]
        %v278 = vld [vmem:[%s185 + $0x288] sm:$0xff]
        %v279 = vld [vmem:[%s185 + $0x290] sm:$0xff]
        %v280 = vld [vmem:[%s185 + $0x298] sm:$0xff]
        %v281 = vld [vmem:[%s185 + $0x2a0] sm:$0xff]
        %v282 = vld [vmem:[%s185 + $0x2a8] sm:$0xff]
        %v283 = vld [vmem:[%s185 + $0x2b0] sm:$0xff]
        %v284 = vld [vmem:[%s185 + $0x2b8] sm:$0xff]
        %v285 = vld [vmem:[%s185 + $0x2c0] sm:$0xff]
        %v286 = vld [vmem:[%s185 + $0x2c8] sm:$0xff]
        %v287 = vld [vmem:[%s185 + $0x2d0] sm:$0xff]
        %v288 = vld [vmem:[%s185 + $0x2d8] sm:$0xff]
        %v289 = vld [vmem:[%s185 + $0x2e0] sm:$0xff]
        %v290 = vld [vmem:[%s185 + $0x2e8] sm:$0xff]
        %v291 = vld [vmem:[%s185 + $0x2f0] sm:$0xff]
        %v292 = vld [vmem:[%s185 + $0x2f8] sm:$0xff]
        %v293 = vld [vmem:[%s185 + $0x300] sm:$0xff]
        %v294 = vld [vmem:[%s185 + $0x308] sm:$0xff]
        %v295 = vld [vmem:[%s185 + $0x310] sm:$0xff]
        %v296 = vld [vmem:[%s185 + $0x318] sm:$0xff]
        %v297 = vld [vmem:[%s185 + $0x320] sm:$0xff]
        %v298 = vld [vmem:[%s185 + $0x328] sm:$0xff]
        %v299 = vld [vmem:[%s185 + $0x330] sm:$0xff]
        %v300 = vld [vmem:[%s185 + $0x338] sm:$0xff]
        %v301 = vld [vmem:[%s185 + $0x340] sm:$0xff]
        %v302 = vld [vmem:[%s185 + $0x348] sm:$0xff]
        %v303 = vld [vmem:[%s185 + $0x350] sm:$0xff]
        %v304 = vld [vmem:[%s185 + $0x358] sm:$0xff]
        %v305 = vld [vmem:[%s185 + $0x360] sm:$0xff]
        %v306 = vld [vmem:[%s185 + $0x368] sm:$0xff]
        %v307 = vld [vmem:[%s185 + $0x370] sm:$0xff]
        %v308 = vld [vmem:[%s185 + $0x378] sm:$0xff]
        %v309 = vld [vmem:[%s185 + $0x380] sm:$0xff]
        %v310 = vld [vmem:[%s185 + $0x388] sm:$0xff]
        %v311 = vld [vmem:[%s185 + $0x390] sm:$0xff]
        %v312 = vld [vmem:[%s185 + $0x398] sm:$0xff]
        %v313 = vld [vmem:[%s185 + $0x3a0] sm:$0xff]
        %v314 = vld [vmem:[%s185 + $0x3a8] sm:$0xff]
        %v315 = vld [vmem:[%s185 + $0x3b0] sm:$0xff]
        %v316 = vld [vmem:[%s185 + $0x3b8] sm:$0xff]
        %v317 = vld [vmem:[%s185 + $0x3c0] sm:$0xff]
        %v318 = vld [vmem:[%s185 + $0x3c8] sm:$0xff]
        %v319 = vld [vmem:[%s185 + $0x3d0] sm:$0xff]
        %v320 = vld [vmem:[%s185 + $0x3d8] sm:$0xff]
        %v321 = vld [vmem:[%s185 + $0x3e0] sm:$0xff]
        %v322 = vld [vmem:[%s185 + $0x3e8] sm:$0xff]
        %v323 = vld [vmem:[%s185 + $0x3f0] sm:$0xff]
        %v324 = vld [vmem:[%s185 + $0x3f8] sm:$0xff]
        %v325 = vld [vmem:[%s185 + $0x400] sm:$0xff]
        %v326 = vld [vmem:[%s185 + $0x408] sm:$0xff]
        %v327 = vld [vmem:[%s185 + $0x410] sm:$0xff]
        %v328 = vld [vmem:[%s185 + $0x418] sm:$0xff]
        %v329 = vld [vmem:[%s185 + $0x420] sm:$0xff]
        %v330 = vld [vmem:[%s185 + $0x428] sm:$0xff]
        %v331 = vld [vmem:[%s185 + $0x430] sm:$0xff]
        %v332 = vld [vmem:[%s185 + $0x438] sm:$0xff]
        %v333 = vld [vmem:[%s185 + $0x440] sm:$0xff]
        %v334 = vld [vmem:[%s185 + $0x448] sm:$0xff]
        %v335 = vld [vmem:[%s185 + $0x450] sm:$0xff]
        %v336 = vld [vmem:[%s185 + $0x458] sm:$0xff]
        %v337 = vld [vmem:[%s185 + $0x460] sm:$0xff]
        %v338 = vld [vmem:[%s185 + $0x468] sm:$0xff]
        %v339 = vld [vmem:[%s185 + $0x470] sm:$0xff]
        %v340 = vld [vmem:[%s185 + $0x478] sm:$0xff]
        %v341 = vld [vmem:[%s185 + $0x480] sm:$0xff]
        %v342 = vld [vmem:[%s185 + $0x488] sm:$0xff]
        %v343 = vld [vmem:[%s185 + $0x490] sm:$0xff]
        %v344 = vld [vmem:[%s185 + $0x498] sm:$0xff]
        %v345 = vld [vmem:[%s185 + $0x4a0] sm:$0xff]
        %v346 = vld [vmem:[%s185 + $0x4a8] sm:$0xff]
        %v347 = vld [vmem:[%s185 + $0x4b0] sm:$0xff]
        %v348 = vld [vmem:[%s185 + $0x4b8] sm:$0xff]
        %v349 = vld [vmem:[%s185 + $0x4c0] sm:$0xff]
        %v350 = vld [vmem:[%s185 + $0x4c8] sm:$0xff]
        %v351 = vld [vmem:[%s185 + $0x4d0] sm:$0xff]
        %v352 = vld [vmem:[%s185 + $0x4d8] sm:$0xff]
        %v353 = vld [vmem:[%s185 + $0x4e0] sm:$0xff]
        %v354 = vld [vmem:[%s185 + $0x4e8] sm:$0xff]
        %v355 = vld [vmem:[%s185 + $0x4f0] sm:$0xff]
        %v356 = vld [vmem:[%s185 + $0x4f8] sm:$0xff]
        %v357 = vld [vmem:[%s185 + $0x500] sm:$0xff]
        %v358 = vld [vmem:[%s185 + $0x508] sm:$0xff]
        %v359 = vld [vmem:[%s185 + $0x510] sm:$0xff]
        %v360 = vld [vmem:[%s185 + $0x518] sm:$0xff]
        %v361 = vld [vmem:[%s185 + $0x520] sm:$0xff]
        %v362 = vld [vmem:[%s185 + $0x528] sm:$0xff]
        %v363 = vld [vmem:[%s185 + $0x530] sm:$0xff]
        %v364 = vld [vmem:[%s185 + $0x538] sm:$0xff]
        %v365 = vld [vmem:[%s185 + $0x540] sm:$0xff]
        %v366 = vld [vmem:[%s185 + $0x548] sm:$0xff]
        %v367 = vld [vmem:[%s185 + $0x550] sm:$0xff]
        %v368 = vld [vmem:[%s185 + $0x558] sm:$0xff]
        %v369 = vld [vmem:[%s185 + $0x560] sm:$0xff]
        %v370 = vld [vmem:[%s185 + $0x568] sm:$0xff]
        %v371 = vld [vmem:[%s185 + $0x570] sm:$0xff]
        %v372 = vld [vmem:[%s185 + $0x578] sm:$0xff]
        %v373 = vld [vmem:[%s185 + $0x580] sm:$0xff]
        %v374 = vld [vmem:[%s185 + $0x588] sm:$0xff]
        %v375 = vld [vmem:[%s185 + $0x590] sm:$0xff]
        %v376 = vld [vmem:[%s185 + $0x598] sm:$0xff]
        %v377 = vld [vmem:[%s185 + $0x5a0] sm:$0xff]
        %v378 = vld [vmem:[%s185 + $0x5a8] sm:$0xff]
        %v379 = vld [vmem:[%s185 + $0x5b0] sm:$0xff]
        %v380 = vld [vmem:[%s185 + $0x5b8] sm:$0xff]
        %v381 = vld [vmem:[%s185 + $0x5c0] sm:$0xff]
        %v382 = vld [vmem:[%s185 + $0x5c8] sm:$0xff]
        %v383 = vld [vmem:[%s185 + $0x5d0] sm:$0xff]
        %v384 = vld [vmem:[%s185 + $0x5d8] sm:$0xff]
        %v385 = vld [vmem:[%s185 + $0x5e0] sm:$0xff]
        %v386 = vld [vmem:[%s185 + $0x5e8] sm:$0xff]
        %v387 = vld [vmem:[%s185 + $0x5f0] sm:$0xff]
        %v388 = vld [vmem:[%s185 + $0x5f8] sm:$0xff]
        %v389 = vld [vmem:[%s185 + $0x600] sm:$0xff]
        %v390 = vld [vmem:[%s185 + $0x608] sm:$0xff]
        %v391 = vld [vmem:[%s185 + $0x610] sm:$0xff]
        %v392 = vld [vmem:[%s185 + $0x618] sm:$0xff]
        %v393 = vld [vmem:[%s185 + $0x620] sm:$0xff]
        %v394 = vld [vmem:[%s185 + $0x628] sm:$0xff]
        %v395 = vld [vmem:[%s185 + $0x630] sm:$0xff]
        %v396 = vld [vmem:[%s185 + $0x638] sm:$0xff]
        %v397 = vld [vmem:[%s185 + $0x640] sm:$0xff]
        %v398 = vld [vmem:[%s185 + $0x648] sm:$0xff]
        %v399 = vld [vmem:[%s185 + $0x650] sm:$0xff]
        %v400 = vld [vmem:[%s185 + $0x658] sm:$0xff]
        %v401 = vld [vmem:[%s185 + $0x660] sm:$0xff]
        %v402 = vld [vmem:[%s185 + $0x668] sm:$0xff]
        %v403 = vld [vmem:[%s185 + $0x670] sm:$0xff]
        %v404 = vld [vmem:[%s185 + $0x678] sm:$0xff]
        %v405 = vld [vmem:[%s185 + $0x680] sm:$0xff]
        %v406 = vld [vmem:[%s185 + $0x688] sm:$0xff]
        %v407 = vld [vmem:[%s185 + $0x690] sm:$0xff]
        %v408 = vld [vmem:[%s185 + $0x698] sm:$0xff]
        %v409 = vld [vmem:[%s185 + $0x6a0] sm:$0xff]
        %v410 = vld [vmem:[%s185 + $0x6a8] sm:$0xff]
        %v411 = vld [vmem:[%s185 + $0x6b0] sm:$0xff]
        %v412 = vld [vmem:[%s185 + $0x6b8] sm:$0xff]
        %v413 = vld [vmem:[%s185 + $0x6c0] sm:$0xff]
        %v414 = vld [vmem:[%s185 + $0x6c8] sm:$0xff]
        %v415 = vld [vmem:[%s185 + $0x6d0] sm:$0xff]
        %v416 = vld [vmem:[%s185 + $0x6d8] sm:$0xff]
        %v417 = vld [vmem:[%s185 + $0x6e0] sm:$0xff]
        %v418 = vld [vmem:[%s185 + $0x6e8] sm:$0xff]
        %v419 = vld [vmem:[%s185 + $0x6f0] sm:$0xff]
        %v420 = vld [vmem:[%s185 + $0x6f8] sm:$0xff]
        %v421 = vld [vmem:[%s185 + $0x700] sm:$0xff]
        %v422 = vld [vmem:[%s185 + $0x708] sm:$0xff]
        %v423 = vld [vmem:[%s185 + $0x710] sm:$0xff]
        %v424 = vld [vmem:[%s185 + $0x718] sm:$0xff]
        %v425 = vld [vmem:[%s185 + $0x720] sm:$0xff]
        %v426 = vld [vmem:[%s185 + $0x728] sm:$0xff]
        %v427 = vld [vmem:[%s185 + $0x730] sm:$0xff]
        %v428 = vld [vmem:[%s185 + $0x738] sm:$0xff]
        %v429 = vld [vmem:[%s185 + $0x740] sm:$0xff]
        %v430 = vld [vmem:[%s185 + $0x748] sm:$0xff]
        %v431 = vld [vmem:[%s185 + $0x750] sm:$0xff]
        %v432 = vld [vmem:[%s185 + $0x758] sm:$0xff]
        %v433 = vld [vmem:[%s185 + $0x760] sm:$0xff]
        %v434 = vld [vmem:[%s185 + $0x768] sm:$0xff]
        %v435 = vld [vmem:[%s185 + $0x770] sm:$0xff]
        %v436 = vld [vmem:[%s185 + $0x778] sm:$0xff]
        %v437 = vld [vmem:[%s185 + $0x780] sm:$0xff]
        %v438 = vld [vmem:[%s185 + $0x788] sm:$0xff]
        %v439 = vld [vmem:[%s185 + $0x790] sm:$0xff]
        %v440 = vld [vmem:[%s185 + $0x798] sm:$0xff]
        %v441 = vld [vmem:[%s185 + $0x7a0] sm:$0xff]
        %v442 = vld [vmem:[%s185 + $0x7a8] sm:$0xff]
        %v443 = vld [vmem:[%s185 + $0x7b0] sm:$0xff]
        %v444 = vld [vmem:[%s185 + $0x7b8] sm:$0xff]
        %v445 = vld [vmem:[%s185 + $0x7c0] sm:$0xff]
        %v446 = vld [vmem:[%s185 + $0x7c8] sm:$0xff]
        %v447 = vld [vmem:[%s185 + $0x7d0] sm:$0xff]
        %v448 = vld [vmem:[%s185 + $0x7d8] sm:$0xff]
        %v449 = vld [vmem:[%s185 + $0x7e0] sm:$0xff]
        %v450 = vld [vmem:[%s185 + $0x7e8] sm:$0xff]
        %v451 = vld [vmem:[%s185 + $0x7f0] sm:$0xff]
        %v452 = vld [vmem:[%s185 + $0x7f8] sm:$0xff]
        %v453 = vld [vmem:[%s185 + $0x800] sm:$0xff]
        %v454 = vld [vmem:[%s185 + $0x808] sm:$0xff]
        %v455 = vld [vmem:[%s185 + $0x810] sm:$0xff]
        %v456 = vld [vmem:[%s185 + $0x818] sm:$0xff]
        %v457 = vld [vmem:[%s185 + $0x820] sm:$0xff]
        %v458 = vld [vmem:[%s185 + $0x828] sm:$0xff]
        %v459 = vld [vmem:[%s185 + $0x830] sm:$0xff]
        %v460 = vld [vmem:[%s185 + $0x838] sm:$0xff]
        %v461 = vld [vmem:[%s185 + $0x840] sm:$0xff]
        %v462 = vld [vmem:[%s185 + $0x848] sm:$0xff]
        %v463 = vld [vmem:[%s185 + $0x850] sm:$0xff]
        %v464 = vld [vmem:[%s185 + $0x858] sm:$0xff]
        %v465 = vld [vmem:[%s185 + $0x860] sm:$0xff]
        %v466 = vld [vmem:[%s185 + $0x868] sm:$0xff]
        %v467 = vld [vmem:[%s185 + $0x870] sm:$0xff]
        %v468 = vld [vmem:[%s185 + $0x878] sm:$0xff]
        %v469 = vld [vmem:[%s185 + $0x880] sm:$0xff]
        %v470 = vld [vmem:[%s185 + $0x888] sm:$0xff]
        %v471 = vld [vmem:[%s185 + $0x890] sm:$0xff]
        %v472 = vld [vmem:[%s185 + $0x898] sm:$0xff]
        %v473 = vld [vmem:[%s185 + $0x8a0] sm:$0xff]
        %v474 = vld [vmem:[%s185 + $0x8a8] sm:$0xff]
        %v475 = vld [vmem:[%s185 + $0x8b0] sm:$0xff]
        %v476 = vld [vmem:[%s185 + $0x8b8] sm:$0xff]
        %v477 = vld [vmem:[%s185 + $0x8c0] sm:$0xff]
        %v478 = vld [vmem:[%s185 + $0x8c8] sm:$0xff]
        %v479 = vld [vmem:[%s185 + $0x8d0] sm:$0xff]
        %v480 = vld [vmem:[%s185 + $0x8d8] sm:$0xff]
        %v481 = vld [vmem:[%s185 + $0x8e0] sm:$0xff]
        %v482 = vld [vmem:[%s185 + $0x8e8] sm:$0xff]
        %v483 = vld [vmem:[%s185 + $0x8f0] sm:$0xff]
        %v484 = vld [vmem:[%s185 + $0x8f8] sm:$0xff]
        %v485 = vld [vmem:[%s185 + $0x900] sm:$0xff]
        %v486 = vld [vmem:[%s185 + $0x908] sm:$0xff]
        %v487 = vld [vmem:[%s185 + $0x910] sm:$0xff]
        %v488 = vld [vmem:[%s185 + $0x918] sm:$0xff]
        %v489 = vld [vmem:[%s185 + $0x920] sm:$0xff]
        %v490 = vld [vmem:[%s185 + $0x928] sm:$0xff]
        %v491 = vld [vmem:[%s185 + $0x930] sm:$0xff]
        %v492 = vld [vmem:[%s185 + $0x938] sm:$0xff]
        %v493 = vld [vmem:[%s185 + $0x940] sm:$0xff]
        %v494 = vld [vmem:[%s185 + $0x948] sm:$0xff]
        %v495 = vld [vmem:[%s185 + $0x950] sm:$0xff]
        %v496 = vld [vmem:[%s185 + $0x958] sm:$0xff]
        %v497 = vld [vmem:[%s185 + $0x960] sm:$0xff]
        %v498 = vld [vmem:[%s185 + $0x968] sm:$0xff]
        %v499 = vld [vmem:[%s185 + $0x970] sm:$0xff]
        %v500 = vld [vmem:[%s185 + $0x978] sm:$0xff]
        %v501 = vld [vmem:[%s185 + $0x980] sm:$0xff]
        %v502 = vld [vmem:[%s185 + $0x988] sm:$0xff]
        %v503 = vld [vmem:[%s185 + $0x990] sm:$0xff]
        %v504 = vld [vmem:[%s185 + $0x998] sm:$0xff]
        %v505 = vld [vmem:[%s185 + $0x9a0] sm:$0xff]
        %v506 = vld [vmem:[%s185 + $0x9a8] sm:$0xff]
        %v507 = vld [vmem:[%s185 + $0x9b0] sm:$0xff]
        %v508 = vld [vmem:[%s185 + $0x9b8] sm:$0xff]
        %v509 = vld [vmem:[%s185 + $0x9c0] sm:$0xff]
        %v510 = vld [vmem:[%s185 + $0x9c8] sm:$0xff]
        %v511 = vld [vmem:[%s185 + $0x9d0] sm:$0xff]
        %v512 = vld [vmem:[%s185 + $0x9d8] sm:$0xff]
        %v513 = vld [vmem:[%s185 + $0x9e0] sm:$0xff]
        %v514 = vld [vmem:[%s185 + $0x9e8] sm:$0xff]
        %v515 = vld [vmem:[%s185 + $0x9f0] sm:$0xff]
        %v516 = vld [vmem:[%s185 + $0x9f8] sm:$0xff]
        %v517 = vld [vmem:[%s185 + $0xa00] sm:$0xff]
        %v518 = vld [vmem:[%s185 + $0xa08] sm:$0xff]
        %v519 = vld [vmem:[%s185 + $0xa10] sm:$0xff]
        %v520 = vld [vmem:[%s185 + $0xa18] sm:$0xff]
        %v521 = vld [vmem:[%s185 + $0xa20] sm:$0xff]
        %v522 = vld [vmem:[%s185 + $0xa28] sm:$0xff]
        %v523 = vld [vmem:[%s185 + $0xa30] sm:$0xff]
        %v524 = vld [vmem:[%s185 + $0xa38] sm:$0xff]
        %v525 = vld [vmem:[%s185 + $0xa40] sm:$0xff]
        %v526 = vld [vmem:[%s185 + $0xa48] sm:$0xff]
        %v527 = vld [vmem:[%s185 + $0xa50] sm:$0xff]
        %v528 = vld [vmem:[%s185 + $0xa58] sm:$0xff]
        %v529 = vld [vmem:[%s185 + $0xa60] sm:$0xff]
        %v530 = vld [vmem:[%s185 + $0xa68] sm:$0xff]
        %v531 = vld [vmem:[%s185 + $0xa70] sm:$0xff]
        %v532 = vld [vmem:[%s185 + $0xa78] sm:$0xff]
        %v533 = vld [vmem:[%s185 + $0xa80] sm:$0xff]
        %v534 = vld [vmem:[%s185 + $0xa88] sm:$0xff]
        %v535 = vld [vmem:[%s185 + $0xa90] sm:$0xff]
        %v536 = vld [vmem:[%s185 + $0xa98] sm:$0xff]
        %v537 = vld [vmem:[%s185 + $0xaa0] sm:$0xff]
        %v538 = vld [vmem:[%s185 + $0xaa8] sm:$0xff]
        %v539 = vld [vmem:[%s185 + $0xab0] sm:$0xff]
        %v540 = vld [vmem:[%s185 + $0xab8] sm:$0xff]
        %v541 = vld [vmem:[%s185 + $0xac0] sm:$0xff]
        %v542 = vld [vmem:[%s185 + $0xac8] sm:$0xff]
        %v543 = vld [vmem:[%s185 + $0xad0] sm:$0xff]
        %v544 = vld [vmem:[%s185 + $0xad8] sm:$0xff]
        %v545 = vld [vmem:[%s185 + $0xae0] sm:$0xff]
        %v546 = vld [vmem:[%s185 + $0xae8] sm:$0xff]
        %v547 = vld [vmem:[%s185 + $0xaf0] sm:$0xff]
        %v548 = vld [vmem:[%s185 + $0xaf8] sm:$0xff]
        %v549 = vld [vmem:[%s185 + $0xb00] sm:$0xff]
        %v550 = vld [vmem:[%s185 + $0xb08] sm:$0xff]
        %v551 = vld [vmem:[%s185 + $0xb10] sm:$0xff]
        %v552 = vld [vmem:[%s185 + $0xb18] sm:$0xff]
        %v553 = vld [vmem:[%s185 + $0xb20] sm:$0xff]
        %v554 = vld [vmem:[%s185 + $0xb28] sm:$0xff]
        %v555 = vld [vmem:[%s185 + $0xb30] sm:$0xff]
        %v556 = vld [vmem:[%s185 + $0xb38] sm:$0xff]
        %v557 = vld [vmem:[%s185 + $0xb40] sm:$0xff]
        %v558 = vld [vmem:[%s185 + $0xb48] sm:$0xff]
        %v559 = vld [vmem:[%s185 + $0xb50] sm:$0xff]
        %v560 = vld [vmem:[%s185 + $0xb58] sm:$0xff]
        %v561 = vld [vmem:[%s185 + $0xb60] sm:$0xff]
        %v562 = vld [vmem:[%s185 + $0xb68] sm:$0xff]
        %v563 = vld [vmem:[%s185 + $0xb70] sm:$0xff]
        %v564 = vld [vmem:[%s185 + $0xb78] sm:$0xff]
        %v565 = vld [vmem:[%s185 + $0xb80] sm:$0xff]
        %v566 = vld [vmem:[%s185 + $0xb88] sm:$0xff]
        %v567 = vld [vmem:[%s185 + $0xb90] sm:$0xff]
        %v568 = vld [vmem:[%s185 + $0xb98] sm:$0xff]
        %v569 = vld [vmem:[%s185 + $0xba0] sm:$0xff]
        %v570 = vld [vmem:[%s185 + $0xba8] sm:$0xff]
        %v571 = vld [vmem:[%s185 + $0xbb0] sm:$0xff]
        %v572 = vld [vmem:[%s185 + $0xbb8] sm:$0xff]
        %v573 = vld [vmem:[%s185 + $0xbc0] sm:$0xff]
        %v574 = vld [vmem:[%s185 + $0xbc8] sm:$0xff]
        %v575 = vld [vmem:[%s185 + $0xbd0] sm:$0xff]
        %v576 = vld [vmem:[%s185 + $0xbd8] sm:$0xff]
        %v577 = vld [vmem:[%s185 + $0xbe0] sm:$0xff]
        %v578 = vld [vmem:[%s185 + $0xbe8] sm:$0xff]
        %v579 = vld [vmem:[%s185 + $0xbf0] sm:$0xff]
        %v580 = vld [vmem:[%s185 + $0xbf8] sm:$0xff]
        %v581 = vld [vmem:[%s185 + $0xc00] sm:$0xff]
        %v582 = vld [vmem:[%s185 + $0xc08] sm:$0xff]
        %v583 = vld [vmem:[%s185 + $0xc10] sm:$0xff]
        %v584 = vld [vmem:[%s185 + $0xc18] sm:$0xff]
        %v585 = vld [vmem:[%s185 + $0xc20] sm:$0xff]
        %v586 = vld [vmem:[%s185 + $0xc28] sm:$0xff]
        %v587 = vld [vmem:[%s185 + $0xc30] sm:$0xff]
        %v588 = vld [vmem:[%s185 + $0xc38] sm:$0xff]
        %v589 = vld [vmem:[%s185 + $0xc40] sm:$0xff]
        %v590 = vld [vmem:[%s185 + $0xc48] sm:$0xff]
        %v591 = vld [vmem:[%s185 + $0xc50] sm:$0xff]
        %v592 = vld [vmem:[%s185 + $0xc58] sm:$0xff]
        %v593 = vld [vmem:[%s185 + $0xc60] sm:$0xff]
        %v594 = vld [vmem:[%s185 + $0xc68] sm:$0xff]
        %v595 = vld [vmem:[%s185 + $0xc70] sm:$0xff]
        %v596 = vld [vmem:[%s185 + $0xc78] sm:$0xff]
        %v597 = vld [vmem:[%s185 + $0xc80] sm:$0xff]
        %v598 = vld [vmem:[%s185 + $0xc88] sm:$0xff]
        %v599 = vld [vmem:[%s185 + $0xc90] sm:$0xff]
        %v600 = vld [vmem:[%s185 + $0xc98] sm:$0xff]
        %v601 = vld [vmem:[%s185 + $0xca0] sm:$0xff]
        %v602 = vld [vmem:[%s185 + $0xca8] sm:$0xff]
        %v603 = vld [vmem:[%s185 + $0xcb0] sm:$0xff]
        %v604 = vld [vmem:[%s185 + $0xcb8] sm:$0xff]
        %v605 = vld [vmem:[%s185 + $0xcc0] sm:$0xff]
        %v606 = vld [vmem:[%s185 + $0xcc8] sm:$0xff]
        %v607 = vld [vmem:[%s185 + $0xcd0] sm:$0xff]
        %v608 = vld [vmem:[%s185 + $0xcd8] sm:$0xff]
        %v609 = vld [vmem:[%s185 + $0xce0] sm:$0xff]
        %v610 = vld [vmem:[%s185 + $0xce8] sm:$0xff]
        %v611 = vld [vmem:[%s185 + $0xcf0] sm:$0xff]
        %v612 = vld [vmem:[%s185 + $0xcf8] sm:$0xff]
        %v613 = vpack.c.bf16 %v198, %v197
        %v614 = vpack.c.bf16 %v200, %v199
        %v615 = vpack.c.bf16 %v202, %v201
        %v616 = vpack.c.bf16 %v204, %v203
        %v617 = vpack.c.bf16 %v206, %v205
        %v618 = vpack.c.bf16 %v208, %v207
        %v619 = vpack.c.bf16 %v210, %v209
        %v620 = vpack.c.bf16 %v212, %v211
        %v621 = vpack.c.bf16 %v214, %v213
        %v622 = vpack.c.bf16 %v216, %v215
        %v623 = vpack.c.bf16 %v218, %v217
        %v624 = vpack.c.bf16 %v220, %v219
        %v625 = vpack.c.bf16 %v222, %v221
        %v626 = vpack.c.bf16 %v224, %v223
        %v627 = vpack.c.bf16 %v226, %v225
        %v628 = vpack.c.bf16 %v228, %v227
        %v629 = vpack.c.bf16 %v230, %v229
        %v630 = vpack.c.bf16 %v232, %v231
        %v631 = vpack.c.bf16 %v234, %v233
        %v632 = vpack.c.bf16 %v236, %v235
        %v633 = vpack.c.bf16 %v238, %v237
        %v634 = vpack.c.bf16 %v240, %v239
        %v635 = vpack.c.bf16 %v242, %v241
        %v636 = vpack.c.bf16 %v244, %v243
        %v637 = vpack.c.bf16 %v246, %v245
        %v638 = vpack.c.bf16 %v248, %v247
        %v639 = vpack.c.bf16 %v250, %v249
        %v640 = vpack.c.bf16 %v252, %v251
        %v641 = vpack.c.bf16 %v254, %v253
        %v642 = vpack.c.bf16 %v256, %v255
        %v643 = vpack.c.bf16 %v258, %v257
        %v644 = vpack.c.bf16 %v260, %v259
        %v645 = vpack.c.bf16 %v262, %v261
        %v646 = vpack.c.bf16 %v264, %v263
        %v647 = vpack.c.bf16 %v266, %v265
        %v648 = vpack.c.bf16 %v268, %v267
        %v649 = vpack.c.bf16 %v270, %v269
        %v650 = vpack.c.bf16 %v272, %v271
        %v651 = vpack.c.bf16 %v274, %v273
        %v652 = vpack.c.bf16 %v276, %v275
        %v653 = vpack.c.bf16 %v278, %v277
        %v654 = vpack.c.bf16 %v280, %v279
        %v655 = vpack.c.bf16 %v282, %v281
        %v656 = vpack.c.bf16 %v284, %v283
        %v657 = vpack.c.bf16 %v286, %v285
        %v658 = vpack.c.bf16 %v288, %v287
        %v659 = vpack.c.bf16 %v290, %v289
        %v660 = vpack.c.bf16 %v292, %v291
        %v661 = vpack.c.bf16 %v294, %v293
        %v662 = vpack.c.bf16 %v296, %v295
        %v663 = vpack.c.bf16 %v298, %v297
        %v664 = vpack.c.bf16 %v300, %v299
        %v665 = vpack.c.bf16 %v302, %v301
        %v666 = vpack.c.bf16 %v304, %v303
        %v667 = vpack.c.bf16 %v306, %v305
        %v668 = vpack.c.bf16 %v308, %v307
        %v669 = vpack.c.bf16 %v310, %v309
        %v670 = vpack.c.bf16 %v312, %v311
        %v671 = vpack.c.bf16 %v314, %v313
        %v672 = vpack.c.bf16 %v316, %v315
        %v673 = vpack.c.bf16 %v318, %v317
        %v674 = vpack.c.bf16 %v320, %v319
        %v675 = vpack.c.bf16 %v322, %v321
        %v676 = vpack.c.bf16 %v324, %v323
        %v677 = vpack.c.bf16 %v326, %v325
        %v678 = vpack.c.bf16 %v328, %v327
        %v679 = vpack.c.bf16 %v330, %v329
        %v680 = vpack.c.bf16 %v332, %v331
        %v681 = vpack.c.bf16 %v334, %v333
        %v682 = vpack.c.bf16 %v336, %v335
        %v683 = vpack.c.bf16 %v338, %v337
        %v684 = vpack.c.bf16 %v340, %v339
        %v685 = vpack.c.bf16 %v342, %v341
        %v686 = vpack.c.bf16 %v344, %v343
        %v687 = vpack.c.bf16 %v346, %v345
        %v688 = vpack.c.bf16 %v348, %v347
        %v689 = vpack.c.bf16 %v350, %v349
        %v690 = vpack.c.bf16 %v352, %v351
        %v691 = vpack.c.bf16 %v354, %v353
        %v692 = vpack.c.bf16 %v356, %v355
        %v693 = vpack.c.bf16 %v358, %v357
        %v694 = vpack.c.bf16 %v360, %v359
        %v695 = vpack.c.bf16 %v362, %v361
        %v696 = vpack.c.bf16 %v364, %v363
        %v697 = vpack.c.bf16 %v366, %v365
        %v698 = vpack.c.bf16 %v368, %v367
        %v699 = vpack.c.bf16 %v370, %v369
        %v700 = vpack.c.bf16 %v372, %v371
        %v701 = vpack.c.bf16 %v374, %v373
        %v702 = vpack.c.bf16 %v376, %v375
        %v703 = vpack.c.bf16 %v378, %v377
        %v704 = vpack.c.bf16 %v380, %v379
        %v705 = vpack.c.bf16 %v382, %v381
        %v706 = vpack.c.bf16 %v384, %v383
        %v707 = vpack.c.bf16 %v386, %v385
        %v708 = vpack.c.bf16 %v388, %v387
        %v709 = vpack.c.bf16 %v390, %v389
        %v710 = vpack.c.bf16 %v392, %v391
        %v711 = vpack.c.bf16 %v394, %v393
        %v712 = vpack.c.bf16 %v396, %v395
        %v713 = vpack.c.bf16 %v398, %v397
        %v714 = vpack.c.bf16 %v400, %v399
        %v715 = vpack.c.bf16 %v402, %v401
        %v716 = vpack.c.bf16 %v404, %v403
        %v717 = vpack.c.bf16 %v406, %v405
        %v718 = vpack.c.bf16 %v408, %v407
        %v719 = vpack.c.bf16 %v410, %v409
        %v720 = vpack.c.bf16 %v412, %v411
        %v721 = vpack.c.bf16 %v414, %v413
        %v722 = vpack.c.bf16 %v416, %v415
        %v723 = vpack.c.bf16 %v418, %v417
        %v724 = vpack.c.bf16 %v420, %v419
        %v725 = vpack.c.bf16 %v422, %v421
        %v726 = vpack.c.bf16 %v424, %v423
        %v727 = vpack.c.bf16 %v426, %v425
        %v728 = vpack.c.bf16 %v428, %v427
        %v729 = vpack.c.bf16 %v430, %v429
        %v730 = vpack.c.bf16 %v432, %v431
        %v731 = vpack.c.bf16 %v434, %v433
        %v732 = vpack.c.bf16 %v436, %v435
        %v733 = vpack.c.bf16 %v438, %v437
        %v734 = vpack.c.bf16 %v440, %v439
        %v735 = vpack.c.bf16 %v442, %v441
        %v736 = vpack.c.bf16 %v444, %v443
        %v737 = vpack.c.bf16 %v446, %v445
        %v738 = vpack.c.bf16 %v448, %v447
        %v739 = vpack.c.bf16 %v450, %v449
        %v740 = vpack.c.bf16 %v452, %v451
        %v741 = vpack.c.bf16 %v454, %v453
        %v742 = vpack.c.bf16 %v456, %v455
        %v743 = vpack.c.bf16 %v458, %v457
        %v744 = vpack.c.bf16 %v460, %v459
        %v745 = vpack.c.bf16 %v462, %v461
        %v746 = vpack.c.bf16 %v464, %v463
        %v747 = vpack.c.bf16 %v466, %v465
        %v748 = vpack.c.bf16 %v468, %v467
        %v749 = vpack.c.bf16 %v470, %v469
        %v750 = vpack.c.bf16 %v472, %v471
        %v751 = vpack.c.bf16 %v474, %v473
        %v752 = vpack.c.bf16 %v476, %v475
        %v753 = vpack.c.bf16 %v478, %v477
        %v754 = vpack.c.bf16 %v480, %v479
        %v755 = vpack.c.bf16 %v482, %v481
        %v756 = vpack.c.bf16 %v484, %v483
        %v757 = vpack.c.bf16 %v486, %v485
        %v758 = vpack.c.bf16 %v488, %v487
        %v759 = vpack.c.bf16 %v490, %v489
        %v760 = vpack.c.bf16 %v492, %v491
        %v761 = vpack.c.bf16 %v494, %v493
        %v762 = vpack.c.bf16 %v496, %v495
        %v763 = vpack.c.bf16 %v498, %v497
        %v764 = vpack.c.bf16 %v500, %v499
        %v765 = vpack.c.bf16 %v502, %v501
        %v766 = vpack.c.bf16 %v504, %v503
        %v767 = vpack.c.bf16 %v506, %v505
        %v768 = vpack.c.bf16 %v508, %v507
        %v769 = vpack.c.bf16 %v510, %v509
        %v770 = vpack.c.bf16 %v512, %v511
        %v771 = vpack.c.bf16 %v514, %v513
        %v772 = vpack.c.bf16 %v516, %v515
        %v773 = vpack.c.bf16 %v518, %v517
        %v774 = vpack.c.bf16 %v520, %v519
        %v775 = vpack.c.bf16 %v522, %v521
        %v776 = vpack.c.bf16 %v524, %v523
        %v777 = vpack.c.bf16 %v526, %v525
        %v778 = vpack.c.bf16 %v528, %v527
        %v779 = vpack.c.bf16 %v530, %v529
        %v780 = vpack.c.bf16 %v532, %v531
        %v781 = vpack.c.bf16 %v534, %v533
        %v782 = vpack.c.bf16 %v536, %v535
        %v783 = vpack.c.bf16 %v538, %v537
        %v784 = vpack.c.bf16 %v540, %v539
        %v785 = vpack.c.bf16 %v542, %v541
        %v786 = vpack.c.bf16 %v544, %v543
        %v787 = vpack.c.bf16 %v546, %v545
        %v788 = vpack.c.bf16 %v548, %v547
        %v789 = vpack.c.bf16 %v550, %v549
        %v790 = vpack.c.bf16 %v552, %v551
        %v791 = vpack.c.bf16 %v554, %v553
        %v792 = vpack.c.bf16 %v556, %v555
        %v793 = vpack.c.bf16 %v558, %v557
        %v794 = vpack.c.bf16 %v560, %v559
        %v795 = vpack.c.bf16 %v562, %v561
        %v796 = vpack.c.bf16 %v564, %v563
        %v797 = vpack.c.bf16 %v566, %v565
        %v798 = vpack.c.bf16 %v568, %v567
        %v799 = vpack.c.bf16 %v570, %v569
        %v800 = vpack.c.bf16 %v572, %v571
        %v801 = vpack.c.bf16 %v574, %v573
        %v802 = vpack.c.bf16 %v576, %v575
        %v803 = vpack.c.bf16 %v578, %v577
        %v804 = vpack.c.bf16 %v580, %v579
        %v805 = vpack.c.bf16 %v582, %v581
        %v806 = vpack.c.bf16 %v584, %v583
        %v807 = vpack.c.bf16 %v586, %v585
        %v808 = vpack.c.bf16 %v588, %v587
        %v809 = vpack.c.bf16 %v590, %v589
        %v810 = vpack.c.bf16 %v592, %v591
        %v811 = vpack.c.bf16 %v594, %v593
        %v812 = vpack.c.bf16 %v596, %v595
        %v813 = vpack.c.bf16 %v598, %v597
        %v814 = vpack.c.bf16 %v600, %v599
        %v815 = vpack.c.bf16 %v602, %v601
        %v816 = vpack.c.bf16 %v604, %v603
        %v817 = vpack.c.bf16 %v606, %v605
        %v818 = vpack.c.bf16 %v608, %v607
        %v819 = vpack.c.bf16 %v610, %v609
        %v820 = vpack.c.bf16 %v612, %v611
        %v821 = vld [vmem:[%s1] sm:$0xf]
        %v822 = vld [vmem:[%s1 + $0x4] sm:$0xf]
        %v823 = vld [vmem:[%s2] sm:$0x1]
        %v825 = vlaneseq
        %v826 = vshrl.u32 %v825, 7
        %v827 = vsub.s32 0, %v826
        %v828 = vrot.slane %v823, %v827
        %v832 = vunpack.c.l.b16 %v821
        %v833 = vunpack.c.l.b16 %v822
        %v834 = vpack.c.b16 %v833, %v832
        %vm836 = vcmask 130048
        %v838 = vsel %vm836, %v613, 0
        %v841 = vsel %vm836, %v614, 0
        %v844 = vsel %vm836, %v615, 0
        %v847 = vsel %vm836, %v616, 0
        %v850 = vsel %vm836, %v617, 0
        %v853 = vsel %vm836, %v618, 0
        %v856 = vsel %vm836, %v619, 0
        %v859 = vsel %vm836, %v620, 0
        %v862 = vsel %vm836, %v621, 0
        %v865 = vsel %vm836, %v622, 0
        %v868 = vsel %vm836, %v623, 0
        %v871 = vsel %vm836, %v624, 0
        %v874 = vsel %vm836, %v625, 0
        %v877 = vsel %vm836, %v626, 0
        %v880 = vsel %vm836, %v627, 0
        %v883 = vsel %vm836, %v628, 0
        %v886 = vsel %vm836, %v629, 0
        %v889 = vsel %vm836, %v630, 0
        %v892 = vsel %vm836, %v631, 0
        %v895 = vsel %vm836, %v632, 0
        %v898 = vsel %vm836, %v633, 0
        %v901 = vsel %vm836, %v634, 0
        %v904 = vsel %vm836, %v635, 0
        %v907 = vsel %vm836, %v636, 0
        %v910 = vsel %vm836, %v637, 0
        %v913 = vsel %vm836, %v638, 0
        %v916 = vsel %vm836, %v639, 0
        %v919 = vsel %vm836, %v640, 0
        %v922 = vsel %vm836, %v641, 0
        %v925 = vsel %vm836, %v642, 0
        %v928 = vsel %vm836, %v643, 0
        %v931 = vsel %vm836, %v644, 0
        %v934 = vsel %vm836, %v645, 0
        %v937 = vsel %vm836, %v646, 0
        %v940 = vsel %vm836, %v647, 0
        %v943 = vsel %vm836, %v648, 0
        %v946 = vsel %vm836, %v649, 0
        %v949 = vsel %vm836, %v650, 0
        %v952 = vsel %vm836, %v651, 0
        %v955 = vsel %vm836, %v652, 0
        %v958 = vsel %vm836, %v653, 0
        %v961 = vsel %vm836, %v654, 0
        %v964 = vsel %vm836, %v655, 0
        %v967 = vsel %vm836, %v656, 0
        %v970 = vsel %vm836, %v657, 0
        %v973 = vsel %vm836, %v658, 0
        %v976 = vsel %vm836, %v659, 0
        %v979 = vsel %vm836, %v660, 0
        %v982 = vsel %vm836, %v661, 0
        %v985 = vsel %vm836, %v662, 0
        %v988 = vsel %vm836, %v663, 0
        %v991 = vsel %vm836, %v664, 0
        %v994 = vsel %vm836, %v665, 0
        %v997 = vsel %vm836, %v666, 0
        %v1000 = vsel %vm836, %v667, 0
        %v1003 = vsel %vm836, %v668, 0
        %v1006 = vsel %vm836, %v669, 0
        %v1009 = vsel %vm836, %v670, 0
        %v1012 = vsel %vm836, %v671, 0
        %v1015 = vsel %vm836, %v672, 0
        %v1018 = vsel %vm836, %v673, 0
        %v1021 = vsel %vm836, %v674, 0
        %v1024 = vsel %vm836, %v675, 0
        %v1027 = vsel %vm836, %v676, 0
        %v1030 = vsel %vm836, %v677, 0
        %v1033 = vsel %vm836, %v678, 0
        %v1036 = vsel %vm836, %v679, 0
        %v1039 = vsel %vm836, %v680, 0
        %v1042 = vsel %vm836, %v681, 0
        %v1045 = vsel %vm836, %v682, 0
        %v1048 = vsel %vm836, %v683, 0
        %v1051 = vsel %vm836, %v684, 0
        %v1054 = vsel %vm836, %v685, 0
        %v1057 = vsel %vm836, %v686, 0
        %v1060 = vsel %vm836, %v687, 0
        %v1063 = vsel %vm836, %v688, 0
        %v1066 = vsel %vm836, %v689, 0
        %v1069 = vsel %vm836, %v690, 0
        %v1072 = vsel %vm836, %v691, 0
        %v1075 = vsel %vm836, %v692, 0
        %v1078 = vsel %vm836, %v693, 0
        %v1081 = vsel %vm836, %v694, 0
        %v1084 = vsel %vm836, %v695, 0
        %v1087 = vsel %vm836, %v696, 0
        %v1090 = vsel %vm836, %v697, 0
        %v1093 = vsel %vm836, %v698, 0
        %v1096 = vsel %vm836, %v699, 0
        %v1099 = vsel %vm836, %v700, 0
        %v1102 = vsel %vm836, %v701, 0
        %v1105 = vsel %vm836, %v702, 0
        %v1108 = vsel %vm836, %v703, 0
        %v1111 = vsel %vm836, %v704, 0
        %v1114 = vsel %vm836, %v705, 0
        %v1117 = vsel %vm836, %v706, 0
        %v1120 = vsel %vm836, %v707, 0
        %v1123 = vsel %vm836, %v708, 0
        %v1126 = vsel %vm836, %v709, 0
        %v1129 = vsel %vm836, %v710, 0
        %v1132 = vsel %vm836, %v711, 0
        %v1135 = vsel %vm836, %v712, 0
        %v1138 = vsel %vm836, %v713, 0
        %v1141 = vsel %vm836, %v714, 0
        %v1144 = vsel %vm836, %v715, 0
        %v1147 = vsel %vm836, %v716, 0
        %v1150 = vsel %vm836, %v717, 0
        %v1153 = vsel %vm836, %v718, 0
        %v1156 = vsel %vm836, %v719, 0
        %v1159 = vsel %vm836, %v720, 0
        %v1162 = vsel %vm836, %v721, 0
        %v1165 = vsel %vm836, %v722, 0
        %v1168 = vsel %vm836, %v723, 0
        %v1171 = vsel %vm836, %v724, 0
        %v1174 = vsel %vm836, %v725, 0
        %v1177 = vsel %vm836, %v726, 0
        %v1180 = vsel %vm836, %v727, 0
        %v1183 = vsel %vm836, %v728, 0
        %v1186 = vsel %vm836, %v729, 0
        %v1189 = vsel %vm836, %v730, 0
        %v1192 = vsel %vm836, %v731, 0
        %v1195 = vsel %vm836, %v732, 0
        %v1198 = vsel %vm836, %v733, 0
        %v1201 = vsel %vm836, %v734, 0
        %v1204 = vsel %vm836, %v735, 0
        %v1207 = vsel %vm836, %v736, 0
        %v1210 = vsel %vm836, %v737, 0
        %v1213 = vsel %vm836, %v738, 0
        %v1216 = vsel %vm836, %v739, 0
        %v1219 = vsel %vm836, %v740, 0
        %v1222 = vsel %vm836, %v741, 0
        %v1225 = vsel %vm836, %v742, 0
        %v1228 = vsel %vm836, %v743, 0
        %v1231 = vsel %vm836, %v744, 0
        %v1234 = vsel %vm836, %v745, 0
        %v1237 = vsel %vm836, %v746, 0
        %v1240 = vsel %vm836, %v747, 0
        %v1243 = vsel %vm836, %v748, 0
        %v1246 = vsel %vm836, %v749, 0
        %v1249 = vsel %vm836, %v750, 0
        %v1252 = vsel %vm836, %v751, 0
        %v1255 = vsel %vm836, %v752, 0
        %v1258 = vsel %vm836, %v753, 0
        %v1261 = vsel %vm836, %v754, 0
        %v1264 = vsel %vm836, %v755, 0
        %v1267 = vsel %vm836, %v756, 0
        %v1270 = vsel %vm836, %v757, 0
        %v1273 = vsel %vm836, %v758, 0
        %v1276 = vsel %vm836, %v759, 0
        %v1279 = vsel %vm836, %v760, 0
        %v1282 = vsel %vm836, %v761, 0
        %v1285 = vsel %vm836, %v762, 0
        %v1288 = vsel %vm836, %v763, 0
        %v1291 = vsel %vm836, %v764, 0
        %v1294 = vsel %vm836, %v765, 0
        %v1297 = vsel %vm836, %v766, 0
        %v1300 = vsel %vm836, %v767, 0
        %v1303 = vsel %vm836, %v768, 0
        %v1306 = vsel %vm836, %v769, 0
        %v1309 = vsel %vm836, %v770, 0
        %v1312 = vsel %vm836, %v771, 0
        %v1315 = vsel %vm836, %v772, 0
        %v1318 = vsel %vm836, %v773, 0
        %v1321 = vsel %vm836, %v774, 0
        %v1324 = vsel %vm836, %v775, 0
        %v1327 = vsel %vm836, %v776, 0
        %v1330 = vsel %vm836, %v777, 0
        %v1333 = vsel %vm836, %v778, 0
        %v1336 = vsel %vm836, %v779, 0
        %v1339 = vsel %vm836, %v780, 0
        %v1342 = vsel %vm836, %v781, 0
        %v1345 = vsel %vm836, %v782, 0
        %v1348 = vsel %vm836, %v783, 0
        %v1351 = vsel %vm836, %v784, 0
        %v1354 = vsel %vm836, %v785, 0
        %v1357 = vsel %vm836, %v786, 0
        %v1360 = vsel %vm836, %v787, 0
        %v1363 = vsel %vm836, %v788, 0
        %v1366 = vsel %vm836, %v789, 0
        %v1369 = vsel %vm836, %v790, 0
        %v1372 = vsel %vm836, %v791, 0
        %v1375 = vsel %vm836, %v792, 0
        %v1378 = vsel %vm836, %v793, 0
        %v1381 = vsel %vm836, %v794, 0
        %v1384 = vsel %vm836, %v795, 0
        %v1387 = vsel %vm836, %v796, 0
        %v1390 = vsel %vm836, %v797, 0
        %v1393 = vsel %vm836, %v798, 0
        %v1396 = vsel %vm836, %v799, 0
        %v1399 = vsel %vm836, %v800, 0
        %v1402 = vsel %vm836, %v801, 0
        %v1405 = vsel %vm836, %v802, 0
        %v1408 = vsel %vm836, %v803, 0
        %v1411 = vsel %vm836, %v804, 0
        %v1414 = vsel %vm836, %v805, 0
        %v1417 = vsel %vm836, %v806, 0
        %v1420 = vsel %vm836, %v807, 0
        %v1423 = vsel %vm836, %v808, 0
        %v1426 = vsel %vm836, %v809, 0
        %v1429 = vsel %vm836, %v810, 0
        %v1432 = vsel %vm836, %v811, 0
        %v1435 = vsel %vm836, %v812, 0
        %v1438 = vsel %vm836, %v813, 0
        %v1441 = vsel %vm836, %v814, 0
        %v1444 = vsel %vm836, %v815, 0
        %v1447 = vsel %vm836, %v816, 0
        %v1450 = vsel %vm836, %v817, 0
        %v1453 = vsel %vm836, %v818, 0
        %v1456 = vsel %vm836, %v819, 0
        %v1459 = vsel %vm836, %v820, 0
        %1461 = vmatprep.subr.bf16.mxu0 0
        %1462 = vmatpush1.bf16.msra.mxu0 0
        %1463 = vmatprep.subr.bf16.mxu0 0
        %1464 = vmatpush1.bf16.msra.mxu0 0
        %1465 = vmatprep.subr.bf16.mxu0 0
        %1466 = vmatpush1.bf16.msra.mxu0 0
        %1467 = vmatprep.subr.bf16.mxu0 0
        %1468 = vmatpush1.bf16.msra.mxu0 0
        %1469 = vmatprep.subr.bf16.mxu0 0
        %1470 = vmatpush1.bf16.msra.mxu0 0
        %1471 = vmatprep.subr.bf16.mxu0 0
        %1472 = vmatpush1.bf16.msra.mxu0 0
        %1473 = vmatprep.subr.bf16.mxu0 0
        %1474 = vmatpush1.bf16.msra.mxu0 0
        %1475 = vmatprep.subr.bf16.mxu0 0
        %1476 = vmatpush1.bf16.msra.mxu0 %v834
        %1477 = vmatprep.subr.bf16.mxu0 0
        %1478 = vmatpush2.bf16.msra.mxu0 0
        %1479 = vmatprep.subr.bf16.mxu0 0
        %1480 = vmatpush2.bf16.msra.mxu0 0
        %1481 = vmatprep.subr.bf16.mxu0 0
        %1482 = vmatpush2.bf16.msra.mxu0 0
        %1483 = vmatprep.subr.bf16.mxu0 0
        %1484 = vmatpush2.bf16.msra.mxu0 0
        %1485 = vmatprep.subr.bf16.mxu0 0
        %1486 = vmatpush2.bf16.msra.mxu0 0
        %1487 = vmatprep.subr.bf16.mxu0 0
        %1488 = vmatpush2.bf16.msra.mxu0 0
        %1489 = vmatprep.subr.bf16.mxu0 0
        %1490 = vmatpush2.bf16.msra.mxu0 0
        %1491 = vmatprep.subr.bf16.mxu0 0
        %1492 = vmatpush2.bf16.msra.mxu0 0
        %1493 = vmatprep.mubr.bf16.mxu0 0
        %1494 = vmatmul.mubr.bf16.gmra.mxu0 %v838
        %v1495 = vpop.f32.mrf.mxu0
        %v1496 = vadd.f32 %v828, %v1495
        %v1497 = vpop.f32.mrf.mxu0
        %v1498 = vpop.f32.mrf.mxu0
        %v1499 = vadd.f32 %v828, %v1498
        %v1500 = vpop.f32.mrf.mxu0
        %1501 = vmatprep.mubr.bf16.mxu0 0
        %1502 = vmatmul.mubr.bf16.gmra.mxu0 %v841
        %v1503 = vpop.f32.mrf.mxu0
        %v1504 = vadd.f32 %v828, %v1503
        %v1505 = vpop.f32.mrf.mxu0
        %v1506 = vpop.f32.mrf.mxu0
        %v1507 = vadd.f32 %v828, %v1506
        %v1508 = vpop.f32.mrf.mxu0
        %1509 = vmatprep.mubr.bf16.mxu0 0
        %1510 = vmatmul.mubr.bf16.gmra.mxu0 %v844
        %v1511 = vpop.f32.mrf.mxu0
        %v1512 = vadd.f32 %v828, %v1511
        %v1513 = vpop.f32.mrf.mxu0
        %v1514 = vpop.f32.mrf.mxu0
        %v1515 = vadd.f32 %v828, %v1514
        %v1516 = vpop.f32.mrf.mxu0
        %1517 = vmatprep.mubr.bf16.mxu0 0
        %1518 = vmatmul.mubr.bf16.gmra.mxu0 %v847
        %v1519 = vpop.f32.mrf.mxu0
        %v1520 = vadd.f32 %v828, %v1519
        %v1521 = vpop.f32.mrf.mxu0
        %v1522 = vpop.f32.mrf.mxu0
        %v1523 = vadd.f32 %v828, %v1522
        %v1524 = vpop.f32.mrf.mxu0
        %1525 = vmatprep.mubr.bf16.mxu0 0
        %1526 = vmatmul.mubr.bf16.gmra.mxu0 %v850
        %v1527 = vpop.f32.mrf.mxu0
        %v1528 = vadd.f32 %v828, %v1527
        %v1529 = vpop.f32.mrf.mxu0
        %v1530 = vpop.f32.mrf.mxu0
        %v1531 = vadd.f32 %v828, %v1530
        %v1532 = vpop.f32.mrf.mxu0
        %1533 = vmatprep.mubr.bf16.mxu0 0
        %1534 = vmatmul.mubr.bf16.gmra.mxu0 %v853
        %v1535 = vpop.f32.mrf.mxu0
        %v1536 = vadd.f32 %v828, %v1535
        %v1537 = vpop.f32.mrf.mxu0
        %v1538 = vpop.f32.mrf.mxu0
        %v1539 = vadd.f32 %v828, %v1538
        %v1540 = vpop.f32.mrf.mxu0
        %1541 = vmatprep.mubr.bf16.mxu0 0
        %1542 = vmatmul.mubr.bf16.gmra.mxu0 %v856
        %v1543 = vpop.f32.mrf.mxu0
        %v1544 = vadd.f32 %v828, %v1543
        %v1545 = vpop.f32.mrf.mxu0
        %v1546 = vpop.f32.mrf.mxu0
        %v1547 = vadd.f32 %v828, %v1546
        %v1548 = vpop.f32.mrf.mxu0
        %1549 = vmatprep.mubr.bf16.mxu0 0
        %1550 = vmatmul.mubr.bf16.gmra.mxu0 %v859
        %v1551 = vpop.f32.mrf.mxu0
        %v1552 = vadd.f32 %v828, %v1551
        %v1553 = vpop.f32.mrf.mxu0
        %v1554 = vpop.f32.mrf.mxu0
        %v1555 = vadd.f32 %v828, %v1554
        %v1556 = vpop.f32.mrf.mxu0
        %1557 = vmatprep.mubr.bf16.mxu0 0
        %1558 = vmatmul.mubr.bf16.gmra.mxu0 %v862
        %v1559 = vpop.f32.mrf.mxu0
        %v1560 = vadd.f32 %v828, %v1559
        %v1561 = vpop.f32.mrf.mxu0
        %v1562 = vpop.f32.mrf.mxu0
        %v1563 = vadd.f32 %v828, %v1562
        %v1564 = vpop.f32.mrf.mxu0
        %1565 = vmatprep.mubr.bf16.mxu0 0
        %1566 = vmatmul.mubr.bf16.gmra.mxu0 %v865
        %v1567 = vpop.f32.mrf.mxu0
        %v1568 = vadd.f32 %v828, %v1567
        %v1569 = vpop.f32.mrf.mxu0
        %v1570 = vpop.f32.mrf.mxu0
        %v1571 = vadd.f32 %v828, %v1570
        %v1572 = vpop.f32.mrf.mxu0
        %1573 = vmatprep.mubr.bf16.mxu0 0
        %1574 = vmatmul.mubr.bf16.gmra.mxu0 %v868
        %v1575 = vpop.f32.mrf.mxu0
        %v1576 = vadd.f32 %v828, %v1575
        %v1577 = vpop.f32.mrf.mxu0
        %v1578 = vpop.f32.mrf.mxu0
        %v1579 = vadd.f32 %v828, %v1578
        %v1580 = vpop.f32.mrf.mxu0
        %1581 = vmatprep.mubr.bf16.mxu0 0
        %1582 = vmatmul.mubr.bf16.gmra.mxu0 %v871
        %v1583 = vpop.f32.mrf.mxu0
        %v1584 = vadd.f32 %v828, %v1583
        %v1585 = vpop.f32.mrf.mxu0
        %v1586 = vpop.f32.mrf.mxu0
        %v1587 = vadd.f32 %v828, %v1586
        %v1588 = vpop.f32.mrf.mxu0
        %1589 = vmatprep.mubr.bf16.mxu0 0
        %1590 = vmatmul.mubr.bf16.gmra.mxu0 %v874
        %v1591 = vpop.f32.mrf.mxu0
        %v1592 = vadd.f32 %v828, %v1591
        %v1593 = vpop.f32.mrf.mxu0
        %v1594 = vpop.f32.mrf.mxu0
        %v1595 = vadd.f32 %v828, %v1594
        %v1596 = vpop.f32.mrf.mxu0
        %1597 = vmatprep.mubr.bf16.mxu0 0
        %1598 = vmatmul.mubr.bf16.gmra.mxu0 %v877
        %v1599 = vpop.f32.mrf.mxu0
        %v1600 = vadd.f32 %v828, %v1599
        %v1601 = vpop.f32.mrf.mxu0
        %v1602 = vpop.f32.mrf.mxu0
        %v1603 = vadd.f32 %v828, %v1602
        %v1604 = vpop.f32.mrf.mxu0
        %1605 = vmatprep.mubr.bf16.mxu0 0
        %1606 = vmatmul.mubr.bf16.gmra.mxu0 %v880
        %v1607 = vpop.f32.mrf.mxu0
        %v1608 = vadd.f32 %v828, %v1607
        %v1609 = vpop.f32.mrf.mxu0
        %v1610 = vpop.f32.mrf.mxu0
        %v1611 = vadd.f32 %v828, %v1610
        %v1612 = vpop.f32.mrf.mxu0
        %1613 = vmatprep.mubr.bf16.mxu0 0
        %1614 = vmatmul.mubr.bf16.gmra.mxu0 %v883
        %v1615 = vpop.f32.mrf.mxu0
        %v1616 = vadd.f32 %v828, %v1615
        %v1617 = vpop.f32.mrf.mxu0
        %v1618 = vpop.f32.mrf.mxu0
        %v1619 = vadd.f32 %v828, %v1618
        %v1620 = vpop.f32.mrf.mxu0
        %1621 = vmatprep.mubr.bf16.mxu0 0
        %1622 = vmatmul.mubr.bf16.gmra.mxu0 %v886
        %v1623 = vpop.f32.mrf.mxu0
        %v1624 = vadd.f32 %v828, %v1623
        %v1625 = vpop.f32.mrf.mxu0
        %v1626 = vpop.f32.mrf.mxu0
        %v1627 = vadd.f32 %v828, %v1626
        %v1628 = vpop.f32.mrf.mxu0
        %1629 = vmatprep.mubr.bf16.mxu0 0
        %1630 = vmatmul.mubr.bf16.gmra.mxu0 %v889
        %v1631 = vpop.f32.mrf.mxu0
        %v1632 = vadd.f32 %v828, %v1631
        %v1633 = vpop.f32.mrf.mxu0
        %v1634 = vpop.f32.mrf.mxu0
        %v1635 = vadd.f32 %v828, %v1634
        %v1636 = vpop.f32.mrf.mxu0
        %1637 = vmatprep.mubr.bf16.mxu0 0
        %1638 = vmatmul.mubr.bf16.gmra.mxu0 %v892
        %v1639 = vpop.f32.mrf.mxu0
        %v1640 = vadd.f32 %v828, %v1639
        %v1641 = vpop.f32.mrf.mxu0
        %v1642 = vpop.f32.mrf.mxu0
        %v1643 = vadd.f32 %v828, %v1642
        %v1644 = vpop.f32.mrf.mxu0
        %1645 = vmatprep.mubr.bf16.mxu0 0
        %1646 = vmatmul.mubr.bf16.gmra.mxu0 %v895
        %v1647 = vpop.f32.mrf.mxu0
        %v1648 = vadd.f32 %v828, %v1647
        %v1649 = vpop.f32.mrf.mxu0
        %v1650 = vpop.f32.mrf.mxu0
        %v1651 = vadd.f32 %v828, %v1650
        %v1652 = vpop.f32.mrf.mxu0
        %1653 = vmatprep.mubr.bf16.mxu0 0
        %1654 = vmatmul.mubr.bf16.gmra.mxu0 %v898
        %v1655 = vpop.f32.mrf.mxu0
        %v1656 = vadd.f32 %v828, %v1655
        %v1657 = vpop.f32.mrf.mxu0
        %v1658 = vpop.f32.mrf.mxu0
        %v1659 = vadd.f32 %v828, %v1658
        %v1660 = vpop.f32.mrf.mxu0
        %1661 = vmatprep.mubr.bf16.mxu0 0
        %1662 = vmatmul.mubr.bf16.gmra.mxu0 %v901
        %v1663 = vpop.f32.mrf.mxu0
        %v1664 = vadd.f32 %v828, %v1663
        %v1665 = vpop.f32.mrf.mxu0
        %v1666 = vpop.f32.mrf.mxu0
        %v1667 = vadd.f32 %v828, %v1666
        %v1668 = vpop.f32.mrf.mxu0
        %1669 = vmatprep.mubr.bf16.mxu0 0
        %1670 = vmatmul.mubr.bf16.gmra.mxu0 %v904
        %v1671 = vpop.f32.mrf.mxu0
        %v1672 = vadd.f32 %v828, %v1671
        %v1673 = vpop.f32.mrf.mxu0
        %v1674 = vpop.f32.mrf.mxu0
        %v1675 = vadd.f32 %v828, %v1674
        %v1676 = vpop.f32.mrf.mxu0
        %1677 = vmatprep.mubr.bf16.mxu0 0
        %1678 = vmatmul.mubr.bf16.gmra.mxu0 %v907
        %v1679 = vpop.f32.mrf.mxu0
        %v1680 = vadd.f32 %v828, %v1679
        %v1681 = vpop.f32.mrf.mxu0
        %v1682 = vpop.f32.mrf.mxu0
        %v1683 = vadd.f32 %v828, %v1682
        %v1684 = vpop.f32.mrf.mxu0
        %1685 = vmatprep.mubr.bf16.mxu0 0
        %1686 = vmatmul.mubr.bf16.gmra.mxu0 %v910
        %v1687 = vpop.f32.mrf.mxu0
        %v1688 = vadd.f32 %v828, %v1687
        %v1689 = vpop.f32.mrf.mxu0
        %v1690 = vpop.f32.mrf.mxu0
        %v1691 = vadd.f32 %v828, %v1690
        %v1692 = vpop.f32.mrf.mxu0
        %1693 = vmatprep.mubr.bf16.mxu0 0
        %1694 = vmatmul.mubr.bf16.gmra.mxu0 %v913
        %v1695 = vpop.f32.mrf.mxu0
        %v1696 = vadd.f32 %v828, %v1695
        %v1697 = vpop.f32.mrf.mxu0
        %v1698 = vpop.f32.mrf.mxu0
        %v1699 = vadd.f32 %v828, %v1698
        %v1700 = vpop.f32.mrf.mxu0
        %1701 = vmatprep.mubr.bf16.mxu0 0
        %1702 = vmatmul.mubr.bf16.gmra.mxu0 %v916
        %v1703 = vpop.f32.mrf.mxu0
        %v1704 = vadd.f32 %v828, %v1703
        %v1705 = vpop.f32.mrf.mxu0
        %v1706 = vpop.f32.mrf.mxu0
        %v1707 = vadd.f32 %v828, %v1706
        %v1708 = vpop.f32.mrf.mxu0
        %1709 = vmatprep.mubr.bf16.mxu0 0
        %1710 = vmatmul.mubr.bf16.gmra.mxu0 %v919
        %v1711 = vpop.f32.mrf.mxu0
        %v1712 = vadd.f32 %v828, %v1711
        %v1713 = vpop.f32.mrf.mxu0
        %v1714 = vpop.f32.mrf.mxu0
        %v1715 = vadd.f32 %v828, %v1714
        %v1716 = vpop.f32.mrf.mxu0
        %1717 = vmatprep.mubr.bf16.mxu0 0
        %1718 = vmatmul.mubr.bf16.gmra.mxu0 %v922
        %v1719 = vpop.f32.mrf.mxu0
        %v1720 = vadd.f32 %v828, %v1719
        %v1721 = vpop.f32.mrf.mxu0
        %v1722 = vpop.f32.mrf.mxu0
        %v1723 = vadd.f32 %v828, %v1722
        %v1724 = vpop.f32.mrf.mxu0
        %1725 = vmatprep.mubr.bf16.mxu0 0
        %1726 = vmatmul.mubr.bf16.gmra.mxu0 %v925
        %v1727 = vpop.f32.mrf.mxu0
        %v1728 = vadd.f32 %v828, %v1727
        %v1729 = vpop.f32.mrf.mxu0
        %v1730 = vpop.f32.mrf.mxu0
        %v1731 = vadd.f32 %v828, %v1730
        %v1732 = vpop.f32.mrf.mxu0
        %1733 = vmatprep.mubr.bf16.mxu0 0
        %1734 = vmatmul.mubr.bf16.gmra.mxu0 %v928
        %v1735 = vpop.f32.mrf.mxu0
        %v1736 = vadd.f32 %v828, %v1735
        %v1737 = vpop.f32.mrf.mxu0
        %v1738 = vpop.f32.mrf.mxu0
        %v1739 = vadd.f32 %v828, %v1738
        %v1740 = vpop.f32.mrf.mxu0
        %1741 = vmatprep.mubr.bf16.mxu0 0
        %1742 = vmatmul.mubr.bf16.gmra.mxu0 %v931
        %v1743 = vpop.f32.mrf.mxu0
        %v1744 = vadd.f32 %v828, %v1743
        %v1745 = vpop.f32.mrf.mxu0
        %v1746 = vpop.f32.mrf.mxu0
        %v1747 = vadd.f32 %v828, %v1746
        %v1748 = vpop.f32.mrf.mxu0
        %1749 = vmatprep.mubr.bf16.mxu0 0
        %1750 = vmatmul.mubr.bf16.gmra.mxu0 %v934
        %v1751 = vpop.f32.mrf.mxu0
        %v1752 = vadd.f32 %v828, %v1751
        %v1753 = vpop.f32.mrf.mxu0
        %v1754 = vpop.f32.mrf.mxu0
        %v1755 = vadd.f32 %v828, %v1754
        %v1756 = vpop.f32.mrf.mxu0
        %1757 = vmatprep.mubr.bf16.mxu0 0
        %1758 = vmatmul.mubr.bf16.gmra.mxu0 %v937
        %v1759 = vpop.f32.mrf.mxu0
        %v1760 = vadd.f32 %v828, %v1759
        %v1761 = vpop.f32.mrf.mxu0
        %v1762 = vpop.f32.mrf.mxu0
        %v1763 = vadd.f32 %v828, %v1762
        %v1764 = vpop.f32.mrf.mxu0
        %1765 = vmatprep.mubr.bf16.mxu0 0
        %1766 = vmatmul.mubr.bf16.gmra.mxu0 %v940
        %v1767 = vpop.f32.mrf.mxu0
        %v1768 = vadd.f32 %v828, %v1767
        %v1769 = vpop.f32.mrf.mxu0
        %v1770 = vpop.f32.mrf.mxu0
        %v1771 = vadd.f32 %v828, %v1770
        %v1772 = vpop.f32.mrf.mxu0
        %1773 = vmatprep.mubr.bf16.mxu0 0
        %1774 = vmatmul.mubr.bf16.gmra.mxu0 %v943
        %v1775 = vpop.f32.mrf.mxu0
        %v1776 = vadd.f32 %v828, %v1775
        %v1777 = vpop.f32.mrf.mxu0
        %v1778 = vpop.f32.mrf.mxu0
        %v1779 = vadd.f32 %v828, %v1778
        %v1780 = vpop.f32.mrf.mxu0
        %1781 = vmatprep.mubr.bf16.mxu0 0
        %1782 = vmatmul.mubr.bf16.gmra.mxu0 %v946
        %v1783 = vpop.f32.mrf.mxu0
        %v1784 = vadd.f32 %v828, %v1783
        %v1785 = vpop.f32.mrf.mxu0
        %v1786 = vpop.f32.mrf.mxu0
        %v1787 = vadd.f32 %v828, %v1786
        %v1788 = vpop.f32.mrf.mxu0
        %1789 = vmatprep.mubr.bf16.mxu0 0
        %1790 = vmatmul.mubr.bf16.gmra.mxu0 %v949
        %v1791 = vpop.f32.mrf.mxu0
        %v1792 = vadd.f32 %v828, %v1791
        %v1793 = vpop.f32.mrf.mxu0
        %v1794 = vpop.f32.mrf.mxu0
        %v1795 = vadd.f32 %v828, %v1794
        %v1796 = vpop.f32.mrf.mxu0
        %1797 = vmatprep.mubr.bf16.mxu0 0
        %1798 = vmatmul.mubr.bf16.gmra.mxu0 %v952
        %v1799 = vpop.f32.mrf.mxu0
        %v1800 = vadd.f32 %v828, %v1799
        %v1801 = vpop.f32.mrf.mxu0
        %v1802 = vpop.f32.mrf.mxu0
        %v1803 = vadd.f32 %v828, %v1802
        %v1804 = vpop.f32.mrf.mxu0
        %1805 = vmatprep.mubr.bf16.mxu0 0
        %1806 = vmatmul.mubr.bf16.gmra.mxu0 %v955
        %v1807 = vpop.f32.mrf.mxu0
        %v1808 = vadd.f32 %v828, %v1807
        %v1809 = vpop.f32.mrf.mxu0
        %v1810 = vpop.f32.mrf.mxu0
        %v1811 = vadd.f32 %v828, %v1810
        %v1812 = vpop.f32.mrf.mxu0
        %1813 = vmatprep.mubr.bf16.mxu0 0
        %1814 = vmatmul.mubr.bf16.gmra.mxu0 %v958
        %v1815 = vpop.f32.mrf.mxu0
        %v1816 = vadd.f32 %v828, %v1815
        %v1817 = vpop.f32.mrf.mxu0
        %v1818 = vpop.f32.mrf.mxu0
        %v1819 = vadd.f32 %v828, %v1818
        %v1820 = vpop.f32.mrf.mxu0
        %1821 = vmatprep.mubr.bf16.mxu0 0
        %1822 = vmatmul.mubr.bf16.gmra.mxu0 %v961
        %v1823 = vpop.f32.mrf.mxu0
        %v1824 = vadd.f32 %v828, %v1823
        %v1825 = vpop.f32.mrf.mxu0
        %v1826 = vpop.f32.mrf.mxu0
        %v1827 = vadd.f32 %v828, %v1826
        %v1828 = vpop.f32.mrf.mxu0
        %1829 = vmatprep.mubr.bf16.mxu0 0
        %1830 = vmatmul.mubr.bf16.gmra.mxu0 %v964
        %v1831 = vpop.f32.mrf.mxu0
        %v1832 = vadd.f32 %v828, %v1831
        %v1833 = vpop.f32.mrf.mxu0
        %v1834 = vpop.f32.mrf.mxu0
        %v1835 = vadd.f32 %v828, %v1834
        %v1836 = vpop.f32.mrf.mxu0
        %1837 = vmatprep.mubr.bf16.mxu0 0
        %1838 = vmatmul.mubr.bf16.gmra.mxu0 %v967
        %v1839 = vpop.f32.mrf.mxu0
        %v1840 = vadd.f32 %v828, %v1839
        %v1841 = vpop.f32.mrf.mxu0
        %v1842 = vpop.f32.mrf.mxu0
        %v1843 = vadd.f32 %v828, %v1842
        %v1844 = vpop.f32.mrf.mxu0
        %1845 = vmatprep.mubr.bf16.mxu0 0
        %1846 = vmatmul.mubr.bf16.gmra.mxu0 %v970
        %v1847 = vpop.f32.mrf.mxu0
        %v1848 = vadd.f32 %v828, %v1847
        %v1849 = vpop.f32.mrf.mxu0
        %v1850 = vpop.f32.mrf.mxu0
        %v1851 = vadd.f32 %v828, %v1850
        %v1852 = vpop.f32.mrf.mxu0
        %1853 = vmatprep.mubr.bf16.mxu0 0
        %1854 = vmatmul.mubr.bf16.gmra.mxu0 %v973
        %v1855 = vpop.f32.mrf.mxu0
        %v1856 = vadd.f32 %v828, %v1855
        %v1857 = vpop.f32.mrf.mxu0
        %v1858 = vpop.f32.mrf.mxu0
        %v1859 = vadd.f32 %v828, %v1858
        %v1860 = vpop.f32.mrf.mxu0
        %1861 = vmatprep.mubr.bf16.mxu0 0
        %1862 = vmatmul.mubr.bf16.gmra.mxu0 %v976
        %v1863 = vpop.f32.mrf.mxu0
        %v1864 = vadd.f32 %v828, %v1863
        %v1865 = vpop.f32.mrf.mxu0
        %v1866 = vpop.f32.mrf.mxu0
        %v1867 = vadd.f32 %v828, %v1866
        %v1868 = vpop.f32.mrf.mxu0
        %1869 = vmatprep.mubr.bf16.mxu0 0
        %1870 = vmatmul.mubr.bf16.gmra.mxu0 %v979
        %v1871 = vpop.f32.mrf.mxu0
        %v1872 = vadd.f32 %v828, %v1871
        %v1873 = vpop.f32.mrf.mxu0
        %v1874 = vpop.f32.mrf.mxu0
        %v1875 = vadd.f32 %v828, %v1874
        %v1876 = vpop.f32.mrf.mxu0
        %1877 = vmatprep.mubr.bf16.mxu0 0
        %1878 = vmatmul.mubr.bf16.gmra.mxu0 %v982
        %v1879 = vpop.f32.mrf.mxu0
        %v1880 = vadd.f32 %v828, %v1879
        %v1881 = vpop.f32.mrf.mxu0
        %v1882 = vpop.f32.mrf.mxu0
        %v1883 = vadd.f32 %v828, %v1882
        %v1884 = vpop.f32.mrf.mxu0
        %1885 = vmatprep.mubr.bf16.mxu0 0
        %1886 = vmatmul.mubr.bf16.gmra.mxu0 %v985
        %v1887 = vpop.f32.mrf.mxu0
        %v1888 = vadd.f32 %v828, %v1887
        %v1889 = vpop.f32.mrf.mxu0
        %v1890 = vpop.f32.mrf.mxu0
        %v1891 = vadd.f32 %v828, %v1890
        %v1892 = vpop.f32.mrf.mxu0
        %1893 = vmatprep.mubr.bf16.mxu0 0
        %1894 = vmatmul.mubr.bf16.gmra.mxu0 %v988
        %v1895 = vpop.f32.mrf.mxu0
        %v1896 = vadd.f32 %v828, %v1895
        %v1897 = vpop.f32.mrf.mxu0
        %v1898 = vpop.f32.mrf.mxu0
        %v1899 = vadd.f32 %v828, %v1898
        %v1900 = vpop.f32.mrf.mxu0
        %1901 = vmatprep.mubr.bf16.mxu0 0
        %1902 = vmatmul.mubr.bf16.gmra.mxu0 %v991
        %v1903 = vpop.f32.mrf.mxu0
        %v1904 = vadd.f32 %v828, %v1903
        %v1905 = vpop.f32.mrf.mxu0
        %v1906 = vpop.f32.mrf.mxu0
        %v1907 = vadd.f32 %v828, %v1906
        %v1908 = vpop.f32.mrf.mxu0
        %1909 = vmatprep.mubr.bf16.mxu0 0
        %1910 = vmatmul.mubr.bf16.gmra.mxu0 %v994
        %v1911 = vpop.f32.mrf.mxu0
        %v1912 = vadd.f32 %v828, %v1911
        %v1913 = vpop.f32.mrf.mxu0
        %v1914 = vpop.f32.mrf.mxu0
        %v1915 = vadd.f32 %v828, %v1914
        %v1916 = vpop.f32.mrf.mxu0
        %1917 = vmatprep.mubr.bf16.mxu0 0
        %1918 = vmatmul.mubr.bf16.gmra.mxu0 %v997
        %v1919 = vpop.f32.mrf.mxu0
        %v1920 = vadd.f32 %v828, %v1919
        %v1921 = vpop.f32.mrf.mxu0
        %v1922 = vpop.f32.mrf.mxu0
        %v1923 = vadd.f32 %v828, %v1922
        %v1924 = vpop.f32.mrf.mxu0
        %1925 = vmatprep.mubr.bf16.mxu0 0
        %1926 = vmatmul.mubr.bf16.gmra.mxu0 %v1000
        %v1927 = vpop.f32.mrf.mxu0
        %v1928 = vadd.f32 %v828, %v1927
        %v1929 = vpop.f32.mrf.mxu0
        %v1930 = vpop.f32.mrf.mxu0
        %v1931 = vadd.f32 %v828, %v1930
        %v1932 = vpop.f32.mrf.mxu0
        %1933 = vmatprep.mubr.bf16.mxu0 0
        %1934 = vmatmul.mubr.bf16.gmra.mxu0 %v1003
        %v1935 = vpop.f32.mrf.mxu0
        %v1936 = vadd.f32 %v828, %v1935
        %v1937 = vpop.f32.mrf.mxu0
        %v1938 = vpop.f32.mrf.mxu0
        %v1939 = vadd.f32 %v828, %v1938
        %v1940 = vpop.f32.mrf.mxu0
        %1941 = vmatprep.mubr.bf16.mxu0 0
        %1942 = vmatmul.mubr.bf16.gmra.mxu0 %v1006
        %v1943 = vpop.f32.mrf.mxu0
        %v1944 = vadd.f32 %v828, %v1943
        %v1945 = vpop.f32.mrf.mxu0
        %v1946 = vpop.f32.mrf.mxu0
        %v1947 = vadd.f32 %v828, %v1946
        %v1948 = vpop.f32.mrf.mxu0
        %1949 = vmatprep.mubr.bf16.mxu0 0
        %1950 = vmatmul.mubr.bf16.gmra.mxu0 %v1009
        %v1951 = vpop.f32.mrf.mxu0
        %v1952 = vadd.f32 %v828, %v1951
        %v1953 = vpop.f32.mrf.mxu0
        %v1954 = vpop.f32.mrf.mxu0
        %v1955 = vadd.f32 %v828, %v1954
        %v1956 = vpop.f32.mrf.mxu0
        %1957 = vmatprep.mubr.bf16.mxu0 0
        %1958 = vmatmul.mubr.bf16.gmra.mxu0 %v1012
        %v1959 = vpop.f32.mrf.mxu0
        %v1960 = vadd.f32 %v828, %v1959
        %v1961 = vpop.f32.mrf.mxu0
        %v1962 = vpop.f32.mrf.mxu0
        %v1963 = vadd.f32 %v828, %v1962
        %v1964 = vpop.f32.mrf.mxu0
        %1965 = vmatprep.mubr.bf16.mxu0 0
        %1966 = vmatmul.mubr.bf16.gmra.mxu0 %v1015
        %v1967 = vpop.f32.mrf.mxu0
        %v1968 = vadd.f32 %v828, %v1967
        %v1969 = vpop.f32.mrf.mxu0
        %v1970 = vpop.f32.mrf.mxu0
        %v1971 = vadd.f32 %v828, %v1970
        %v1972 = vpop.f32.mrf.mxu0
        %1973 = vmatprep.mubr.bf16.mxu0 0
        %1974 = vmatmul.mubr.bf16.gmra.mxu0 %v1018
        %v1975 = vpop.f32.mrf.mxu0
        %v1976 = vadd.f32 %v828, %v1975
        %v1977 = vpop.f32.mrf.mxu0
        %v1978 = vpop.f32.mrf.mxu0
        %v1979 = vadd.f32 %v828, %v1978
        %v1980 = vpop.f32.mrf.mxu0
        %1981 = vmatprep.mubr.bf16.mxu0 0
        %1982 = vmatmul.mubr.bf16.gmra.mxu0 %v1021
        %v1983 = vpop.f32.mrf.mxu0
        %v1984 = vadd.f32 %v828, %v1983
        %v1985 = vpop.f32.mrf.mxu0
        %v1986 = vpop.f32.mrf.mxu0
        %v1987 = vadd.f32 %v828, %v1986
        %v1988 = vpop.f32.mrf.mxu0
        %1989 = vmatprep.mubr.bf16.mxu0 0
        %1990 = vmatmul.mubr.bf16.gmra.mxu0 %v1024
        %v1991 = vpop.f32.mrf.mxu0
        %v1992 = vadd.f32 %v828, %v1991
        %v1993 = vpop.f32.mrf.mxu0
        %v1994 = vpop.f32.mrf.mxu0
        %v1995 = vadd.f32 %v828, %v1994
        %v1996 = vpop.f32.mrf.mxu0
        %1997 = vmatprep.mubr.bf16.mxu0 0
        %1998 = vmatmul.mubr.bf16.gmra.mxu0 %v1027
        %v1999 = vpop.f32.mrf.mxu0
        %v2000 = vadd.f32 %v828, %v1999
        %v2001 = vpop.f32.mrf.mxu0
        %v2002 = vpop.f32.mrf.mxu0
        %v2003 = vadd.f32 %v828, %v2002
        %v2004 = vpop.f32.mrf.mxu0
        %2005 = vmatprep.mubr.bf16.mxu0 0
        %2006 = vmatmul.mubr.bf16.gmra.mxu0 %v1030
        %v2007 = vpop.f32.mrf.mxu0
        %v2008 = vadd.f32 %v828, %v2007
        %v2009 = vpop.f32.mrf.mxu0
        %v2010 = vpop.f32.mrf.mxu0
        %v2011 = vadd.f32 %v828, %v2010
        %v2012 = vpop.f32.mrf.mxu0
        %2013 = vmatprep.mubr.bf16.mxu0 0
        %2014 = vmatmul.mubr.bf16.gmra.mxu0 %v1033
        %v2015 = vpop.f32.mrf.mxu0
        %v2016 = vadd.f32 %v828, %v2015
        %v2017 = vpop.f32.mrf.mxu0
        %v2018 = vpop.f32.mrf.mxu0
        %v2019 = vadd.f32 %v828, %v2018
        %v2020 = vpop.f32.mrf.mxu0
        %2021 = vmatprep.mubr.bf16.mxu0 0
        %2022 = vmatmul.mubr.bf16.gmra.mxu0 %v1036
        %v2023 = vpop.f32.mrf.mxu0
        %v2024 = vadd.f32 %v828, %v2023
        %v2025 = vpop.f32.mrf.mxu0
        %v2026 = vpop.f32.mrf.mxu0
        %v2027 = vadd.f32 %v828, %v2026
        %v2028 = vpop.f32.mrf.mxu0
        %2029 = vmatprep.mubr.bf16.mxu0 0
        %2030 = vmatmul.mubr.bf16.gmra.mxu0 %v1039
        %v2031 = vpop.f32.mrf.mxu0
        %v2032 = vadd.f32 %v828, %v2031
        %v2033 = vpop.f32.mrf.mxu0
        %v2034 = vpop.f32.mrf.mxu0
        %v2035 = vadd.f32 %v828, %v2034
        %v2036 = vpop.f32.mrf.mxu0
        %2037 = vmatprep.mubr.bf16.mxu0 0
        %2038 = vmatmul.mubr.bf16.gmra.mxu0 %v1042
        %v2039 = vpop.f32.mrf.mxu0
        %v2040 = vadd.f32 %v828, %v2039
        %v2041 = vpop.f32.mrf.mxu0
        %v2042 = vpop.f32.mrf.mxu0
        %v2043 = vadd.f32 %v828, %v2042
        %v2044 = vpop.f32.mrf.mxu0
        %2045 = vmatprep.mubr.bf16.mxu0 0
        %2046 = vmatmul.mubr.bf16.gmra.mxu0 %v1045
        %v2047 = vpop.f32.mrf.mxu0
        %v2048 = vadd.f32 %v828, %v2047
        %v2049 = vpop.f32.mrf.mxu0
        %v2050 = vpop.f32.mrf.mxu0
        %v2051 = vadd.f32 %v828, %v2050
        %v2052 = vpop.f32.mrf.mxu0
        %2053 = vmatprep.mubr.bf16.mxu0 0
        %2054 = vmatmul.mubr.bf16.gmra.mxu0 %v1048
        %v2055 = vpop.f32.mrf.mxu0
        %v2056 = vadd.f32 %v828, %v2055
        %v2057 = vpop.f32.mrf.mxu0
        %v2058 = vpop.f32.mrf.mxu0
        %v2059 = vadd.f32 %v828, %v2058
        %v2060 = vpop.f32.mrf.mxu0
        %2061 = vmatprep.mubr.bf16.mxu0 0
        %2062 = vmatmul.mubr.bf16.gmra.mxu0 %v1051
        %v2063 = vpop.f32.mrf.mxu0
        %v2064 = vadd.f32 %v828, %v2063
        %v2065 = vpop.f32.mrf.mxu0
        %v2066 = vpop.f32.mrf.mxu0
        %v2067 = vadd.f32 %v828, %v2066
        %v2068 = vpop.f32.mrf.mxu0
        %2069 = vmatprep.mubr.bf16.mxu0 0
        %2070 = vmatmul.mubr.bf16.gmra.mxu0 %v1054
        %v2071 = vpop.f32.mrf.mxu0
        %v2072 = vadd.f32 %v828, %v2071
        %v2073 = vpop.f32.mrf.mxu0
        %v2074 = vpop.f32.mrf.mxu0
        %v2075 = vadd.f32 %v828, %v2074
        %v2076 = vpop.f32.mrf.mxu0
        %2077 = vmatprep.mubr.bf16.mxu0 0
        %2078 = vmatmul.mubr.bf16.gmra.mxu0 %v1057
        %v2079 = vpop.f32.mrf.mxu0
        %v2080 = vadd.f32 %v828, %v2079
        %v2081 = vpop.f32.mrf.mxu0
        %v2082 = vpop.f32.mrf.mxu0
        %v2083 = vadd.f32 %v828, %v2082
        %v2084 = vpop.f32.mrf.mxu0
        %2085 = vmatprep.mubr.bf16.mxu0 0
        %2086 = vmatmul.mubr.bf16.gmra.mxu0 %v1060
        %v2087 = vpop.f32.mrf.mxu0
        %v2088 = vadd.f32 %v828, %v2087
        %v2089 = vpop.f32.mrf.mxu0
        %v2090 = vpop.f32.mrf.mxu0
        %v2091 = vadd.f32 %v828, %v2090
        %v2092 = vpop.f32.mrf.mxu0
        %2093 = vmatprep.mubr.bf16.mxu0 0
        %2094 = vmatmul.mubr.bf16.gmra.mxu0 %v1063
        %v2095 = vpop.f32.mrf.mxu0
        %v2096 = vadd.f32 %v828, %v2095
        %v2097 = vpop.f32.mrf.mxu0
        %v2098 = vpop.f32.mrf.mxu0
        %v2099 = vadd.f32 %v828, %v2098
        %v2100 = vpop.f32.mrf.mxu0
        %2101 = vmatprep.mubr.bf16.mxu0 0
        %2102 = vmatmul.mubr.bf16.gmra.mxu0 %v1066
        %v2103 = vpop.f32.mrf.mxu0
        %v2104 = vadd.f32 %v828, %v2103
        %v2105 = vpop.f32.mrf.mxu0
        %v2106 = vpop.f32.mrf.mxu0
        %v2107 = vadd.f32 %v828, %v2106
        %v2108 = vpop.f32.mrf.mxu0
        %2109 = vmatprep.mubr.bf16.mxu0 0
        %2110 = vmatmul.mubr.bf16.gmra.mxu0 %v1069
        %v2111 = vpop.f32.mrf.mxu0
        %v2112 = vadd.f32 %v828, %v2111
        %v2113 = vpop.f32.mrf.mxu0
        %v2114 = vpop.f32.mrf.mxu0
        %v2115 = vadd.f32 %v828, %v2114
        %v2116 = vpop.f32.mrf.mxu0
        %2117 = vmatprep.mubr.bf16.mxu0 0
        %2118 = vmatmul.mubr.bf16.gmra.mxu0 %v1072
        %v2119 = vpop.f32.mrf.mxu0
        %v2120 = vadd.f32 %v828, %v2119
        %v2121 = vpop.f32.mrf.mxu0
        %v2122 = vpop.f32.mrf.mxu0
        %v2123 = vadd.f32 %v828, %v2122
        %v2124 = vpop.f32.mrf.mxu0
        %2125 = vmatprep.mubr.bf16.mxu0 0
        %2126 = vmatmul.mubr.bf16.gmra.mxu0 %v1075
        %v2127 = vpop.f32.mrf.mxu0
        %v2128 = vadd.f32 %v828, %v2127
        %v2129 = vpop.f32.mrf.mxu0
        %v2130 = vpop.f32.mrf.mxu0
        %v2131 = vadd.f32 %v828, %v2130
        %v2132 = vpop.f32.mrf.mxu0
        %2133 = vmatprep.mubr.bf16.mxu0 0
        %2134 = vmatmul.mubr.bf16.gmra.mxu0 %v1078
        %v2135 = vpop.f32.mrf.mxu0
        %v2136 = vadd.f32 %v828, %v2135
        %v2137 = vpop.f32.mrf.mxu0
        %v2138 = vpop.f32.mrf.mxu0
        %v2139 = vadd.f32 %v828, %v2138
        %v2140 = vpop.f32.mrf.mxu0
        %2141 = vmatprep.mubr.bf16.mxu0 0
        %2142 = vmatmul.mubr.bf16.gmra.mxu0 %v1081
        %v2143 = vpop.f32.mrf.mxu0
        %v2144 = vadd.f32 %v828, %v2143
        %v2145 = vpop.f32.mrf.mxu0
        %v2146 = vpop.f32.mrf.mxu0
        %v2147 = vadd.f32 %v828, %v2146
        %v2148 = vpop.f32.mrf.mxu0
        %2149 = vmatprep.mubr.bf16.mxu0 0
        %2150 = vmatmul.mubr.bf16.gmra.mxu0 %v1084
        %v2151 = vpop.f32.mrf.mxu0
        %v2152 = vadd.f32 %v828, %v2151
        %v2153 = vpop.f32.mrf.mxu0
        %v2154 = vpop.f32.mrf.mxu0
        %v2155 = vadd.f32 %v828, %v2154
        %v2156 = vpop.f32.mrf.mxu0
        %2157 = vmatprep.mubr.bf16.mxu0 0
        %2158 = vmatmul.mubr.bf16.gmra.mxu0 %v1087
        %v2159 = vpop.f32.mrf.mxu0
        %v2160 = vadd.f32 %v828, %v2159
        %v2161 = vpop.f32.mrf.mxu0
        %v2162 = vpop.f32.mrf.mxu0
        %v2163 = vadd.f32 %v828, %v2162
        %v2164 = vpop.f32.mrf.mxu0
        %2165 = vmatprep.mubr.bf16.mxu0 0
        %2166 = vmatmul.mubr.bf16.gmra.mxu0 %v1090
        %v2167 = vpop.f32.mrf.mxu0
        %v2168 = vadd.f32 %v828, %v2167
        %v2169 = vpop.f32.mrf.mxu0
        %v2170 = vpop.f32.mrf.mxu0
        %v2171 = vadd.f32 %v828, %v2170
        %v2172 = vpop.f32.mrf.mxu0
        %2173 = vmatprep.mubr.bf16.mxu0 0
        %2174 = vmatmul.mubr.bf16.gmra.mxu0 %v1093
        %v2175 = vpop.f32.mrf.mxu0
        %v2176 = vadd.f32 %v828, %v2175
        %v2177 = vpop.f32.mrf.mxu0
        %v2178 = vpop.f32.mrf.mxu0
        %v2179 = vadd.f32 %v828, %v2178
        %v2180 = vpop.f32.mrf.mxu0
        %2181 = vmatprep.mubr.bf16.mxu0 0
        %2182 = vmatmul.mubr.bf16.gmra.mxu0 %v1096
        %v2183 = vpop.f32.mrf.mxu0
        %v2184 = vadd.f32 %v828, %v2183
        %v2185 = vpop.f32.mrf.mxu0
        %v2186 = vpop.f32.mrf.mxu0
        %v2187 = vadd.f32 %v828, %v2186
        %v2188 = vpop.f32.mrf.mxu0
        %2189 = vmatprep.mubr.bf16.mxu0 0
        %2190 = vmatmul.mubr.bf16.gmra.mxu0 %v1099
        %v2191 = vpop.f32.mrf.mxu0
        %v2192 = vadd.f32 %v828, %v2191
        %v2193 = vpop.f32.mrf.mxu0
        %v2194 = vpop.f32.mrf.mxu0
        %v2195 = vadd.f32 %v828, %v2194
        %v2196 = vpop.f32.mrf.mxu0
        %2197 = vmatprep.mubr.bf16.mxu0 0
        %2198 = vmatmul.mubr.bf16.gmra.mxu0 %v1102
        %v2199 = vpop.f32.mrf.mxu0
        %v2200 = vadd.f32 %v828, %v2199
        %v2201 = vpop.f32.mrf.mxu0
        %v2202 = vpop.f32.mrf.mxu0
        %v2203 = vadd.f32 %v828, %v2202
        %v2204 = vpop.f32.mrf.mxu0
        %2205 = vmatprep.mubr.bf16.mxu0 0
        %2206 = vmatmul.mubr.bf16.gmra.mxu0 %v1105
        %v2207 = vpop.f32.mrf.mxu0
        %v2208 = vadd.f32 %v828, %v2207
        %v2209 = vpop.f32.mrf.mxu0
        %v2210 = vpop.f32.mrf.mxu0
        %v2211 = vadd.f32 %v828, %v2210
        %v2212 = vpop.f32.mrf.mxu0
        %2213 = vmatprep.mubr.bf16.mxu0 0
        %2214 = vmatmul.mubr.bf16.gmra.mxu0 %v1108
        %v2215 = vpop.f32.mrf.mxu0
        %v2216 = vadd.f32 %v828, %v2215
        %v2217 = vpop.f32.mrf.mxu0
        %v2218 = vpop.f32.mrf.mxu0
        %v2219 = vadd.f32 %v828, %v2218
        %v2220 = vpop.f32.mrf.mxu0
        %2221 = vmatprep.mubr.bf16.mxu0 0
        %2222 = vmatmul.mubr.bf16.gmra.mxu0 %v1111
        %v2223 = vpop.f32.mrf.mxu0
        %v2224 = vadd.f32 %v828, %v2223
        %v2225 = vpop.f32.mrf.mxu0
        %v2226 = vpop.f32.mrf.mxu0
        %v2227 = vadd.f32 %v828, %v2226
        %v2228 = vpop.f32.mrf.mxu0
        %2229 = vmatprep.mubr.bf16.mxu0 0
        %2230 = vmatmul.mubr.bf16.gmra.mxu0 %v1114
        %v2231 = vpop.f32.mrf.mxu0
        %v2232 = vadd.f32 %v828, %v2231
        %v2233 = vpop.f32.mrf.mxu0
        %v2234 = vpop.f32.mrf.mxu0
        %v2235 = vadd.f32 %v828, %v2234
        %v2236 = vpop.f32.mrf.mxu0
        %2237 = vmatprep.mubr.bf16.mxu0 0
        %2238 = vmatmul.mubr.bf16.gmra.mxu0 %v1117
        %v2239 = vpop.f32.mrf.mxu0
        %v2240 = vadd.f32 %v828, %v2239
        %v2241 = vpop.f32.mrf.mxu0
        %v2242 = vpop.f32.mrf.mxu0
        %v2243 = vadd.f32 %v828, %v2242
        %v2244 = vpop.f32.mrf.mxu0
        %2245 = vmatprep.mubr.bf16.mxu0 0
        %2246 = vmatmul.mubr.bf16.gmra.mxu0 %v1120
        %v2247 = vpop.f32.mrf.mxu0
        %v2248 = vadd.f32 %v828, %v2247
        %v2249 = vpop.f32.mrf.mxu0
        %v2250 = vpop.f32.mrf.mxu0
        %v2251 = vadd.f32 %v828, %v2250
        %v2252 = vpop.f32.mrf.mxu0
        %2253 = vmatprep.mubr.bf16.mxu0 0
        %2254 = vmatmul.mubr.bf16.gmra.mxu0 %v1123
        %v2255 = vpop.f32.mrf.mxu0
        %v2256 = vadd.f32 %v828, %v2255
        %v2257 = vpop.f32.mrf.mxu0
        %v2258 = vpop.f32.mrf.mxu0
        %v2259 = vadd.f32 %v828, %v2258
        %v2260 = vpop.f32.mrf.mxu0
        %2261 = vmatprep.mubr.bf16.mxu0 0
        %2262 = vmatmul.mubr.bf16.gmra.mxu0 %v1126
        %v2263 = vpop.f32.mrf.mxu0
        %v2264 = vadd.f32 %v828, %v2263
        %v2265 = vpop.f32.mrf.mxu0
        %v2266 = vpop.f32.mrf.mxu0
        %v2267 = vadd.f32 %v828, %v2266
        %v2268 = vpop.f32.mrf.mxu0
        %2269 = vmatprep.mubr.bf16.mxu0 0
        %2270 = vmatmul.mubr.bf16.gmra.mxu0 %v1129
        %v2271 = vpop.f32.mrf.mxu0
        %v2272 = vadd.f32 %v828, %v2271
        %v2273 = vpop.f32.mrf.mxu0
        %v2274 = vpop.f32.mrf.mxu0
        %v2275 = vadd.f32 %v828, %v2274
        %v2276 = vpop.f32.mrf.mxu0
        %2277 = vmatprep.mubr.bf16.mxu0 0
        %2278 = vmatmul.mubr.bf16.gmra.mxu0 %v1132
        %v2279 = vpop.f32.mrf.mxu0
        %v2280 = vadd.f32 %v828, %v2279
        %v2281 = vpop.f32.mrf.mxu0
        %v2282 = vpop.f32.mrf.mxu0
        %v2283 = vadd.f32 %v828, %v2282
        %v2284 = vpop.f32.mrf.mxu0
        %2285 = vmatprep.mubr.bf16.mxu0 0
        %2286 = vmatmul.mubr.bf16.gmra.mxu0 %v1135
        %v2287 = vpop.f32.mrf.mxu0
        %v2288 = vadd.f32 %v828, %v2287
        %v2289 = vpop.f32.mrf.mxu0
        %v2290 = vpop.f32.mrf.mxu0
        %v2291 = vadd.f32 %v828, %v2290
        %v2292 = vpop.f32.mrf.mxu0
        %2293 = vmatprep.mubr.bf16.mxu0 0
        %2294 = vmatmul.mubr.bf16.gmra.mxu0 %v1138
        %v2295 = vpop.f32.mrf.mxu0
        %v2296 = vadd.f32 %v828, %v2295
        %v2297 = vpop.f32.mrf.mxu0
        %v2298 = vpop.f32.mrf.mxu0
        %v2299 = vadd.f32 %v828, %v2298
        %v2300 = vpop.f32.mrf.mxu0
        %2301 = vmatprep.mubr.bf16.mxu0 0
        %2302 = vmatmul.mubr.bf16.gmra.mxu0 %v1141
        %v2303 = vpop.f32.mrf.mxu0
        %v2304 = vadd.f32 %v828, %v2303
        %v2305 = vpop.f32.mrf.mxu0
        %v2306 = vpop.f32.mrf.mxu0
        %v2307 = vadd.f32 %v828, %v2306
        %v2308 = vpop.f32.mrf.mxu0
        %2309 = vmatprep.mubr.bf16.mxu0 0
        %2310 = vmatmul.mubr.bf16.gmra.mxu0 %v1144
        %v2311 = vpop.f32.mrf.mxu0
        %v2312 = vadd.f32 %v828, %v2311
        %v2313 = vpop.f32.mrf.mxu0
        %v2314 = vpop.f32.mrf.mxu0
        %v2315 = vadd.f32 %v828, %v2314
        %v2316 = vpop.f32.mrf.mxu0
        %2317 = vmatprep.mubr.bf16.mxu0 0
        %2318 = vmatmul.mubr.bf16.gmra.mxu0 %v1147
        %v2319 = vpop.f32.mrf.mxu0
        %v2320 = vadd.f32 %v828, %v2319
        %v2321 = vpop.f32.mrf.mxu0
        %v2322 = vpop.f32.mrf.mxu0
        %v2323 = vadd.f32 %v828, %v2322
        %v2324 = vpop.f32.mrf.mxu0
        %2325 = vmatprep.mubr.bf16.mxu0 0
        %2326 = vmatmul.mubr.bf16.gmra.mxu0 %v1150
        %v2327 = vpop.f32.mrf.mxu0
        %v2328 = vadd.f32 %v828, %v2327
        %v2329 = vpop.f32.mrf.mxu0
        %v2330 = vpop.f32.mrf.mxu0
        %v2331 = vadd.f32 %v828, %v2330
        %v2332 = vpop.f32.mrf.mxu0
        %2333 = vmatprep.mubr.bf16.mxu0 0
        %2334 = vmatmul.mubr.bf16.gmra.mxu0 %v1153
        %v2335 = vpop.f32.mrf.mxu0
        %v2336 = vadd.f32 %v828, %v2335
        %v2337 = vpop.f32.mrf.mxu0
        %v2338 = vpop.f32.mrf.mxu0
        %v2339 = vadd.f32 %v828, %v2338
        %v2340 = vpop.f32.mrf.mxu0
        %2341 = vmatprep.mubr.bf16.mxu0 0
        %2342 = vmatmul.mubr.bf16.gmra.mxu0 %v1156
        %v2343 = vpop.f32.mrf.mxu0
        %v2344 = vadd.f32 %v828, %v2343
        %v2345 = vpop.f32.mrf.mxu0
        %v2346 = vpop.f32.mrf.mxu0
        %v2347 = vadd.f32 %v828, %v2346
        %v2348 = vpop.f32.mrf.mxu0
        %2349 = vmatprep.mubr.bf16.mxu0 0
        %2350 = vmatmul.mubr.bf16.gmra.mxu0 %v1159
        %v2351 = vpop.f32.mrf.mxu0
        %v2352 = vadd.f32 %v828, %v2351
        %v2353 = vpop.f32.mrf.mxu0
        %v2354 = vpop.f32.mrf.mxu0
        %v2355 = vadd.f32 %v828, %v2354
        %v2356 = vpop.f32.mrf.mxu0
        %2357 = vmatprep.mubr.bf16.mxu0 0
        %2358 = vmatmul.mubr.bf16.gmra.mxu0 %v1162
        %v2359 = vpop.f32.mrf.mxu0
        %v2360 = vadd.f32 %v828, %v2359
        %v2361 = vpop.f32.mrf.mxu0
        %v2362 = vpop.f32.mrf.mxu0
        %v2363 = vadd.f32 %v828, %v2362
        %v2364 = vpop.f32.mrf.mxu0
        %2365 = vmatprep.mubr.bf16.mxu0 0
        %2366 = vmatmul.mubr.bf16.gmra.mxu0 %v1165
        %v2367 = vpop.f32.mrf.mxu0
        %v2368 = vadd.f32 %v828, %v2367
        %v2369 = vpop.f32.mrf.mxu0
        %v2370 = vpop.f32.mrf.mxu0
        %v2371 = vadd.f32 %v828, %v2370
        %v2372 = vpop.f32.mrf.mxu0
        %2373 = vmatprep.mubr.bf16.mxu0 0
        %2374 = vmatmul.mubr.bf16.gmra.mxu0 %v1168
        %v2375 = vpop.f32.mrf.mxu0
        %v2376 = vadd.f32 %v828, %v2375
        %v2377 = vpop.f32.mrf.mxu0
        %v2378 = vpop.f32.mrf.mxu0
        %v2379 = vadd.f32 %v828, %v2378
        %v2380 = vpop.f32.mrf.mxu0
        %2381 = vmatprep.mubr.bf16.mxu0 0
        %2382 = vmatmul.mubr.bf16.gmra.mxu0 %v1171
        %v2383 = vpop.f32.mrf.mxu0
        %v2384 = vadd.f32 %v828, %v2383
        %v2385 = vpop.f32.mrf.mxu0
        %v2386 = vpop.f32.mrf.mxu0
        %v2387 = vadd.f32 %v828, %v2386
        %v2388 = vpop.f32.mrf.mxu0
        %2389 = vmatprep.mubr.bf16.mxu0 0
        %2390 = vmatmul.mubr.bf16.gmra.mxu0 %v1174
        %v2391 = vpop.f32.mrf.mxu0
        %v2392 = vadd.f32 %v828, %v2391
        %v2393 = vpop.f32.mrf.mxu0
        %v2394 = vpop.f32.mrf.mxu0
        %v2395 = vadd.f32 %v828, %v2394
        %v2396 = vpop.f32.mrf.mxu0
        %2397 = vmatprep.mubr.bf16.mxu0 0
        %2398 = vmatmul.mubr.bf16.gmra.mxu0 %v1177
        %v2399 = vpop.f32.mrf.mxu0
        %v2400 = vadd.f32 %v828, %v2399
        %v2401 = vpop.f32.mrf.mxu0
        %v2402 = vpop.f32.mrf.mxu0
        %v2403 = vadd.f32 %v828, %v2402
        %v2404 = vpop.f32.mrf.mxu0
        %2405 = vmatprep.mubr.bf16.mxu0 0
        %2406 = vmatmul.mubr.bf16.gmra.mxu0 %v1180
        %v2407 = vpop.f32.mrf.mxu0
        %v2408 = vadd.f32 %v828, %v2407
        %v2409 = vpop.f32.mrf.mxu0
        %v2410 = vpop.f32.mrf.mxu0
        %v2411 = vadd.f32 %v828, %v2410
        %v2412 = vpop.f32.mrf.mxu0
        %2413 = vmatprep.mubr.bf16.mxu0 0
        %2414 = vmatmul.mubr.bf16.gmra.mxu0 %v1183
        %v2415 = vpop.f32.mrf.mxu0
        %v2416 = vadd.f32 %v828, %v2415
        %v2417 = vpop.f32.mrf.mxu0
        %v2418 = vpop.f32.mrf.mxu0
        %v2419 = vadd.f32 %v828, %v2418
        %v2420 = vpop.f32.mrf.mxu0
        %2421 = vmatprep.mubr.bf16.mxu0 0
        %2422 = vmatmul.mubr.bf16.gmra.mxu0 %v1186
        %v2423 = vpop.f32.mrf.mxu0
        %v2424 = vadd.f32 %v828, %v2423
        %v2425 = vpop.f32.mrf.mxu0
        %v2426 = vpop.f32.mrf.mxu0
        %v2427 = vadd.f32 %v828, %v2426
        %v2428 = vpop.f32.mrf.mxu0
        %2429 = vmatprep.mubr.bf16.mxu0 0
        %2430 = vmatmul.mubr.bf16.gmra.mxu0 %v1189
        %v2431 = vpop.f32.mrf.mxu0
        %v2432 = vadd.f32 %v828, %v2431
        %v2433 = vpop.f32.mrf.mxu0
        %v2434 = vpop.f32.mrf.mxu0
        %v2435 = vadd.f32 %v828, %v2434
        %v2436 = vpop.f32.mrf.mxu0
        %2437 = vmatprep.mubr.bf16.mxu0 0
        %2438 = vmatmul.mubr.bf16.gmra.mxu0 %v1192
        %v2439 = vpop.f32.mrf.mxu0
        %v2440 = vadd.f32 %v828, %v2439
        %v2441 = vpop.f32.mrf.mxu0
        %v2442 = vpop.f32.mrf.mxu0
        %v2443 = vadd.f32 %v828, %v2442
        %v2444 = vpop.f32.mrf.mxu0
        %2445 = vmatprep.mubr.bf16.mxu0 0
        %2446 = vmatmul.mubr.bf16.gmra.mxu0 %v1195
        %v2447 = vpop.f32.mrf.mxu0
        %v2448 = vadd.f32 %v828, %v2447
        %v2449 = vpop.f32.mrf.mxu0
        %v2450 = vpop.f32.mrf.mxu0
        %v2451 = vadd.f32 %v828, %v2450
        %v2452 = vpop.f32.mrf.mxu0
        %2453 = vmatprep.mubr.bf16.mxu0 0
        %2454 = vmatmul.mubr.bf16.gmra.mxu0 %v1198
        %v2455 = vpop.f32.mrf.mxu0
        %v2456 = vadd.f32 %v828, %v2455
        %v2457 = vpop.f32.mrf.mxu0
        %v2458 = vpop.f32.mrf.mxu0
        %v2459 = vadd.f32 %v828, %v2458
        %v2460 = vpop.f32.mrf.mxu0
        %2461 = vmatprep.mubr.bf16.mxu0 0
        %2462 = vmatmul.mubr.bf16.gmra.mxu0 %v1201
        %v2463 = vpop.f32.mrf.mxu0
        %v2464 = vadd.f32 %v828, %v2463
        %v2465 = vpop.f32.mrf.mxu0
        %v2466 = vpop.f32.mrf.mxu0
        %v2467 = vadd.f32 %v828, %v2466
        %v2468 = vpop.f32.mrf.mxu0
        %2469 = vmatprep.mubr.bf16.mxu0 0
        %2470 = vmatmul.mubr.bf16.gmra.mxu0 %v1204
        %v2471 = vpop.f32.mrf.mxu0
        %v2472 = vadd.f32 %v828, %v2471
        %v2473 = vpop.f32.mrf.mxu0
        %v2474 = vpop.f32.mrf.mxu0
        %v2475 = vadd.f32 %v828, %v2474
        %v2476 = vpop.f32.mrf.mxu0
        %2477 = vmatprep.mubr.bf16.mxu0 0
        %2478 = vmatmul.mubr.bf16.gmra.mxu0 %v1207
        %v2479 = vpop.f32.mrf.mxu0
        %v2480 = vadd.f32 %v828, %v2479
        %v2481 = vpop.f32.mrf.mxu0
        %v2482 = vpop.f32.mrf.mxu0
        %v2483 = vadd.f32 %v828, %v2482
        %v2484 = vpop.f32.mrf.mxu0
        %2485 = vmatprep.mubr.bf16.mxu0 0
        %2486 = vmatmul.mubr.bf16.gmra.mxu0 %v1210
        %v2487 = vpop.f32.mrf.mxu0
        %v2488 = vadd.f32 %v828, %v2487
        %v2489 = vpop.f32.mrf.mxu0
        %v2490 = vpop.f32.mrf.mxu0
        %v2491 = vadd.f32 %v828, %v2490
        %v2492 = vpop.f32.mrf.mxu0
        %2493 = vmatprep.mubr.bf16.mxu0 0
        %2494 = vmatmul.mubr.bf16.gmra.mxu0 %v1213
        %v2495 = vpop.f32.mrf.mxu0
        %v2496 = vadd.f32 %v828, %v2495
        %v2497 = vpop.f32.mrf.mxu0
        %v2498 = vpop.f32.mrf.mxu0
        %v2499 = vadd.f32 %v828, %v2498
        %v2500 = vpop.f32.mrf.mxu0
        %2501 = vmatprep.mubr.bf16.mxu0 0
        %2502 = vmatmul.mubr.bf16.gmra.mxu0 %v1216
        %v2503 = vpop.f32.mrf.mxu0
        %v2504 = vadd.f32 %v828, %v2503
        %v2505 = vpop.f32.mrf.mxu0
        %v2506 = vpop.f32.mrf.mxu0
        %v2507 = vadd.f32 %v828, %v2506
        %v2508 = vpop.f32.mrf.mxu0
        %2509 = vmatprep.mubr.bf16.mxu0 0
        %2510 = vmatmul.mubr.bf16.gmra.mxu0 %v1219
        %v2511 = vpop.f32.mrf.mxu0
        %v2512 = vadd.f32 %v828, %v2511
        %v2513 = vpop.f32.mrf.mxu0
        %v2514 = vpop.f32.mrf.mxu0
        %v2515 = vadd.f32 %v828, %v2514
        %v2516 = vpop.f32.mrf.mxu0
        %2517 = vmatprep.mubr.bf16.mxu0 0
        %2518 = vmatmul.mubr.bf16.gmra.mxu0 %v1222
        %v2519 = vpop.f32.mrf.mxu0
        %v2520 = vadd.f32 %v828, %v2519
        %v2521 = vpop.f32.mrf.mxu0
        %v2522 = vpop.f32.mrf.mxu0
        %v2523 = vadd.f32 %v828, %v2522
        %v2524 = vpop.f32.mrf.mxu0
        %2525 = vmatprep.mubr.bf16.mxu0 0
        %2526 = vmatmul.mubr.bf16.gmra.mxu0 %v1225
        %v2527 = vpop.f32.mrf.mxu0
        %v2528 = vadd.f32 %v828, %v2527
        %v2529 = vpop.f32.mrf.mxu0
        %v2530 = vpop.f32.mrf.mxu0
        %v2531 = vadd.f32 %v828, %v2530
        %v2532 = vpop.f32.mrf.mxu0
        %2533 = vmatprep.mubr.bf16.mxu0 0
        %2534 = vmatmul.mubr.bf16.gmra.mxu0 %v1228
        %v2535 = vpop.f32.mrf.mxu0
        %v2536 = vadd.f32 %v828, %v2535
        %v2537 = vpop.f32.mrf.mxu0
        %v2538 = vpop.f32.mrf.mxu0
        %v2539 = vadd.f32 %v828, %v2538
        %v2540 = vpop.f32.mrf.mxu0
        %2541 = vmatprep.mubr.bf16.mxu0 0
        %2542 = vmatmul.mubr.bf16.gmra.mxu0 %v1231
        %v2543 = vpop.f32.mrf.mxu0
        %v2544 = vadd.f32 %v828, %v2543
        %v2545 = vpop.f32.mrf.mxu0
        %v2546 = vpop.f32.mrf.mxu0
        %v2547 = vadd.f32 %v828, %v2546
        %v2548 = vpop.f32.mrf.mxu0
        %2549 = vmatprep.mubr.bf16.mxu0 0
        %2550 = vmatmul.mubr.bf16.gmra.mxu0 %v1234
        %v2551 = vpop.f32.mrf.mxu0
        %v2552 = vadd.f32 %v828, %v2551
        %v2553 = vpop.f32.mrf.mxu0
        %v2554 = vpop.f32.mrf.mxu0
        %v2555 = vadd.f32 %v828, %v2554
        %v2556 = vpop.f32.mrf.mxu0
        %2557 = vmatprep.mubr.bf16.mxu0 0
        %2558 = vmatmul.mubr.bf16.gmra.mxu0 %v1237
        %v2559 = vpop.f32.mrf.mxu0
        %v2560 = vadd.f32 %v828, %v2559
        %v2561 = vpop.f32.mrf.mxu0
        %v2562 = vpop.f32.mrf.mxu0
        %v2563 = vadd.f32 %v828, %v2562
        %v2564 = vpop.f32.mrf.mxu0
        %2565 = vmatprep.mubr.bf16.mxu0 0
        %2566 = vmatmul.mubr.bf16.gmra.mxu0 %v1240
        %v2567 = vpop.f32.mrf.mxu0
        %v2568 = vadd.f32 %v828, %v2567
        %v2569 = vpop.f32.mrf.mxu0
        %v2570 = vpop.f32.mrf.mxu0
        %v2571 = vadd.f32 %v828, %v2570
        %v2572 = vpop.f32.mrf.mxu0
        %2573 = vmatprep.mubr.bf16.mxu0 0
        %2574 = vmatmul.mubr.bf16.gmra.mxu0 %v1243
        %v2575 = vpop.f32.mrf.mxu0
        %v2576 = vadd.f32 %v828, %v2575
        %v2577 = vpop.f32.mrf.mxu0
        %v2578 = vpop.f32.mrf.mxu0
        %v2579 = vadd.f32 %v828, %v2578
        %v2580 = vpop.f32.mrf.mxu0
        %2581 = vmatprep.mubr.bf16.mxu0 0
        %2582 = vmatmul.mubr.bf16.gmra.mxu0 %v1246
        %v2583 = vpop.f32.mrf.mxu0
        %v2584 = vadd.f32 %v828, %v2583
        %v2585 = vpop.f32.mrf.mxu0
        %v2586 = vpop.f32.mrf.mxu0
        %v2587 = vadd.f32 %v828, %v2586
        %v2588 = vpop.f32.mrf.mxu0
        %2589 = vmatprep.mubr.bf16.mxu0 0
        %2590 = vmatmul.mubr.bf16.gmra.mxu0 %v1249
        %v2591 = vpop.f32.mrf.mxu0
        %v2592 = vadd.f32 %v828, %v2591
        %v2593 = vpop.f32.mrf.mxu0
        %v2594 = vpop.f32.mrf.mxu0
        %v2595 = vadd.f32 %v828, %v2594
        %v2596 = vpop.f32.mrf.mxu0
        %2597 = vmatprep.mubr.bf16.mxu0 0
        %2598 = vmatmul.mubr.bf16.gmra.mxu0 %v1252
        %v2599 = vpop.f32.mrf.mxu0
        %v2600 = vadd.f32 %v828, %v2599
        %v2601 = vpop.f32.mrf.mxu0
        %v2602 = vpop.f32.mrf.mxu0
        %v2603 = vadd.f32 %v828, %v2602
        %v2604 = vpop.f32.mrf.mxu0
        %2605 = vmatprep.mubr.bf16.mxu0 0
        %2606 = vmatmul.mubr.bf16.gmra.mxu0 %v1255
        %v2607 = vpop.f32.mrf.mxu0
        %v2608 = vadd.f32 %v828, %v2607
        %v2609 = vpop.f32.mrf.mxu0
        %v2610 = vpop.f32.mrf.mxu0
        %v2611 = vadd.f32 %v828, %v2610
        %v2612 = vpop.f32.mrf.mxu0
        %2613 = vmatprep.mubr.bf16.mxu0 0
        %2614 = vmatmul.mubr.bf16.gmra.mxu0 %v1258
        %v2615 = vpop.f32.mrf.mxu0
        %v2616 = vadd.f32 %v828, %v2615
        %v2617 = vpop.f32.mrf.mxu0
        %v2618 = vpop.f32.mrf.mxu0
        %v2619 = vadd.f32 %v828, %v2618
        %v2620 = vpop.f32.mrf.mxu0
        %2621 = vmatprep.mubr.bf16.mxu0 0
        %2622 = vmatmul.mubr.bf16.gmra.mxu0 %v1261
        %v2623 = vpop.f32.mrf.mxu0
        %v2624 = vadd.f32 %v828, %v2623
        %v2625 = vpop.f32.mrf.mxu0
        %v2626 = vpop.f32.mrf.mxu0
        %v2627 = vadd.f32 %v828, %v2626
        %v2628 = vpop.f32.mrf.mxu0
        %2629 = vmatprep.mubr.bf16.mxu0 0
        %2630 = vmatmul.mubr.bf16.gmra.mxu0 %v1264
        %v2631 = vpop.f32.mrf.mxu0
        %v2632 = vadd.f32 %v828, %v2631
        %v2633 = vpop.f32.mrf.mxu0
        %v2634 = vpop.f32.mrf.mxu0
        %v2635 = vadd.f32 %v828, %v2634
        %v2636 = vpop.f32.mrf.mxu0
        %2637 = vmatprep.mubr.bf16.mxu0 0
        %2638 = vmatmul.mubr.bf16.gmra.mxu0 %v1267
        %v2639 = vpop.f32.mrf.mxu0
        %v2640 = vadd.f32 %v828, %v2639
        %v2641 = vpop.f32.mrf.mxu0
        %v2642 = vpop.f32.mrf.mxu0
        %v2643 = vadd.f32 %v828, %v2642
        %v2644 = vpop.f32.mrf.mxu0
        %2645 = vmatprep.mubr.bf16.mxu0 0
        %2646 = vmatmul.mubr.bf16.gmra.mxu0 %v1270
        %v2647 = vpop.f32.mrf.mxu0
        %v2648 = vadd.f32 %v828, %v2647
        %v2649 = vpop.f32.mrf.mxu0
        %v2650 = vpop.f32.mrf.mxu0
        %v2651 = vadd.f32 %v828, %v2650
        %v2652 = vpop.f32.mrf.mxu0
        %2653 = vmatprep.mubr.bf16.mxu0 0
        %2654 = vmatmul.mubr.bf16.gmra.mxu0 %v1273
        %v2655 = vpop.f32.mrf.mxu0
        %v2656 = vadd.f32 %v828, %v2655
        %v2657 = vpop.f32.mrf.mxu0
        %v2658 = vpop.f32.mrf.mxu0
        %v2659 = vadd.f32 %v828, %v2658
        %v2660 = vpop.f32.mrf.mxu0
        %2661 = vmatprep.mubr.bf16.mxu0 0
        %2662 = vmatmul.mubr.bf16.gmra.mxu0 %v1276
        %v2663 = vpop.f32.mrf.mxu0
        %v2664 = vadd.f32 %v828, %v2663
        %v2665 = vpop.f32.mrf.mxu0
        %v2666 = vpop.f32.mrf.mxu0
        %v2667 = vadd.f32 %v828, %v2666
        %v2668 = vpop.f32.mrf.mxu0
        %2669 = vmatprep.mubr.bf16.mxu0 0
        %2670 = vmatmul.mubr.bf16.gmra.mxu0 %v1279
        %v2671 = vpop.f32.mrf.mxu0
        %v2672 = vadd.f32 %v828, %v2671
        %v2673 = vpop.f32.mrf.mxu0
        %v2674 = vpop.f32.mrf.mxu0
        %v2675 = vadd.f32 %v828, %v2674
        %v2676 = vpop.f32.mrf.mxu0
        %2677 = vmatprep.mubr.bf16.mxu0 0
        %2678 = vmatmul.mubr.bf16.gmra.mxu0 %v1282
        %v2679 = vpop.f32.mrf.mxu0
        %v2680 = vadd.f32 %v828, %v2679
        %v2681 = vpop.f32.mrf.mxu0
        %v2682 = vpop.f32.mrf.mxu0
        %v2683 = vadd.f32 %v828, %v2682
        %v2684 = vpop.f32.mrf.mxu0
        %2685 = vmatprep.mubr.bf16.mxu0 0
        %2686 = vmatmul.mubr.bf16.gmra.mxu0 %v1285
        %v2687 = vpop.f32.mrf.mxu0
        %v2688 = vadd.f32 %v828, %v2687
        %v2689 = vpop.f32.mrf.mxu0
        %v2690 = vpop.f32.mrf.mxu0
        %v2691 = vadd.f32 %v828, %v2690
        %v2692 = vpop.f32.mrf.mxu0
        %2693 = vmatprep.mubr.bf16.mxu0 0
        %2694 = vmatmul.mubr.bf16.gmra.mxu0 %v1288
        %v2695 = vpop.f32.mrf.mxu0
        %v2696 = vadd.f32 %v828, %v2695
        %v2697 = vpop.f32.mrf.mxu0
        %v2698 = vpop.f32.mrf.mxu0
        %v2699 = vadd.f32 %v828, %v2698
        %v2700 = vpop.f32.mrf.mxu0
        %2701 = vmatprep.mubr.bf16.mxu0 0
        %2702 = vmatmul.mubr.bf16.gmra.mxu0 %v1291
        %v2703 = vpop.f32.mrf.mxu0
        %v2704 = vadd.f32 %v828, %v2703
        %v2705 = vpop.f32.mrf.mxu0
        %v2706 = vpop.f32.mrf.mxu0
        %v2707 = vadd.f32 %v828, %v2706
        %v2708 = vpop.f32.mrf.mxu0
        %2709 = vmatprep.mubr.bf16.mxu0 0
        %2710 = vmatmul.mubr.bf16.gmra.mxu0 %v1294
        %v2711 = vpop.f32.mrf.mxu0
        %v2712 = vadd.f32 %v828, %v2711
        %v2713 = vpop.f32.mrf.mxu0
        %v2714 = vpop.f32.mrf.mxu0
        %v2715 = vadd.f32 %v828, %v2714
        %v2716 = vpop.f32.mrf.mxu0
        %2717 = vmatprep.mubr.bf16.mxu0 0
        %2718 = vmatmul.mubr.bf16.gmra.mxu0 %v1297
        %v2719 = vpop.f32.mrf.mxu0
        %v2720 = vadd.f32 %v828, %v2719
        %v2721 = vpop.f32.mrf.mxu0
        %v2722 = vpop.f32.mrf.mxu0
        %v2723 = vadd.f32 %v828, %v2722
        %v2724 = vpop.f32.mrf.mxu0
        %2725 = vmatprep.mubr.bf16.mxu0 0
        %2726 = vmatmul.mubr.bf16.gmra.mxu0 %v1300
        %v2727 = vpop.f32.mrf.mxu0
        %v2728 = vadd.f32 %v828, %v2727
        %v2729 = vpop.f32.mrf.mxu0
        %v2730 = vpop.f32.mrf.mxu0
        %v2731 = vadd.f32 %v828, %v2730
        %v2732 = vpop.f32.mrf.mxu0
        %2733 = vmatprep.mubr.bf16.mxu0 0
        %2734 = vmatmul.mubr.bf16.gmra.mxu0 %v1303
        %v2735 = vpop.f32.mrf.mxu0
        %v2736 = vadd.f32 %v828, %v2735
        %v2737 = vpop.f32.mrf.mxu0
        %v2738 = vpop.f32.mrf.mxu0
        %v2739 = vadd.f32 %v828, %v2738
        %v2740 = vpop.f32.mrf.mxu0
        %2741 = vmatprep.mubr.bf16.mxu0 0
        %2742 = vmatmul.mubr.bf16.gmra.mxu0 %v1306
        %v2743 = vpop.f32.mrf.mxu0
        %v2744 = vadd.f32 %v828, %v2743
        %v2745 = vpop.f32.mrf.mxu0
        %v2746 = vpop.f32.mrf.mxu0
        %v2747 = vadd.f32 %v828, %v2746
        %v2748 = vpop.f32.mrf.mxu0
        %2749 = vmatprep.mubr.bf16.mxu0 0
        %2750 = vmatmul.mubr.bf16.gmra.mxu0 %v1309
        %v2751 = vpop.f32.mrf.mxu0
        %v2752 = vadd.f32 %v828, %v2751
        %v2753 = vpop.f32.mrf.mxu0
        %v2754 = vpop.f32.mrf.mxu0
        %v2755 = vadd.f32 %v828, %v2754
        %v2756 = vpop.f32.mrf.mxu0
        %2757 = vmatprep.mubr.bf16.mxu0 0
        %2758 = vmatmul.mubr.bf16.gmra.mxu0 %v1312
        %v2759 = vpop.f32.mrf.mxu0
        %v2760 = vadd.f32 %v828, %v2759
        %v2761 = vpop.f32.mrf.mxu0
        %v2762 = vpop.f32.mrf.mxu0
        %v2763 = vadd.f32 %v828, %v2762
        %v2764 = vpop.f32.mrf.mxu0
        %2765 = vmatprep.mubr.bf16.mxu0 0
        %2766 = vmatmul.mubr.bf16.gmra.mxu0 %v1315
        %v2767 = vpop.f32.mrf.mxu0
        %v2768 = vadd.f32 %v828, %v2767
        %v2769 = vpop.f32.mrf.mxu0
        %v2770 = vpop.f32.mrf.mxu0
        %v2771 = vadd.f32 %v828, %v2770
        %v2772 = vpop.f32.mrf.mxu0
        %2773 = vmatprep.mubr.bf16.mxu0 0
        %2774 = vmatmul.mubr.bf16.gmra.mxu0 %v1318
        %v2775 = vpop.f32.mrf.mxu0
        %v2776 = vadd.f32 %v828, %v2775
        %v2777 = vpop.f32.mrf.mxu0
        %v2778 = vpop.f32.mrf.mxu0
        %v2779 = vadd.f32 %v828, %v2778
        %v2780 = vpop.f32.mrf.mxu0
        %2781 = vmatprep.mubr.bf16.mxu0 0
        %2782 = vmatmul.mubr.bf16.gmra.mxu0 %v1321
        %v2783 = vpop.f32.mrf.mxu0
        %v2784 = vadd.f32 %v828, %v2783
        %v2785 = vpop.f32.mrf.mxu0
        %v2786 = vpop.f32.mrf.mxu0
        %v2787 = vadd.f32 %v828, %v2786
        %v2788 = vpop.f32.mrf.mxu0
        %2789 = vmatprep.mubr.bf16.mxu0 0
        %2790 = vmatmul.mubr.bf16.gmra.mxu0 %v1324
        %v2791 = vpop.f32.mrf.mxu0
        %v2792 = vadd.f32 %v828, %v2791
        %v2793 = vpop.f32.mrf.mxu0
        %v2794 = vpop.f32.mrf.mxu0
        %v2795 = vadd.f32 %v828, %v2794
        %v2796 = vpop.f32.mrf.mxu0
        %2797 = vmatprep.mubr.bf16.mxu0 0
        %2798 = vmatmul.mubr.bf16.gmra.mxu0 %v1327
        %v2799 = vpop.f32.mrf.mxu0
        %v2800 = vadd.f32 %v828, %v2799
        %v2801 = vpop.f32.mrf.mxu0
        %v2802 = vpop.f32.mrf.mxu0
        %v2803 = vadd.f32 %v828, %v2802
        %v2804 = vpop.f32.mrf.mxu0
        %2805 = vmatprep.mubr.bf16.mxu0 0
        %2806 = vmatmul.mubr.bf16.gmra.mxu0 %v1330
        %v2807 = vpop.f32.mrf.mxu0
        %v2808 = vadd.f32 %v828, %v2807
        %v2809 = vpop.f32.mrf.mxu0
        %v2810 = vpop.f32.mrf.mxu0
        %v2811 = vadd.f32 %v828, %v2810
        %v2812 = vpop.f32.mrf.mxu0
        %2813 = vmatprep.mubr.bf16.mxu0 0
        %2814 = vmatmul.mubr.bf16.gmra.mxu0 %v1333
        %v2815 = vpop.f32.mrf.mxu0
        %v2816 = vadd.f32 %v828, %v2815
        %v2817 = vpop.f32.mrf.mxu0
        %v2818 = vpop.f32.mrf.mxu0
        %v2819 = vadd.f32 %v828, %v2818
        %v2820 = vpop.f32.mrf.mxu0
        %2821 = vmatprep.mubr.bf16.mxu0 0
        %2822 = vmatmul.mubr.bf16.gmra.mxu0 %v1336
        %v2823 = vpop.f32.mrf.mxu0
        %v2824 = vadd.f32 %v828, %v2823
        %v2825 = vpop.f32.mrf.mxu0
        %v2826 = vpop.f32.mrf.mxu0
        %v2827 = vadd.f32 %v828, %v2826
        %v2828 = vpop.f32.mrf.mxu0
        %2829 = vmatprep.mubr.bf16.mxu0 0
        %2830 = vmatmul.mubr.bf16.gmra.mxu0 %v1339
        %v2831 = vpop.f32.mrf.mxu0
        %v2832 = vadd.f32 %v828, %v2831
        %v2833 = vpop.f32.mrf.mxu0
        %v2834 = vpop.f32.mrf.mxu0
        %v2835 = vadd.f32 %v828, %v2834
        %v2836 = vpop.f32.mrf.mxu0
        %2837 = vmatprep.mubr.bf16.mxu0 0
        %2838 = vmatmul.mubr.bf16.gmra.mxu0 %v1342
        %v2839 = vpop.f32.mrf.mxu0
        %v2840 = vadd.f32 %v828, %v2839
        %v2841 = vpop.f32.mrf.mxu0
        %v2842 = vpop.f32.mrf.mxu0
        %v2843 = vadd.f32 %v828, %v2842
        %v2844 = vpop.f32.mrf.mxu0
        %2845 = vmatprep.mubr.bf16.mxu0 0
        %2846 = vmatmul.mubr.bf16.gmra.mxu0 %v1345
        %v2847 = vpop.f32.mrf.mxu0
        %v2848 = vadd.f32 %v828, %v2847
        %v2849 = vpop.f32.mrf.mxu0
        %v2850 = vpop.f32.mrf.mxu0
        %v2851 = vadd.f32 %v828, %v2850
        %v2852 = vpop.f32.mrf.mxu0
        %2853 = vmatprep.mubr.bf16.mxu0 0
        %2854 = vmatmul.mubr.bf16.gmra.mxu0 %v1348
        %v2855 = vpop.f32.mrf.mxu0
        %v2856 = vadd.f32 %v828, %v2855
        %v2857 = vpop.f32.mrf.mxu0
        %v2858 = vpop.f32.mrf.mxu0
        %v2859 = vadd.f32 %v828, %v2858
        %v2860 = vpop.f32.mrf.mxu0
        %2861 = vmatprep.mubr.bf16.mxu0 0
        %2862 = vmatmul.mubr.bf16.gmra.mxu0 %v1351
        %v2863 = vpop.f32.mrf.mxu0
        %v2864 = vadd.f32 %v828, %v2863
        %v2865 = vpop.f32.mrf.mxu0
        %v2866 = vpop.f32.mrf.mxu0
        %v2867 = vadd.f32 %v828, %v2866
        %v2868 = vpop.f32.mrf.mxu0
        %2869 = vmatprep.mubr.bf16.mxu0 0
        %2870 = vmatmul.mubr.bf16.gmra.mxu0 %v1354
        %v2871 = vpop.f32.mrf.mxu0
        %v2872 = vadd.f32 %v828, %v2871
        %v2873 = vpop.f32.mrf.mxu0
        %v2874 = vpop.f32.mrf.mxu0
        %v2875 = vadd.f32 %v828, %v2874
        %v2876 = vpop.f32.mrf.mxu0
        %2877 = vmatprep.mubr.bf16.mxu0 0
        %2878 = vmatmul.mubr.bf16.gmra.mxu0 %v1357
        %v2879 = vpop.f32.mrf.mxu0
        %v2880 = vadd.f32 %v828, %v2879
        %v2881 = vpop.f32.mrf.mxu0
        %v2882 = vpop.f32.mrf.mxu0
        %v2883 = vadd.f32 %v828, %v2882
        %v2884 = vpop.f32.mrf.mxu0
        %2885 = vmatprep.mubr.bf16.mxu0 0
        %2886 = vmatmul.mubr.bf16.gmra.mxu0 %v1360
        %v2887 = vpop.f32.mrf.mxu0
        %v2888 = vadd.f32 %v828, %v2887
        %v2889 = vpop.f32.mrf.mxu0
        %v2890 = vpop.f32.mrf.mxu0
        %v2891 = vadd.f32 %v828, %v2890
        %v2892 = vpop.f32.mrf.mxu0
        %2893 = vmatprep.mubr.bf16.mxu0 0
        %2894 = vmatmul.mubr.bf16.gmra.mxu0 %v1363
        %v2895 = vpop.f32.mrf.mxu0
        %v2896 = vadd.f32 %v828, %v2895
        %v2897 = vpop.f32.mrf.mxu0
        %v2898 = vpop.f32.mrf.mxu0
        %v2899 = vadd.f32 %v828, %v2898
        %v2900 = vpop.f32.mrf.mxu0
        %2901 = vmatprep.mubr.bf16.mxu0 0
        %2902 = vmatmul.mubr.bf16.gmra.mxu0 %v1366
        %v2903 = vpop.f32.mrf.mxu0
        %v2904 = vadd.f32 %v828, %v2903
        %v2905 = vpop.f32.mrf.mxu0
        %v2906 = vpop.f32.mrf.mxu0
        %v2907 = vadd.f32 %v828, %v2906
        %v2908 = vpop.f32.mrf.mxu0
        %2909 = vmatprep.mubr.bf16.mxu0 0
        %2910 = vmatmul.mubr.bf16.gmra.mxu0 %v1369
        %v2911 = vpop.f32.mrf.mxu0
        %v2912 = vadd.f32 %v828, %v2911
        %v2913 = vpop.f32.mrf.mxu0
        %v2914 = vpop.f32.mrf.mxu0
        %v2915 = vadd.f32 %v828, %v2914
        %v2916 = vpop.f32.mrf.mxu0
        %2917 = vmatprep.mubr.bf16.mxu0 0
        %2918 = vmatmul.mubr.bf16.gmra.mxu0 %v1372
        %v2919 = vpop.f32.mrf.mxu0
        %v2920 = vadd.f32 %v828, %v2919
        %v2921 = vpop.f32.mrf.mxu0
        %v2922 = vpop.f32.mrf.mxu0
        %v2923 = vadd.f32 %v828, %v2922
        %v2924 = vpop.f32.mrf.mxu0
        %2925 = vmatprep.mubr.bf16.mxu0 0
        %2926 = vmatmul.mubr.bf16.gmra.mxu0 %v1375
        %v2927 = vpop.f32.mrf.mxu0
        %v2928 = vadd.f32 %v828, %v2927
        %v2929 = vpop.f32.mrf.mxu0
        %v2930 = vpop.f32.mrf.mxu0
        %v2931 = vadd.f32 %v828, %v2930
        %v2932 = vpop.f32.mrf.mxu0
        %2933 = vmatprep.mubr.bf16.mxu0 0
        %2934 = vmatmul.mubr.bf16.gmra.mxu0 %v1378
        %v2935 = vpop.f32.mrf.mxu0
        %v2936 = vadd.f32 %v828, %v2935
        %v2937 = vpop.f32.mrf.mxu0
        %v2938 = vpop.f32.mrf.mxu0
        %v2939 = vadd.f32 %v828, %v2938
        %v2940 = vpop.f32.mrf.mxu0
        %2941 = vmatprep.mubr.bf16.mxu0 0
        %2942 = vmatmul.mubr.bf16.gmra.mxu0 %v1381
        %v2943 = vpop.f32.mrf.mxu0
        %v2944 = vadd.f32 %v828, %v2943
        %v2945 = vpop.f32.mrf.mxu0
        %v2946 = vpop.f32.mrf.mxu0
        %v2947 = vadd.f32 %v828, %v2946
        %v2948 = vpop.f32.mrf.mxu0
        %2949 = vmatprep.mubr.bf16.mxu0 0
        %2950 = vmatmul.mubr.bf16.gmra.mxu0 %v1384
        %v2951 = vpop.f32.mrf.mxu0
        %v2952 = vadd.f32 %v828, %v2951
        %v2953 = vpop.f32.mrf.mxu0
        %v2954 = vpop.f32.mrf.mxu0
        %v2955 = vadd.f32 %v828, %v2954
        %v2956 = vpop.f32.mrf.mxu0
        %2957 = vmatprep.mubr.bf16.mxu0 0
        %2958 = vmatmul.mubr.bf16.gmra.mxu0 %v1387
        %v2959 = vpop.f32.mrf.mxu0
        %v2960 = vadd.f32 %v828, %v2959
        %v2961 = vpop.f32.mrf.mxu0
        %v2962 = vpop.f32.mrf.mxu0
        %v2963 = vadd.f32 %v828, %v2962
        %v2964 = vpop.f32.mrf.mxu0
        %2965 = vmatprep.mubr.bf16.mxu0 0
        %2966 = vmatmul.mubr.bf16.gmra.mxu0 %v1390
        %v2967 = vpop.f32.mrf.mxu0
        %v2968 = vadd.f32 %v828, %v2967
        %v2969 = vpop.f32.mrf.mxu0
        %v2970 = vpop.f32.mrf.mxu0
        %v2971 = vadd.f32 %v828, %v2970
        %v2972 = vpop.f32.mrf.mxu0
        %2973 = vmatprep.mubr.bf16.mxu0 0
        %2974 = vmatmul.mubr.bf16.gmra.mxu0 %v1393
        %v2975 = vpop.f32.mrf.mxu0
        %v2976 = vadd.f32 %v828, %v2975
        %v2977 = vpop.f32.mrf.mxu0
        %v2978 = vpop.f32.mrf.mxu0
        %v2979 = vadd.f32 %v828, %v2978
        %v2980 = vpop.f32.mrf.mxu0
        %2981 = vmatprep.mubr.bf16.mxu0 0
        %2982 = vmatmul.mubr.bf16.gmra.mxu0 %v1396
        %v2983 = vpop.f32.mrf.mxu0
        %v2984 = vadd.f32 %v828, %v2983
        %v2985 = vpop.f32.mrf.mxu0
        %v2986 = vpop.f32.mrf.mxu0
        %v2987 = vadd.f32 %v828, %v2986
        %v2988 = vpop.f32.mrf.mxu0
        %2989 = vmatprep.mubr.bf16.mxu0 0
        %2990 = vmatmul.mubr.bf16.gmra.mxu0 %v1399
        %v2991 = vpop.f32.mrf.mxu0
        %v2992 = vadd.f32 %v828, %v2991
        %v2993 = vpop.f32.mrf.mxu0
        %v2994 = vpop.f32.mrf.mxu0
        %v2995 = vadd.f32 %v828, %v2994
        %v2996 = vpop.f32.mrf.mxu0
        %2997 = vmatprep.mubr.bf16.mxu0 0
        %2998 = vmatmul.mubr.bf16.gmra.mxu0 %v1402
        %v2999 = vpop.f32.mrf.mxu0
        %v3000 = vadd.f32 %v828, %v2999
        %v3001 = vpop.f32.mrf.mxu0
        %v3002 = vpop.f32.mrf.mxu0
        %v3003 = vadd.f32 %v828, %v3002
        %v3004 = vpop.f32.mrf.mxu0
        %3005 = vmatprep.mubr.bf16.mxu0 0
        %3006 = vmatmul.mubr.bf16.gmra.mxu0 %v1405
        %v3007 = vpop.f32.mrf.mxu0
        %v3008 = vadd.f32 %v828, %v3007
        %v3009 = vpop.f32.mrf.mxu0
        %v3010 = vpop.f32.mrf.mxu0
        %v3011 = vadd.f32 %v828, %v3010
        %v3012 = vpop.f32.mrf.mxu0
        %3013 = vmatprep.mubr.bf16.mxu0 0
        %3014 = vmatmul.mubr.bf16.gmra.mxu0 %v1408
        %v3015 = vpop.f32.mrf.mxu0
        %v3016 = vadd.f32 %v828, %v3015
        %v3017 = vpop.f32.mrf.mxu0
        %v3018 = vpop.f32.mrf.mxu0
        %v3019 = vadd.f32 %v828, %v3018
        %v3020 = vpop.f32.mrf.mxu0
        %3021 = vmatprep.mubr.bf16.mxu0 0
        %3022 = vmatmul.mubr.bf16.gmra.mxu0 %v1411
        %v3023 = vpop.f32.mrf.mxu0
        %v3024 = vadd.f32 %v828, %v3023
        %v3025 = vpop.f32.mrf.mxu0
        %v3026 = vpop.f32.mrf.mxu0
        %v3027 = vadd.f32 %v828, %v3026
        %v3028 = vpop.f32.mrf.mxu0
        %3029 = vmatprep.mubr.bf16.mxu0 0
        %3030 = vmatmul.mubr.bf16.gmra.mxu0 %v1414
        %v3031 = vpop.f32.mrf.mxu0
        %v3032 = vadd.f32 %v828, %v3031
        %v3033 = vpop.f32.mrf.mxu0
        %v3034 = vpop.f32.mrf.mxu0
        %v3035 = vadd.f32 %v828, %v3034
        %v3036 = vpop.f32.mrf.mxu0
        %3037 = vmatprep.mubr.bf16.mxu0 0
        %3038 = vmatmul.mubr.bf16.gmra.mxu0 %v1417
        %v3039 = vpop.f32.mrf.mxu0
        %v3040 = vadd.f32 %v828, %v3039
        %v3041 = vpop.f32.mrf.mxu0
        %v3042 = vpop.f32.mrf.mxu0
        %v3043 = vadd.f32 %v828, %v3042
        %v3044 = vpop.f32.mrf.mxu0
        %3045 = vmatprep.mubr.bf16.mxu0 0
        %3046 = vmatmul.mubr.bf16.gmra.mxu0 %v1420
        %v3047 = vpop.f32.mrf.mxu0
        %v3048 = vadd.f32 %v828, %v3047
        %v3049 = vpop.f32.mrf.mxu0
        %v3050 = vpop.f32.mrf.mxu0
        %v3051 = vadd.f32 %v828, %v3050
        %v3052 = vpop.f32.mrf.mxu0
        %3053 = vmatprep.mubr.bf16.mxu0 0
        %3054 = vmatmul.mubr.bf16.gmra.mxu0 %v1423
        %v3055 = vpop.f32.mrf.mxu0
        %v3056 = vadd.f32 %v828, %v3055
        %v3057 = vpop.f32.mrf.mxu0
        %v3058 = vpop.f32.mrf.mxu0
        %v3059 = vadd.f32 %v828, %v3058
        %v3060 = vpop.f32.mrf.mxu0
        %3061 = vmatprep.mubr.bf16.mxu0 0
        %3062 = vmatmul.mubr.bf16.gmra.mxu0 %v1426
        %v3063 = vpop.f32.mrf.mxu0
        %v3064 = vadd.f32 %v828, %v3063
        %v3065 = vpop.f32.mrf.mxu0
        %v3066 = vpop.f32.mrf.mxu0
        %v3067 = vadd.f32 %v828, %v3066
        %v3068 = vpop.f32.mrf.mxu0
        %3069 = vmatprep.mubr.bf16.mxu0 0
        %3070 = vmatmul.mubr.bf16.gmra.mxu0 %v1429
        %v3071 = vpop.f32.mrf.mxu0
        %v3072 = vadd.f32 %v828, %v3071
        %v3073 = vpop.f32.mrf.mxu0
        %v3074 = vpop.f32.mrf.mxu0
        %v3075 = vadd.f32 %v828, %v3074
        %v3076 = vpop.f32.mrf.mxu0
        %3077 = vmatprep.mubr.bf16.mxu0 0
        %3078 = vmatmul.mubr.bf16.gmra.mxu0 %v1432
        %v3079 = vpop.f32.mrf.mxu0
        %v3080 = vadd.f32 %v828, %v3079
        %v3081 = vpop.f32.mrf.mxu0
        %v3082 = vpop.f32.mrf.mxu0
        %v3083 = vadd.f32 %v828, %v3082
        %v3084 = vpop.f32.mrf.mxu0
        %3085 = vmatprep.mubr.bf16.mxu0 0
        %3086 = vmatmul.mubr.bf16.gmra.mxu0 %v1435
        %v3087 = vpop.f32.mrf.mxu0
        %v3088 = vadd.f32 %v828, %v3087
        %v3089 = vpop.f32.mrf.mxu0
        %v3090 = vpop.f32.mrf.mxu0
        %v3091 = vadd.f32 %v828, %v3090
        %v3092 = vpop.f32.mrf.mxu0
        %3093 = vmatprep.mubr.bf16.mxu0 0
        %3094 = vmatmul.mubr.bf16.gmra.mxu0 %v1438
        %v3095 = vpop.f32.mrf.mxu0
        %v3096 = vadd.f32 %v828, %v3095
        %v3097 = vpop.f32.mrf.mxu0
        %v3098 = vpop.f32.mrf.mxu0
        %v3099 = vadd.f32 %v828, %v3098
        %v3100 = vpop.f32.mrf.mxu0
        %3101 = vmatprep.mubr.bf16.mxu0 0
        %3102 = vmatmul.mubr.bf16.gmra.mxu0 %v1441
        %v3103 = vpop.f32.mrf.mxu0
        %v3104 = vadd.f32 %v828, %v3103
        %v3105 = vpop.f32.mrf.mxu0
        %v3106 = vpop.f32.mrf.mxu0
        %v3107 = vadd.f32 %v828, %v3106
        %v3108 = vpop.f32.mrf.mxu0
        %3109 = vmatprep.mubr.bf16.mxu0 0
        %3110 = vmatmul.mubr.bf16.gmra.mxu0 %v1444
        %v3111 = vpop.f32.mrf.mxu0
        %v3112 = vadd.f32 %v828, %v3111
        %v3113 = vpop.f32.mrf.mxu0
        %v3114 = vpop.f32.mrf.mxu0
        %v3115 = vadd.f32 %v828, %v3114
        %v3116 = vpop.f32.mrf.mxu0
        %3117 = vmatprep.mubr.bf16.mxu0 0
        %3118 = vmatmul.mubr.bf16.gmra.mxu0 %v1447
        %v3119 = vpop.f32.mrf.mxu0
        %v3120 = vadd.f32 %v828, %v3119
        %v3121 = vpop.f32.mrf.mxu0
        %v3122 = vpop.f32.mrf.mxu0
        %v3123 = vadd.f32 %v828, %v3122
        %v3124 = vpop.f32.mrf.mxu0
        %3125 = vmatprep.mubr.bf16.mxu0 0
        %3126 = vmatmul.mubr.bf16.gmra.mxu0 %v1450
        %v3127 = vpop.f32.mrf.mxu0
        %v3128 = vadd.f32 %v828, %v3127
        %v3129 = vpop.f32.mrf.mxu0
        %v3130 = vpop.f32.mrf.mxu0
        %v3131 = vadd.f32 %v828, %v3130
        %v3132 = vpop.f32.mrf.mxu0
        %3133 = vmatprep.mubr.bf16.mxu0 0
        %3134 = vmatmul.mubr.bf16.gmra.mxu0 %v1453
        %v3135 = vpop.f32.mrf.mxu0
        %v3136 = vadd.f32 %v828, %v3135
        %v3137 = vpop.f32.mrf.mxu0
        %v3138 = vpop.f32.mrf.mxu0
        %v3139 = vadd.f32 %v828, %v3138
        %v3140 = vpop.f32.mrf.mxu0
        %3141 = vmatprep.mubr.bf16.mxu0 0
        %3142 = vmatmul.mubr.bf16.gmra.mxu0 %v1456
        %v3143 = vpop.f32.mrf.mxu0
        %v3144 = vadd.f32 %v828, %v3143
        %v3145 = vpop.f32.mrf.mxu0
        %v3146 = vpop.f32.mrf.mxu0
        %v3147 = vadd.f32 %v828, %v3146
        %v3148 = vpop.f32.mrf.mxu0
        %3149 = vmatprep.mubr.bf16.mxu0 0
        %3150 = vmatmul.mubr.bf16.gmra.mxu0 %v1459
        %v3151 = vpop.f32.mrf.mxu0
        %v3152 = vadd.f32 %v828, %v3151
        %v3153 = vpop.f32.mrf.mxu0
        %v3154 = vpop.f32.mrf.mxu0
        %v3155 = vadd.f32 %v828, %v3154
        %v3156 = vpop.f32.mrf.mxu0
        %3157 = vdwg.mxu0
        %v3158 = vmax.f32 %v1496, 0.0
        %v3159 = vmax.f32 %v1499, 0.0
        %v3160 = vmax.f32 %v1504, 0.0
        %v3161 = vmax.f32 %v1507, 0.0
        %v3162 = vmax.f32 %v1512, 0.0
        %v3163 = vmax.f32 %v1515, 0.0
        %v3164 = vmax.f32 %v1520, 0.0
        %v3165 = vmax.f32 %v1523, 0.0
        %v3166 = vmax.f32 %v1528, 0.0
        %v3167 = vmax.f32 %v1531, 0.0
        %v3168 = vmax.f32 %v1536, 0.0
        %v3169 = vmax.f32 %v1539, 0.0
        %v3170 = vmax.f32 %v1544, 0.0
        %v3171 = vmax.f32 %v1547, 0.0
        %v3172 = vmax.f32 %v1552, 0.0
        %v3173 = vmax.f32 %v1555, 0.0
        %v3174 = vmax.f32 %v1560, 0.0
        %v3175 = vmax.f32 %v1563, 0.0
        %v3176 = vmax.f32 %v1568, 0.0
        %v3177 = vmax.f32 %v1571, 0.0
        %v3178 = vmax.f32 %v1576, 0.0
        %v3179 = vmax.f32 %v1579, 0.0
        %v3180 = vmax.f32 %v1584, 0.0
        %v3181 = vmax.f32 %v1587, 0.0
        %v3182 = vmax.f32 %v1592, 0.0
        %v3183 = vmax.f32 %v1595, 0.0
        %v3184 = vmax.f32 %v1600, 0.0
        %v3185 = vmax.f32 %v1603, 0.0
        %v3186 = vmax.f32 %v1608, 0.0
        %v3187 = vmax.f32 %v1611, 0.0
        %v3188 = vmax.f32 %v1616, 0.0
        %v3189 = vmax.f32 %v1619, 0.0
        %v3190 = vmax.f32 %v1624, 0.0
        %v3191 = vmax.f32 %v1627, 0.0
        %v3192 = vmax.f32 %v1632, 0.0
        %v3193 = vmax.f32 %v1635, 0.0
        %v3194 = vmax.f32 %v1640, 0.0
        %v3195 = vmax.f32 %v1643, 0.0
        %v3196 = vmax.f32 %v1648, 0.0
        %v3197 = vmax.f32 %v1651, 0.0
        %v3198 = vmax.f32 %v1656, 0.0
        %v3199 = vmax.f32 %v1659, 0.0
        %v3200 = vmax.f32 %v1664, 0.0
        %v3201 = vmax.f32 %v1667, 0.0
        %v3202 = vmax.f32 %v1672, 0.0
        %v3203 = vmax.f32 %v1675, 0.0
        %v3204 = vmax.f32 %v1680, 0.0
        %v3205 = vmax.f32 %v1683, 0.0
        %v3206 = vmax.f32 %v1688, 0.0
        %v3207 = vmax.f32 %v1691, 0.0
        %v3208 = vmax.f32 %v1696, 0.0
        %v3209 = vmax.f32 %v1699, 0.0
        %v3210 = vmax.f32 %v1704, 0.0
        %v3211 = vmax.f32 %v1707, 0.0
        %v3212 = vmax.f32 %v1712, 0.0
        %v3213 = vmax.f32 %v1715, 0.0
        %v3214 = vmax.f32 %v1720, 0.0
        %v3215 = vmax.f32 %v1723, 0.0
        %v3216 = vmax.f32 %v1728, 0.0
        %v3217 = vmax.f32 %v1731, 0.0
        %v3218 = vmax.f32 %v1736, 0.0
        %v3219 = vmax.f32 %v1739, 0.0
        %v3220 = vmax.f32 %v1744, 0.0
        %v3221 = vmax.f32 %v1747, 0.0
        %v3222 = vmax.f32 %v1752, 0.0
        %v3223 = vmax.f32 %v1755, 0.0
        %v3224 = vmax.f32 %v1760, 0.0
        %v3225 = vmax.f32 %v1763, 0.0
        %v3226 = vmax.f32 %v1768, 0.0
        %v3227 = vmax.f32 %v1771, 0.0
        %v3228 = vmax.f32 %v1776, 0.0
        %v3229 = vmax.f32 %v1779, 0.0
        %v3230 = vmax.f32 %v1784, 0.0
        %v3231 = vmax.f32 %v1787, 0.0
        %v3232 = vmax.f32 %v1792, 0.0
        %v3233 = vmax.f32 %v1795, 0.0
        %v3234 = vmax.f32 %v1800, 0.0
        %v3235 = vmax.f32 %v1803, 0.0
        %v3236 = vmax.f32 %v1808, 0.0
        %v3237 = vmax.f32 %v1811, 0.0
        %v3238 = vmax.f32 %v1816, 0.0
        %v3239 = vmax.f32 %v1819, 0.0
        %v3240 = vmax.f32 %v1824, 0.0
        %v3241 = vmax.f32 %v1827, 0.0
        %v3242 = vmax.f32 %v1832, 0.0
        %v3243 = vmax.f32 %v1835, 0.0
        %v3244 = vmax.f32 %v1840, 0.0
        %v3245 = vmax.f32 %v1843, 0.0
        %v3246 = vmax.f32 %v1848, 0.0
        %v3247 = vmax.f32 %v1851, 0.0
        %v3248 = vmax.f32 %v1856, 0.0
        %v3249 = vmax.f32 %v1859, 0.0
        %v3250 = vmax.f32 %v1864, 0.0
        %v3251 = vmax.f32 %v1867, 0.0
        %v3252 = vmax.f32 %v1872, 0.0
        %v3253 = vmax.f32 %v1875, 0.0
        %v3254 = vmax.f32 %v1880, 0.0
        %v3255 = vmax.f32 %v1883, 0.0
        %v3256 = vmax.f32 %v1888, 0.0
        %v3257 = vmax.f32 %v1891, 0.0
        %v3258 = vmax.f32 %v1896, 0.0
        %v3259 = vmax.f32 %v1899, 0.0
        %v3260 = vmax.f32 %v1904, 0.0
        %v3261 = vmax.f32 %v1907, 0.0
        %v3262 = vmax.f32 %v1912, 0.0
        %v3263 = vmax.f32 %v1915, 0.0
        %v3264 = vmax.f32 %v1920, 0.0
        %v3265 = vmax.f32 %v1923, 0.0
        %v3266 = vmax.f32 %v1928, 0.0
        %v3267 = vmax.f32 %v1931, 0.0
        %v3268 = vmax.f32 %v1936, 0.0
        %v3269 = vmax.f32 %v1939, 0.0
        %v3270 = vmax.f32 %v1944, 0.0
        %v3271 = vmax.f32 %v1947, 0.0
        %v3272 = vmax.f32 %v1952, 0.0
        %v3273 = vmax.f32 %v1955, 0.0
        %v3274 = vmax.f32 %v1960, 0.0
        %v3275 = vmax.f32 %v1963, 0.0
        %v3276 = vmax.f32 %v1968, 0.0
        %v3277 = vmax.f32 %v1971, 0.0
        %v3278 = vmax.f32 %v1976, 0.0
        %v3279 = vmax.f32 %v1979, 0.0
        %v3280 = vmax.f32 %v1984, 0.0
        %v3281 = vmax.f32 %v1987, 0.0
        %v3282 = vmax.f32 %v1992, 0.0
        %v3283 = vmax.f32 %v1995, 0.0
        %v3284 = vmax.f32 %v2000, 0.0
        %v3285 = vmax.f32 %v2003, 0.0
        %v3286 = vmax.f32 %v2008, 0.0
        %v3287 = vmax.f32 %v2011, 0.0
        %v3288 = vmax.f32 %v2016, 0.0
        %v3289 = vmax.f32 %v2019, 0.0
        %v3290 = vmax.f32 %v2024, 0.0
        %v3291 = vmax.f32 %v2027, 0.0
        %v3292 = vmax.f32 %v2032, 0.0
        %v3293 = vmax.f32 %v2035, 0.0
        %v3294 = vmax.f32 %v2040, 0.0
        %v3295 = vmax.f32 %v2043, 0.0
        %v3296 = vmax.f32 %v2048, 0.0
        %v3297 = vmax.f32 %v2051, 0.0
        %v3298 = vmax.f32 %v2056, 0.0
        %v3299 = vmax.f32 %v2059, 0.0
        %v3300 = vmax.f32 %v2064, 0.0
        %v3301 = vmax.f32 %v2067, 0.0
        %v3302 = vmax.f32 %v2072, 0.0
        %v3303 = vmax.f32 %v2075, 0.0
        %v3304 = vmax.f32 %v2080, 0.0
        %v3305 = vmax.f32 %v2083, 0.0
        %v3306 = vmax.f32 %v2088, 0.0
        %v3307 = vmax.f32 %v2091, 0.0
        %v3308 = vmax.f32 %v2096, 0.0
        %v3309 = vmax.f32 %v2099, 0.0
        %v3310 = vmax.f32 %v2104, 0.0
        %v3311 = vmax.f32 %v2107, 0.0
        %v3312 = vmax.f32 %v2112, 0.0
        %v3313 = vmax.f32 %v2115, 0.0
        %v3314 = vmax.f32 %v2120, 0.0
        %v3315 = vmax.f32 %v2123, 0.0
        %v3316 = vmax.f32 %v2128, 0.0
        %v3317 = vmax.f32 %v2131, 0.0
        %v3318 = vmax.f32 %v2136, 0.0
        %v3319 = vmax.f32 %v2139, 0.0
        %v3320 = vmax.f32 %v2144, 0.0
        %v3321 = vmax.f32 %v2147, 0.0
        %v3322 = vmax.f32 %v2152, 0.0
        %v3323 = vmax.f32 %v2155, 0.0
        %v3324 = vmax.f32 %v2160, 0.0
        %v3325 = vmax.f32 %v2163, 0.0
        %v3326 = vmax.f32 %v2168, 0.0
        %v3327 = vmax.f32 %v2171, 0.0
        %v3328 = vmax.f32 %v2176, 0.0
        %v3329 = vmax.f32 %v2179, 0.0
        %v3330 = vmax.f32 %v2184, 0.0
        %v3331 = vmax.f32 %v2187, 0.0
        %v3332 = vmax.f32 %v2192, 0.0
        %v3333 = vmax.f32 %v2195, 0.0
        %v3334 = vmax.f32 %v2200, 0.0
        %v3335 = vmax.f32 %v2203, 0.0
        %v3336 = vmax.f32 %v2208, 0.0
        %v3337 = vmax.f32 %v2211, 0.0
        %v3338 = vmax.f32 %v2216, 0.0
        %v3339 = vmax.f32 %v2219, 0.0
        %v3340 = vmax.f32 %v2224, 0.0
        %v3341 = vmax.f32 %v2227, 0.0
        %v3342 = vmax.f32 %v2232, 0.0
        %v3343 = vmax.f32 %v2235, 0.0
        %v3344 = vmax.f32 %v2240, 0.0
        %v3345 = vmax.f32 %v2243, 0.0
        %v3346 = vmax.f32 %v2248, 0.0
        %v3347 = vmax.f32 %v2251, 0.0
        %v3348 = vmax.f32 %v2256, 0.0
        %v3349 = vmax.f32 %v2259, 0.0
        %v3350 = vmax.f32 %v2264, 0.0
        %v3351 = vmax.f32 %v2267, 0.0
        %v3352 = vmax.f32 %v2272, 0.0
        %v3353 = vmax.f32 %v2275, 0.0
        %v3354 = vmax.f32 %v2280, 0.0
        %v3355 = vmax.f32 %v2283, 0.0
        %v3356 = vmax.f32 %v2288, 0.0
        %v3357 = vmax.f32 %v2291, 0.0
        %v3358 = vmax.f32 %v2296, 0.0
        %v3359 = vmax.f32 %v2299, 0.0
        %v3360 = vmax.f32 %v2304, 0.0
        %v3361 = vmax.f32 %v2307, 0.0
        %v3362 = vmax.f32 %v2312, 0.0
        %v3363 = vmax.f32 %v2315, 0.0
        %v3364 = vmax.f32 %v2320, 0.0
        %v3365 = vmax.f32 %v2323, 0.0
        %v3366 = vmax.f32 %v2328, 0.0
        %v3367 = vmax.f32 %v2331, 0.0
        %v3368 = vmax.f32 %v2336, 0.0
        %v3369 = vmax.f32 %v2339, 0.0
        %v3370 = vmax.f32 %v2344, 0.0
        %v3371 = vmax.f32 %v2347, 0.0
        %v3372 = vmax.f32 %v2352, 0.0
        %v3373 = vmax.f32 %v2355, 0.0
        %v3374 = vmax.f32 %v2360, 0.0
        %v3375 = vmax.f32 %v2363, 0.0
        %v3376 = vmax.f32 %v2368, 0.0
        %v3377 = vmax.f32 %v2371, 0.0
        %v3378 = vmax.f32 %v2376, 0.0
        %v3379 = vmax.f32 %v2379, 0.0
        %v3380 = vmax.f32 %v2384, 0.0
        %v3381 = vmax.f32 %v2387, 0.0
        %v3382 = vmax.f32 %v2392, 0.0
        %v3383 = vmax.f32 %v2395, 0.0
        %v3384 = vmax.f32 %v2400, 0.0
        %v3385 = vmax.f32 %v2403, 0.0
        %v3386 = vmax.f32 %v2408, 0.0
        %v3387 = vmax.f32 %v2411, 0.0
        %v3388 = vmax.f32 %v2416, 0.0
        %v3389 = vmax.f32 %v2419, 0.0
        %v3390 = vmax.f32 %v2424, 0.0
        %v3391 = vmax.f32 %v2427, 0.0
        %v3392 = vmax.f32 %v2432, 0.0
        %v3393 = vmax.f32 %v2435, 0.0
        %v3394 = vmax.f32 %v2440, 0.0
        %v3395 = vmax.f32 %v2443, 0.0
        %v3396 = vmax.f32 %v2448, 0.0
        %v3397 = vmax.f32 %v2451, 0.0
        %v3398 = vmax.f32 %v2456, 0.0
        %v3399 = vmax.f32 %v2459, 0.0
        %v3400 = vmax.f32 %v2464, 0.0
        %v3401 = vmax.f32 %v2467, 0.0
        %v3402 = vmax.f32 %v2472, 0.0
        %v3403 = vmax.f32 %v2475, 0.0
        %v3404 = vmax.f32 %v2480, 0.0
        %v3405 = vmax.f32 %v2483, 0.0
        %v3406 = vmax.f32 %v2488, 0.0
        %v3407 = vmax.f32 %v2491, 0.0
        %v3408 = vmax.f32 %v2496, 0.0
        %v3409 = vmax.f32 %v2499, 0.0
        %v3410 = vmax.f32 %v2504, 0.0
        %v3411 = vmax.f32 %v2507, 0.0
        %v3412 = vmax.f32 %v2512, 0.0
        %v3413 = vmax.f32 %v2515, 0.0
        %v3414 = vmax.f32 %v2520, 0.0
        %v3415 = vmax.f32 %v2523, 0.0
        %v3416 = vmax.f32 %v2528, 0.0
        %v3417 = vmax.f32 %v2531, 0.0
        %v3418 = vmax.f32 %v2536, 0.0
        %v3419 = vmax.f32 %v2539, 0.0
        %v3420 = vmax.f32 %v2544, 0.0
        %v3421 = vmax.f32 %v2547, 0.0
        %v3422 = vmax.f32 %v2552, 0.0
        %v3423 = vmax.f32 %v2555, 0.0
        %v3424 = vmax.f32 %v2560, 0.0
        %v3425 = vmax.f32 %v2563, 0.0
        %v3426 = vmax.f32 %v2568, 0.0
        %v3427 = vmax.f32 %v2571, 0.0
        %v3428 = vmax.f32 %v2576, 0.0
        %v3429 = vmax.f32 %v2579, 0.0
        %v3430 = vmax.f32 %v2584, 0.0
        %v3431 = vmax.f32 %v2587, 0.0
        %v3432 = vmax.f32 %v2592, 0.0
        %v3433 = vmax.f32 %v2595, 0.0
        %v3434 = vmax.f32 %v2600, 0.0
        %v3435 = vmax.f32 %v2603, 0.0
        %v3436 = vmax.f32 %v2608, 0.0
        %v3437 = vmax.f32 %v2611, 0.0
        %v3438 = vmax.f32 %v2616, 0.0
        %v3439 = vmax.f32 %v2619, 0.0
        %v3440 = vmax.f32 %v2624, 0.0
        %v3441 = vmax.f32 %v2627, 0.0
        %v3442 = vmax.f32 %v2632, 0.0
        %v3443 = vmax.f32 %v2635, 0.0
        %v3444 = vmax.f32 %v2640, 0.0
        %v3445 = vmax.f32 %v2643, 0.0
        %v3446 = vmax.f32 %v2648, 0.0
        %v3447 = vmax.f32 %v2651, 0.0
        %v3448 = vmax.f32 %v2656, 0.0
        %v3449 = vmax.f32 %v2659, 0.0
        %v3450 = vmax.f32 %v2664, 0.0
        %v3451 = vmax.f32 %v2667, 0.0
        %v3452 = vmax.f32 %v2672, 0.0
        %v3453 = vmax.f32 %v2675, 0.0
        %v3454 = vmax.f32 %v2680, 0.0
        %v3455 = vmax.f32 %v2683, 0.0
        %v3456 = vmax.f32 %v2688, 0.0
        %v3457 = vmax.f32 %v2691, 0.0
        %v3458 = vmax.f32 %v2696, 0.0
        %v3459 = vmax.f32 %v2699, 0.0
        %v3460 = vmax.f32 %v2704, 0.0
        %v3461 = vmax.f32 %v2707, 0.0
        %v3462 = vmax.f32 %v2712, 0.0
        %v3463 = vmax.f32 %v2715, 0.0
        %v3464 = vmax.f32 %v2720, 0.0
        %v3465 = vmax.f32 %v2723, 0.0
        %v3466 = vmax.f32 %v2728, 0.0
        %v3467 = vmax.f32 %v2731, 0.0
        %v3468 = vmax.f32 %v2736, 0.0
        %v3469 = vmax.f32 %v2739, 0.0
        %v3470 = vmax.f32 %v2744, 0.0
        %v3471 = vmax.f32 %v2747, 0.0
        %v3472 = vmax.f32 %v2752, 0.0
        %v3473 = vmax.f32 %v2755, 0.0
        %v3474 = vmax.f32 %v2760, 0.0
        %v3475 = vmax.f32 %v2763, 0.0
        %v3476 = vmax.f32 %v2768, 0.0
        %v3477 = vmax.f32 %v2771, 0.0
        %v3478 = vmax.f32 %v2776, 0.0
        %v3479 = vmax.f32 %v2779, 0.0
        %v3480 = vmax.f32 %v2784, 0.0
        %v3481 = vmax.f32 %v2787, 0.0
        %v3482 = vmax.f32 %v2792, 0.0
        %v3483 = vmax.f32 %v2795, 0.0
        %v3484 = vmax.f32 %v2800, 0.0
        %v3485 = vmax.f32 %v2803, 0.0
        %v3486 = vmax.f32 %v2808, 0.0
        %v3487 = vmax.f32 %v2811, 0.0
        %v3488 = vmax.f32 %v2816, 0.0
        %v3489 = vmax.f32 %v2819, 0.0
        %v3490 = vmax.f32 %v2824, 0.0
        %v3491 = vmax.f32 %v2827, 0.0
        %v3492 = vmax.f32 %v2832, 0.0
        %v3493 = vmax.f32 %v2835, 0.0
        %v3494 = vmax.f32 %v2840, 0.0
        %v3495 = vmax.f32 %v2843, 0.0
        %v3496 = vmax.f32 %v2848, 0.0
        %v3497 = vmax.f32 %v2851, 0.0
        %v3498 = vmax.f32 %v2856, 0.0
        %v3499 = vmax.f32 %v2859, 0.0
        %v3500 = vmax.f32 %v2864, 0.0
        %v3501 = vmax.f32 %v2867, 0.0
        %v3502 = vmax.f32 %v2872, 0.0
        %v3503 = vmax.f32 %v2875, 0.0
        %v3504 = vmax.f32 %v2880, 0.0
        %v3505 = vmax.f32 %v2883, 0.0
        %v3506 = vmax.f32 %v2888, 0.0
        %v3507 = vmax.f32 %v2891, 0.0
        %v3508 = vmax.f32 %v2896, 0.0
        %v3509 = vmax.f32 %v2899, 0.0
        %v3510 = vmax.f32 %v2904, 0.0
        %v3511 = vmax.f32 %v2907, 0.0
        %v3512 = vmax.f32 %v2912, 0.0
        %v3513 = vmax.f32 %v2915, 0.0
        %v3514 = vmax.f32 %v2920, 0.0
        %v3515 = vmax.f32 %v2923, 0.0
        %v3516 = vmax.f32 %v2928, 0.0
        %v3517 = vmax.f32 %v2931, 0.0
        %v3518 = vmax.f32 %v2936, 0.0
        %v3519 = vmax.f32 %v2939, 0.0
        %v3520 = vmax.f32 %v2944, 0.0
        %v3521 = vmax.f32 %v2947, 0.0
        %v3522 = vmax.f32 %v2952, 0.0
        %v3523 = vmax.f32 %v2955, 0.0
        %v3524 = vmax.f32 %v2960, 0.0
        %v3525 = vmax.f32 %v2963, 0.0
        %v3526 = vmax.f32 %v2968, 0.0
        %v3527 = vmax.f32 %v2971, 0.0
        %v3528 = vmax.f32 %v2976, 0.0
        %v3529 = vmax.f32 %v2979, 0.0
        %v3530 = vmax.f32 %v2984, 0.0
        %v3531 = vmax.f32 %v2987, 0.0
        %v3532 = vmax.f32 %v2992, 0.0
        %v3533 = vmax.f32 %v2995, 0.0
        %v3534 = vmax.f32 %v3000, 0.0
        %v3535 = vmax.f32 %v3003, 0.0
        %v3536 = vmax.f32 %v3008, 0.0
        %v3537 = vmax.f32 %v3011, 0.0
        %v3538 = vmax.f32 %v3016, 0.0
        %v3539 = vmax.f32 %v3019, 0.0
        %v3540 = vmax.f32 %v3024, 0.0
        %v3541 = vmax.f32 %v3027, 0.0
        %v3542 = vmax.f32 %v3032, 0.0
        %v3543 = vmax.f32 %v3035, 0.0
        %v3544 = vmax.f32 %v3040, 0.0
        %v3545 = vmax.f32 %v3043, 0.0
        %v3546 = vmax.f32 %v3048, 0.0
        %v3547 = vmax.f32 %v3051, 0.0
        %v3548 = vmax.f32 %v3056, 0.0
        %v3549 = vmax.f32 %v3059, 0.0
        %v3550 = vmax.f32 %v3064, 0.0
        %v3551 = vmax.f32 %v3067, 0.0
        %v3552 = vmax.f32 %v3072, 0.0
        %v3553 = vmax.f32 %v3075, 0.0
        %v3554 = vmax.f32 %v3080, 0.0
        %v3555 = vmax.f32 %v3083, 0.0
        %v3556 = vmax.f32 %v3088, 0.0
        %v3557 = vmax.f32 %v3091, 0.0
        %v3558 = vmax.f32 %v3096, 0.0
        %v3559 = vmax.f32 %v3099, 0.0
        %v3560 = vmax.f32 %v3104, 0.0
        %v3561 = vmax.f32 %v3107, 0.0
        %v3562 = vmax.f32 %v3112, 0.0
        %v3563 = vmax.f32 %v3115, 0.0
        %v3564 = vmax.f32 %v3120, 0.0
        %v3565 = vmax.f32 %v3123, 0.0
        %v3566 = vmax.f32 %v3128, 0.0
        %v3567 = vmax.f32 %v3131, 0.0
        %v3568 = vmax.f32 %v3136, 0.0
        %v3569 = vmax.f32 %v3139, 0.0
        %v3570 = vmax.f32 %v3144, 0.0
        %v3571 = vmax.f32 %v3147, 0.0
        %v3572 = vmax.f32 %v3152, 0.0
        %v3573 = vmax.f32 %v3155, 0.0
        %vm3574 = vcmask 523264
        %v3575 = vsel %vm3574, %v3158, -inf
        %v3576 = vsel %vm3574, %v3159, -inf
        %v3577 = vmax.f32 %v3575, %v3576
        %v3578 = vsel %vm3574, %v3160, -inf
        %v3579 = vmax.f32 %v3577, %v3578
        %v3580 = vsel %vm3574, %v3161, -inf
        %v3581 = vmax.f32 %v3579, %v3580
        %v3582 = vrot.slane %v3581, 4
        %v3583 = vmax.f32 %v3581, %v3582
        %v3584 = vrot.slane %v3583, 2
        %v3585 = vmax.f32 %v3583, %v3584
        %v3586 = vrot.slane %v3585, 1
        %v3587 = vmax.f32 %v3585, %v3586
        %v3588 = vsel %vm3574, %v3162, -inf
        %v3589 = vsel %vm3574, %v3163, -inf
        %v3590 = vmax.f32 %v3588, %v3589
        %v3591 = vsel %vm3574, %v3164, -inf
        %v3592 = vmax.f32 %v3590, %v3591
        %v3593 = vsel %vm3574, %v3165, -inf
        %v3594 = vmax.f32 %v3592, %v3593
        %v3595 = vrot.slane %v3594, 4
        %v3596 = vmax.f32 %v3594, %v3595
        %v3597 = vrot.slane %v3596, 2
        %v3598 = vmax.f32 %v3596, %v3597
        %v3599 = vrot.slane %v3598, 1
        %v3600 = vmax.f32 %v3598, %v3599
        %v3601 = vsel %vm3574, %v3166, -inf
        %v3602 = vsel %vm3574, %v3167, -inf
        %v3603 = vmax.f32 %v3601, %v3602
        %v3604 = vsel %vm3574, %v3168, -inf
        %v3605 = vmax.f32 %v3603, %v3604
        %v3606 = vsel %vm3574, %v3169, -inf
        %v3607 = vmax.f32 %v3605, %v3606
        %v3608 = vrot.slane %v3607, 4
        %v3609 = vmax.f32 %v3607, %v3608
        %v3610 = vrot.slane %v3609, 2
        %v3611 = vmax.f32 %v3609, %v3610
        %v3612 = vrot.slane %v3611, 1
        %v3613 = vmax.f32 %v3611, %v3612
        %v3614 = vsel %vm3574, %v3170, -inf
        %v3615 = vsel %vm3574, %v3171, -inf
        %v3616 = vmax.f32 %v3614, %v3615
        %v3617 = vsel %vm3574, %v3172, -inf
        %v3618 = vmax.f32 %v3616, %v3617
        %v3619 = vsel %vm3574, %v3173, -inf
        %v3620 = vmax.f32 %v3618, %v3619
        %v3621 = vrot.slane %v3620, 4
        %v3622 = vmax.f32 %v3620, %v3621
        %v3623 = vrot.slane %v3622, 2
        %v3624 = vmax.f32 %v3622, %v3623
        %v3625 = vrot.slane %v3624, 1
        %v3626 = vmax.f32 %v3624, %v3625
        %v3627 = vsel %vm3574, %v3174, -inf
        %v3628 = vsel %vm3574, %v3175, -inf
        %v3629 = vmax.f32 %v3627, %v3628
        %v3630 = vsel %vm3574, %v3176, -inf
        %v3631 = vmax.f32 %v3629, %v3630
        %v3632 = vsel %vm3574, %v3177, -inf
        %v3633 = vmax.f32 %v3631, %v3632
        %v3634 = vrot.slane %v3633, 4
        %v3635 = vmax.f32 %v3633, %v3634
        %v3636 = vrot.slane %v3635, 2
        %v3637 = vmax.f32 %v3635, %v3636
        %v3638 = vrot.slane %v3637, 1
        %v3639 = vmax.f32 %v3637, %v3638
        %v3640 = vsel %vm3574, %v3178, -inf
        %v3641 = vsel %vm3574, %v3179, -inf
        %v3642 = vmax.f32 %v3640, %v3641
        %v3643 = vsel %vm3574, %v3180, -inf
        %v3644 = vmax.f32 %v3642, %v3643
        %v3645 = vsel %vm3574, %v3181, -inf
        %v3646 = vmax.f32 %v3644, %v3645
        %v3647 = vrot.slane %v3646, 4
        %v3648 = vmax.f32 %v3646, %v3647
        %v3649 = vrot.slane %v3648, 2
        %v3650 = vmax.f32 %v3648, %v3649
        %v3651 = vrot.slane %v3650, 1
        %v3652 = vmax.f32 %v3650, %v3651
        %v3653 = vsel %vm3574, %v3182, -inf
        %v3654 = vsel %vm3574, %v3183, -inf
        %v3655 = vmax.f32 %v3653, %v3654
        %v3656 = vsel %vm3574, %v3184, -inf
        %v3657 = vmax.f32 %v3655, %v3656
        %v3658 = vsel %vm3574, %v3185, -inf
        %v3659 = vmax.f32 %v3657, %v3658
        %v3660 = vrot.slane %v3659, 4
        %v3661 = vmax.f32 %v3659, %v3660
        %v3662 = vrot.slane %v3661, 2
        %v3663 = vmax.f32 %v3661, %v3662
        %v3664 = vrot.slane %v3663, 1
        %v3665 = vmax.f32 %v3663, %v3664
        %v3666 = vsel %vm3574, %v3186, -inf
        %v3667 = vsel %vm3574, %v3187, -inf
        %v3668 = vmax.f32 %v3666, %v3667
        %v3669 = vsel %vm3574, %v3188, -inf
        %v3670 = vmax.f32 %v3668, %v3669
        %v3671 = vsel %vm3574, %v3189, -inf
        %v3672 = vmax.f32 %v3670, %v3671
        %v3673 = vrot.slane %v3672, 4
        %v3674 = vmax.f32 %v3672, %v3673
        %v3675 = vrot.slane %v3674, 2
        %v3676 = vmax.f32 %v3674, %v3675
        %v3677 = vrot.slane %v3676, 1
        %v3678 = vmax.f32 %v3676, %v3677
        %v3679 = vsel %vm3574, %v3190, -inf
        %v3680 = vsel %vm3574, %v3191, -inf
        %v3681 = vmax.f32 %v3679, %v3680
        %v3682 = vsel %vm3574, %v3192, -inf
        %v3683 = vmax.f32 %v3681, %v3682
        %v3684 = vsel %vm3574, %v3193, -inf
        %v3685 = vmax.f32 %v3683, %v3684
        %v3686 = vrot.slane %v3685, 4
        %v3687 = vmax.f32 %v3685, %v3686
        %v3688 = vrot.slane %v3687, 2
        %v3689 = vmax.f32 %v3687, %v3688
        %v3690 = vrot.slane %v3689, 1
        %v3691 = vmax.f32 %v3689, %v3690
        %v3692 = vsel %vm3574, %v3194, -inf
        %v3693 = vsel %vm3574, %v3195, -inf
        %v3694 = vmax.f32 %v3692, %v3693
        %v3695 = vsel %vm3574, %v3196, -inf
        %v3696 = vmax.f32 %v3694, %v3695
        %v3697 = vsel %vm3574, %v3197, -inf
        %v3698 = vmax.f32 %v3696, %v3697
        %v3699 = vrot.slane %v3698, 4
        %v3700 = vmax.f32 %v3698, %v3699
        %v3701 = vrot.slane %v3700, 2
        %v3702 = vmax.f32 %v3700, %v3701
        %v3703 = vrot.slane %v3702, 1
        %v3704 = vmax.f32 %v3702, %v3703
        %v3705 = vsel %vm3574, %v3198, -inf
        %v3706 = vsel %vm3574, %v3199, -inf
        %v3707 = vmax.f32 %v3705, %v3706
        %v3708 = vsel %vm3574, %v3200, -inf
        %v3709 = vmax.f32 %v3707, %v3708
        %v3710 = vsel %vm3574, %v3201, -inf
        %v3711 = vmax.f32 %v3709, %v3710
        %v3712 = vrot.slane %v3711, 4
        %v3713 = vmax.f32 %v3711, %v3712
        %v3714 = vrot.slane %v3713, 2
        %v3715 = vmax.f32 %v3713, %v3714
        %v3716 = vrot.slane %v3715, 1
        %v3717 = vmax.f32 %v3715, %v3716
        %v3718 = vsel %vm3574, %v3202, -inf
        %v3719 = vsel %vm3574, %v3203, -inf
        %v3720 = vmax.f32 %v3718, %v3719
        %v3721 = vsel %vm3574, %v3204, -inf
        %v3722 = vmax.f32 %v3720, %v3721
        %v3723 = vsel %vm3574, %v3205, -inf
        %v3724 = vmax.f32 %v3722, %v3723
        %v3725 = vrot.slane %v3724, 4
        %v3726 = vmax.f32 %v3724, %v3725
        %v3727 = vrot.slane %v3726, 2
        %v3728 = vmax.f32 %v3726, %v3727
        %v3729 = vrot.slane %v3728, 1
        %v3730 = vmax.f32 %v3728, %v3729
        %v3731 = vsel %vm3574, %v3206, -inf
        %v3732 = vsel %vm3574, %v3207, -inf
        %v3733 = vmax.f32 %v3731, %v3732
        %v3734 = vsel %vm3574, %v3208, -inf
        %v3735 = vmax.f32 %v3733, %v3734
        %v3736 = vsel %vm3574, %v3209, -inf
        %v3737 = vmax.f32 %v3735, %v3736
        %v3738 = vrot.slane %v3737, 4
        %v3739 = vmax.f32 %v3737, %v3738
        %v3740 = vrot.slane %v3739, 2
        %v3741 = vmax.f32 %v3739, %v3740
        %v3742 = vrot.slane %v3741, 1
        %v3743 = vmax.f32 %v3741, %v3742
        %v3744 = vsel %vm3574, %v3210, -inf
        %v3745 = vsel %vm3574, %v3211, -inf
        %v3746 = vmax.f32 %v3744, %v3745
        %v3747 = vsel %vm3574, %v3212, -inf
        %v3748 = vmax.f32 %v3746, %v3747
        %v3749 = vsel %vm3574, %v3213, -inf
        %v3750 = vmax.f32 %v3748, %v3749
        %v3751 = vrot.slane %v3750, 4
        %v3752 = vmax.f32 %v3750, %v3751
        %v3753 = vrot.slane %v3752, 2
        %v3754 = vmax.f32 %v3752, %v3753
        %v3755 = vrot.slane %v3754, 1
        %v3756 = vmax.f32 %v3754, %v3755
        %v3757 = vsel %vm3574, %v3214, -inf
        %v3758 = vsel %vm3574, %v3215, -inf
        %v3759 = vmax.f32 %v3757, %v3758
        %v3760 = vsel %vm3574, %v3216, -inf
        %v3761 = vmax.f32 %v3759, %v3760
        %v3762 = vsel %vm3574, %v3217, -inf
        %v3763 = vmax.f32 %v3761, %v3762
        %v3764 = vrot.slane %v3763, 4
        %v3765 = vmax.f32 %v3763, %v3764
        %v3766 = vrot.slane %v3765, 2
        %v3767 = vmax.f32 %v3765, %v3766
        %v3768 = vrot.slane %v3767, 1
        %v3769 = vmax.f32 %v3767, %v3768
        %v3770 = vsel %vm3574, %v3218, -inf
        %v3771 = vsel %vm3574, %v3219, -inf
        %v3772 = vmax.f32 %v3770, %v3771
        %v3773 = vsel %vm3574, %v3220, -inf
        %v3774 = vmax.f32 %v3772, %v3773
        %v3775 = vsel %vm3574, %v3221, -inf
        %v3776 = vmax.f32 %v3774, %v3775
        %v3777 = vrot.slane %v3776, 4
        %v3778 = vmax.f32 %v3776, %v3777
        %v3779 = vrot.slane %v3778, 2
        %v3780 = vmax.f32 %v3778, %v3779
        %v3781 = vrot.slane %v3780, 1
        %v3782 = vmax.f32 %v3780, %v3781
        %v3783 = vsel %vm3574, %v3222, -inf
        %v3784 = vsel %vm3574, %v3223, -inf
        %v3785 = vmax.f32 %v3783, %v3784
        %v3786 = vsel %vm3574, %v3224, -inf
        %v3787 = vmax.f32 %v3785, %v3786
        %v3788 = vsel %vm3574, %v3225, -inf
        %v3789 = vmax.f32 %v3787, %v3788
        %v3790 = vrot.slane %v3789, 4
        %v3791 = vmax.f32 %v3789, %v3790
        %v3792 = vrot.slane %v3791, 2
        %v3793 = vmax.f32 %v3791, %v3792
        %v3794 = vrot.slane %v3793, 1
        %v3795 = vmax.f32 %v3793, %v3794
        %v3796 = vsel %vm3574, %v3226, -inf
        %v3797 = vsel %vm3574, %v3227, -inf
        %v3798 = vmax.f32 %v3796, %v3797
        %v3799 = vsel %vm3574, %v3228, -inf
        %v3800 = vmax.f32 %v3798, %v3799
        %v3801 = vsel %vm3574, %v3229, -inf
        %v3802 = vmax.f32 %v3800, %v3801
        %v3803 = vrot.slane %v3802, 4
        %v3804 = vmax.f32 %v3802, %v3803
        %v3805 = vrot.slane %v3804, 2
        %v3806 = vmax.f32 %v3804, %v3805
        %v3807 = vrot.slane %v3806, 1
        %v3808 = vmax.f32 %v3806, %v3807
        %v3809 = vsel %vm3574, %v3230, -inf
        %v3810 = vsel %vm3574, %v3231, -inf
        %v3811 = vmax.f32 %v3809, %v3810
        %v3812 = vsel %vm3574, %v3232, -inf
        %v3813 = vmax.f32 %v3811, %v3812
        %v3814 = vsel %vm3574, %v3233, -inf
        %v3815 = vmax.f32 %v3813, %v3814
        %v3816 = vrot.slane %v3815, 4
        %v3817 = vmax.f32 %v3815, %v3816
        %v3818 = vrot.slane %v3817, 2
        %v3819 = vmax.f32 %v3817, %v3818
        %v3820 = vrot.slane %v3819, 1
        %v3821 = vmax.f32 %v3819, %v3820
        %v3822 = vsel %vm3574, %v3234, -inf
        %v3823 = vsel %vm3574, %v3235, -inf
        %v3824 = vmax.f32 %v3822, %v3823
        %v3825 = vsel %vm3574, %v3236, -inf
        %v3826 = vmax.f32 %v3824, %v3825
        %v3827 = vsel %vm3574, %v3237, -inf
        %v3828 = vmax.f32 %v3826, %v3827
        %v3829 = vrot.slane %v3828, 4
        %v3830 = vmax.f32 %v3828, %v3829
        %v3831 = vrot.slane %v3830, 2
        %v3832 = vmax.f32 %v3830, %v3831
        %v3833 = vrot.slane %v3832, 1
        %v3834 = vmax.f32 %v3832, %v3833
        %v3835 = vsel %vm3574, %v3238, -inf
        %v3836 = vsel %vm3574, %v3239, -inf
        %v3837 = vmax.f32 %v3835, %v3836
        %v3838 = vsel %vm3574, %v3240, -inf
        %v3839 = vmax.f32 %v3837, %v3838
        %v3840 = vsel %vm3574, %v3241, -inf
        %v3841 = vmax.f32 %v3839, %v3840
        %v3842 = vrot.slane %v3841, 4
        %v3843 = vmax.f32 %v3841, %v3842
        %v3844 = vrot.slane %v3843, 2
        %v3845 = vmax.f32 %v3843, %v3844
        %v3846 = vrot.slane %v3845, 1
        %v3847 = vmax.f32 %v3845, %v3846
        %v3848 = vsel %vm3574, %v3242, -inf
        %v3849 = vsel %vm3574, %v3243, -inf
        %v3850 = vmax.f32 %v3848, %v3849
        %v3851 = vsel %vm3574, %v3244, -inf
        %v3852 = vmax.f32 %v3850, %v3851
        %v3853 = vsel %vm3574, %v3245, -inf
        %v3854 = vmax.f32 %v3852, %v3853
        %v3855 = vrot.slane %v3854, 4
        %v3856 = vmax.f32 %v3854, %v3855
        %v3857 = vrot.slane %v3856, 2
        %v3858 = vmax.f32 %v3856, %v3857
        %v3859 = vrot.slane %v3858, 1
        %v3860 = vmax.f32 %v3858, %v3859
        %v3861 = vsel %vm3574, %v3246, -inf
        %v3862 = vsel %vm3574, %v3247, -inf
        %v3863 = vmax.f32 %v3861, %v3862
        %v3864 = vsel %vm3574, %v3248, -inf
        %v3865 = vmax.f32 %v3863, %v3864
        %v3866 = vsel %vm3574, %v3249, -inf
        %v3867 = vmax.f32 %v3865, %v3866
        %v3868 = vrot.slane %v3867, 4
        %v3869 = vmax.f32 %v3867, %v3868
        %v3870 = vrot.slane %v3869, 2
        %v3871 = vmax.f32 %v3869, %v3870
        %v3872 = vrot.slane %v3871, 1
        %v3873 = vmax.f32 %v3871, %v3872
        %v3874 = vsel %vm3574, %v3250, -inf
        %v3875 = vsel %vm3574, %v3251, -inf
        %v3876 = vmax.f32 %v3874, %v3875
        %v3877 = vsel %vm3574, %v3252, -inf
        %v3878 = vmax.f32 %v3876, %v3877
        %v3879 = vsel %vm3574, %v3253, -inf
        %v3880 = vmax.f32 %v3878, %v3879
        %v3881 = vrot.slane %v3880, 4
        %v3882 = vmax.f32 %v3880, %v3881
        %v3883 = vrot.slane %v3882, 2
        %v3884 = vmax.f32 %v3882, %v3883
        %v3885 = vrot.slane %v3884, 1
        %v3886 = vmax.f32 %v3884, %v3885
        %v3887 = vsel %vm3574, %v3254, -inf
        %v3888 = vsel %vm3574, %v3255, -inf
        %v3889 = vmax.f32 %v3887, %v3888
        %v3890 = vsel %vm3574, %v3256, -inf
        %v3891 = vmax.f32 %v3889, %v3890
        %v3892 = vsel %vm3574, %v3257, -inf
        %v3893 = vmax.f32 %v3891, %v3892
        %v3894 = vrot.slane %v3893, 4
        %v3895 = vmax.f32 %v3893, %v3894
        %v3896 = vrot.slane %v3895, 2
        %v3897 = vmax.f32 %v3895, %v3896
        %v3898 = vrot.slane %v3897, 1
        %v3899 = vmax.f32 %v3897, %v3898
        %v3900 = vsel %vm3574, %v3258, -inf
        %v3901 = vsel %vm3574, %v3259, -inf
        %v3902 = vmax.f32 %v3900, %v3901
        %v3903 = vsel %vm3574, %v3260, -inf
        %v3904 = vmax.f32 %v3902, %v3903
        %v3905 = vsel %vm3574, %v3261, -inf
        %v3906 = vmax.f32 %v3904, %v3905
        %v3907 = vrot.slane %v3906, 4
        %v3908 = vmax.f32 %v3906, %v3907
        %v3909 = vrot.slane %v3908, 2
        %v3910 = vmax.f32 %v3908, %v3909
        %v3911 = vrot.slane %v3910, 1
        %v3912 = vmax.f32 %v3910, %v3911
        %v3913 = vsel %vm3574, %v3262, -inf
        %v3914 = vsel %vm3574, %v3263, -inf
        %v3915 = vmax.f32 %v3913, %v3914
        %v3916 = vsel %vm3574, %v3264, -inf
        %v3917 = vmax.f32 %v3915, %v3916
        %v3918 = vsel %vm3574, %v3265, -inf
        %v3919 = vmax.f32 %v3917, %v3918
        %v3920 = vrot.slane %v3919, 4
        %v3921 = vmax.f32 %v3919, %v3920
        %v3922 = vrot.slane %v3921, 2
        %v3923 = vmax.f32 %v3921, %v3922
        %v3924 = vrot.slane %v3923, 1
        %v3925 = vmax.f32 %v3923, %v3924
        %v3926 = vsel %vm3574, %v3266, -inf
        %v3927 = vsel %vm3574, %v3267, -inf
        %v3928 = vmax.f32 %v3926, %v3927
        %v3929 = vsel %vm3574, %v3268, -inf
        %v3930 = vmax.f32 %v3928, %v3929
        %v3931 = vsel %vm3574, %v3269, -inf
        %v3932 = vmax.f32 %v3930, %v3931
        %v3933 = vrot.slane %v3932, 4
        %v3934 = vmax.f32 %v3932, %v3933
        %v3935 = vrot.slane %v3934, 2
        %v3936 = vmax.f32 %v3934, %v3935
        %v3937 = vrot.slane %v3936, 1
        %v3938 = vmax.f32 %v3936, %v3937
        %v3939 = vsel %vm3574, %v3270, -inf
        %v3940 = vsel %vm3574, %v3271, -inf
        %v3941 = vmax.f32 %v3939, %v3940
        %v3942 = vsel %vm3574, %v3272, -inf
        %v3943 = vmax.f32 %v3941, %v3942
        %v3944 = vsel %vm3574, %v3273, -inf
        %v3945 = vmax.f32 %v3943, %v3944
        %v3946 = vrot.slane %v3945, 4
        %v3947 = vmax.f32 %v3945, %v3946
        %v3948 = vrot.slane %v3947, 2
        %v3949 = vmax.f32 %v3947, %v3948
        %v3950 = vrot.slane %v3949, 1
        %v3951 = vmax.f32 %v3949, %v3950
        %v3952 = vsel %vm3574, %v3274, -inf
        %v3953 = vsel %vm3574, %v3275, -inf
        %v3954 = vmax.f32 %v3952, %v3953
        %v3955 = vsel %vm3574, %v3276, -inf
        %v3956 = vmax.f32 %v3954, %v3955
        %v3957 = vsel %vm3574, %v3277, -inf
        %v3958 = vmax.f32 %v3956, %v3957
        %v3959 = vrot.slane %v3958, 4
        %v3960 = vmax.f32 %v3958, %v3959
        %v3961 = vrot.slane %v3960, 2
        %v3962 = vmax.f32 %v3960, %v3961
        %v3963 = vrot.slane %v3962, 1
        %v3964 = vmax.f32 %v3962, %v3963
        %v3965 = vsel %vm3574, %v3278, -inf
        %v3966 = vsel %vm3574, %v3279, -inf
        %v3967 = vmax.f32 %v3965, %v3966
        %v3968 = vsel %vm3574, %v3280, -inf
        %v3969 = vmax.f32 %v3967, %v3968
        %v3970 = vsel %vm3574, %v3281, -inf
        %v3971 = vmax.f32 %v3969, %v3970
        %v3972 = vrot.slane %v3971, 4
        %v3973 = vmax.f32 %v3971, %v3972
        %v3974 = vrot.slane %v3973, 2
        %v3975 = vmax.f32 %v3973, %v3974
        %v3976 = vrot.slane %v3975, 1
        %v3977 = vmax.f32 %v3975, %v3976
        %v3978 = vsel %vm3574, %v3282, -inf
        %v3979 = vsel %vm3574, %v3283, -inf
        %v3980 = vmax.f32 %v3978, %v3979
        %v3981 = vsel %vm3574, %v3284, -inf
        %v3982 = vmax.f32 %v3980, %v3981
        %v3983 = vsel %vm3574, %v3285, -inf
        %v3984 = vmax.f32 %v3982, %v3983
        %v3985 = vrot.slane %v3984, 4
        %v3986 = vmax.f32 %v3984, %v3985
        %v3987 = vrot.slane %v3986, 2
        %v3988 = vmax.f32 %v3986, %v3987
        %v3989 = vrot.slane %v3988, 1
        %v3990 = vmax.f32 %v3988, %v3989
        %v3991 = vsel %vm3574, %v3286, -inf
        %v3992 = vsel %vm3574, %v3287, -inf
        %v3993 = vmax.f32 %v3991, %v3992
        %v3994 = vsel %vm3574, %v3288, -inf
        %v3995 = vmax.f32 %v3993, %v3994
        %v3996 = vsel %vm3574, %v3289, -inf
        %v3997 = vmax.f32 %v3995, %v3996
        %v3998 = vrot.slane %v3997, 4
        %v3999 = vmax.f32 %v3997, %v3998
        %v4000 = vrot.slane %v3999, 2
        %v4001 = vmax.f32 %v3999, %v4000
        %v4002 = vrot.slane %v4001, 1
        %v4003 = vmax.f32 %v4001, %v4002
        %v4004 = vsel %vm3574, %v3290, -inf
        %v4005 = vsel %vm3574, %v3291, -inf
        %v4006 = vmax.f32 %v4004, %v4005
        %v4007 = vsel %vm3574, %v3292, -inf
        %v4008 = vmax.f32 %v4006, %v4007
        %v4009 = vsel %vm3574, %v3293, -inf
        %v4010 = vmax.f32 %v4008, %v4009
        %v4011 = vrot.slane %v4010, 4
        %v4012 = vmax.f32 %v4010, %v4011
        %v4013 = vrot.slane %v4012, 2
        %v4014 = vmax.f32 %v4012, %v4013
        %v4015 = vrot.slane %v4014, 1
        %v4016 = vmax.f32 %v4014, %v4015
        %v4017 = vsel %vm3574, %v3294, -inf
        %v4018 = vsel %vm3574, %v3295, -inf
        %v4019 = vmax.f32 %v4017, %v4018
        %v4020 = vsel %vm3574, %v3296, -inf
        %v4021 = vmax.f32 %v4019, %v4020
        %v4022 = vsel %vm3574, %v3297, -inf
        %v4023 = vmax.f32 %v4021, %v4022
        %v4024 = vrot.slane %v4023, 4
        %v4025 = vmax.f32 %v4023, %v4024
        %v4026 = vrot.slane %v4025, 2
        %v4027 = vmax.f32 %v4025, %v4026
        %v4028 = vrot.slane %v4027, 1
        %v4029 = vmax.f32 %v4027, %v4028
        %v4030 = vsel %vm3574, %v3298, -inf
        %v4031 = vsel %vm3574, %v3299, -inf
        %v4032 = vmax.f32 %v4030, %v4031
        %v4033 = vsel %vm3574, %v3300, -inf
        %v4034 = vmax.f32 %v4032, %v4033
        %v4035 = vsel %vm3574, %v3301, -inf
        %v4036 = vmax.f32 %v4034, %v4035
        %v4037 = vrot.slane %v4036, 4
        %v4038 = vmax.f32 %v4036, %v4037
        %v4039 = vrot.slane %v4038, 2
        %v4040 = vmax.f32 %v4038, %v4039
        %v4041 = vrot.slane %v4040, 1
        %v4042 = vmax.f32 %v4040, %v4041
        %v4043 = vsel %vm3574, %v3302, -inf
        %v4044 = vsel %vm3574, %v3303, -inf
        %v4045 = vmax.f32 %v4043, %v4044
        %v4046 = vsel %vm3574, %v3304, -inf
        %v4047 = vmax.f32 %v4045, %v4046
        %v4048 = vsel %vm3574, %v3305, -inf
        %v4049 = vmax.f32 %v4047, %v4048
        %v4050 = vrot.slane %v4049, 4
        %v4051 = vmax.f32 %v4049, %v4050
        %v4052 = vrot.slane %v4051, 2
        %v4053 = vmax.f32 %v4051, %v4052
        %v4054 = vrot.slane %v4053, 1
        %v4055 = vmax.f32 %v4053, %v4054
        %v4056 = vsel %vm3574, %v3306, -inf
        %v4057 = vsel %vm3574, %v3307, -inf
        %v4058 = vmax.f32 %v4056, %v4057
        %v4059 = vsel %vm3574, %v3308, -inf
        %v4060 = vmax.f32 %v4058, %v4059
        %v4061 = vsel %vm3574, %v3309, -inf
        %v4062 = vmax.f32 %v4060, %v4061
        %v4063 = vrot.slane %v4062, 4
        %v4064 = vmax.f32 %v4062, %v4063
        %v4065 = vrot.slane %v4064, 2
        %v4066 = vmax.f32 %v4064, %v4065
        %v4067 = vrot.slane %v4066, 1
        %v4068 = vmax.f32 %v4066, %v4067
        %v4069 = vsel %vm3574, %v3310, -inf
        %v4070 = vsel %vm3574, %v3311, -inf
        %v4071 = vmax.f32 %v4069, %v4070
        %v4072 = vsel %vm3574, %v3312, -inf
        %v4073 = vmax.f32 %v4071, %v4072
        %v4074 = vsel %vm3574, %v3313, -inf
        %v4075 = vmax.f32 %v4073, %v4074
        %v4076 = vrot.slane %v4075, 4
        %v4077 = vmax.f32 %v4075, %v4076
        %v4078 = vrot.slane %v4077, 2
        %v4079 = vmax.f32 %v4077, %v4078
        %v4080 = vrot.slane %v4079, 1
        %v4081 = vmax.f32 %v4079, %v4080
        %v4082 = vsel %vm3574, %v3314, -inf
        %v4083 = vsel %vm3574, %v3315, -inf
        %v4084 = vmax.f32 %v4082, %v4083
        %v4085 = vsel %vm3574, %v3316, -inf
        %v4086 = vmax.f32 %v4084, %v4085
        %v4087 = vsel %vm3574, %v3317, -inf
        %v4088 = vmax.f32 %v4086, %v4087
        %v4089 = vrot.slane %v4088, 4
        %v4090 = vmax.f32 %v4088, %v4089
        %v4091 = vrot.slane %v4090, 2
        %v4092 = vmax.f32 %v4090, %v4091
        %v4093 = vrot.slane %v4092, 1
        %v4094 = vmax.f32 %v4092, %v4093
        %v4095 = vsel %vm3574, %v3318, -inf
        %v4096 = vsel %vm3574, %v3319, -inf
        %v4097 = vmax.f32 %v4095, %v4096
        %v4098 = vsel %vm3574, %v3320, -inf
        %v4099 = vmax.f32 %v4097, %v4098
        %v4100 = vsel %vm3574, %v3321, -inf
        %v4101 = vmax.f32 %v4099, %v4100
        %v4102 = vrot.slane %v4101, 4
        %v4103 = vmax.f32 %v4101, %v4102
        %v4104 = vrot.slane %v4103, 2
        %v4105 = vmax.f32 %v4103, %v4104
        %v4106 = vrot.slane %v4105, 1
        %v4107 = vmax.f32 %v4105, %v4106
        %v4108 = vsel %vm3574, %v3322, -inf
        %v4109 = vsel %vm3574, %v3323, -inf
        %v4110 = vmax.f32 %v4108, %v4109
        %v4111 = vsel %vm3574, %v3324, -inf
        %v4112 = vmax.f32 %v4110, %v4111
        %v4113 = vsel %vm3574, %v3325, -inf
        %v4114 = vmax.f32 %v4112, %v4113
        %v4115 = vrot.slane %v4114, 4
        %v4116 = vmax.f32 %v4114, %v4115
        %v4117 = vrot.slane %v4116, 2
        %v4118 = vmax.f32 %v4116, %v4117
        %v4119 = vrot.slane %v4118, 1
        %v4120 = vmax.f32 %v4118, %v4119
        %v4121 = vsel %vm3574, %v3326, -inf
        %v4122 = vsel %vm3574, %v3327, -inf
        %v4123 = vmax.f32 %v4121, %v4122
        %v4124 = vsel %vm3574, %v3328, -inf
        %v4125 = vmax.f32 %v4123, %v4124
        %v4126 = vsel %vm3574, %v3329, -inf
        %v4127 = vmax.f32 %v4125, %v4126
        %v4128 = vrot.slane %v4127, 4
        %v4129 = vmax.f32 %v4127, %v4128
        %v4130 = vrot.slane %v4129, 2
        %v4131 = vmax.f32 %v4129, %v4130
        %v4132 = vrot.slane %v4131, 1
        %v4133 = vmax.f32 %v4131, %v4132
        %v4134 = vsel %vm3574, %v3330, -inf
        %v4135 = vsel %vm3574, %v3331, -inf
        %v4136 = vmax.f32 %v4134, %v4135
        %v4137 = vsel %vm3574, %v3332, -inf
        %v4138 = vmax.f32 %v4136, %v4137
        %v4139 = vsel %vm3574, %v3333, -inf
        %v4140 = vmax.f32 %v4138, %v4139
        %v4141 = vrot.slane %v4140, 4
        %v4142 = vmax.f32 %v4140, %v4141
        %v4143 = vrot.slane %v4142, 2
        %v4144 = vmax.f32 %v4142, %v4143
        %v4145 = vrot.slane %v4144, 1
        %v4146 = vmax.f32 %v4144, %v4145
        %v4147 = vsel %vm3574, %v3334, -inf
        %v4148 = vsel %vm3574, %v3335, -inf
        %v4149 = vmax.f32 %v4147, %v4148
        %v4150 = vsel %vm3574, %v3336, -inf
        %v4151 = vmax.f32 %v4149, %v4150
        %v4152 = vsel %vm3574, %v3337, -inf
        %v4153 = vmax.f32 %v4151, %v4152
        %v4154 = vrot.slane %v4153, 4
        %v4155 = vmax.f32 %v4153, %v4154
        %v4156 = vrot.slane %v4155, 2
        %v4157 = vmax.f32 %v4155, %v4156
        %v4158 = vrot.slane %v4157, 1
        %v4159 = vmax.f32 %v4157, %v4158
        %v4160 = vsel %vm3574, %v3338, -inf
        %v4161 = vsel %vm3574, %v3339, -inf
        %v4162 = vmax.f32 %v4160, %v4161
        %v4163 = vsel %vm3574, %v3340, -inf
        %v4164 = vmax.f32 %v4162, %v4163
        %v4165 = vsel %vm3574, %v3341, -inf
        %v4166 = vmax.f32 %v4164, %v4165
        %v4167 = vrot.slane %v4166, 4
        %v4168 = vmax.f32 %v4166, %v4167
        %v4169 = vrot.slane %v4168, 2
        %v4170 = vmax.f32 %v4168, %v4169
        %v4171 = vrot.slane %v4170, 1
        %v4172 = vmax.f32 %v4170, %v4171
        %v4173 = vsel %vm3574, %v3342, -inf
        %v4174 = vsel %vm3574, %v3343, -inf
        %v4175 = vmax.f32 %v4173, %v4174
        %v4176 = vsel %vm3574, %v3344, -inf
        %v4177 = vmax.f32 %v4175, %v4176
        %v4178 = vsel %vm3574, %v3345, -inf
        %v4179 = vmax.f32 %v4177, %v4178
        %v4180 = vrot.slane %v4179, 4
        %v4181 = vmax.f32 %v4179, %v4180
        %v4182 = vrot.slane %v4181, 2
        %v4183 = vmax.f32 %v4181, %v4182
        %v4184 = vrot.slane %v4183, 1
        %v4185 = vmax.f32 %v4183, %v4184
        %v4186 = vsel %vm3574, %v3346, -inf
        %v4187 = vsel %vm3574, %v3347, -inf
        %v4188 = vmax.f32 %v4186, %v4187
        %v4189 = vsel %vm3574, %v3348, -inf
        %v4190 = vmax.f32 %v4188, %v4189
        %v4191 = vsel %vm3574, %v3349, -inf
        %v4192 = vmax.f32 %v4190, %v4191
        %v4193 = vrot.slane %v4192, 4
        %v4194 = vmax.f32 %v4192, %v4193
        %v4195 = vrot.slane %v4194, 2
        %v4196 = vmax.f32 %v4194, %v4195
        %v4197 = vrot.slane %v4196, 1
        %v4198 = vmax.f32 %v4196, %v4197
        %v4199 = vsel %vm3574, %v3350, -inf
        %v4200 = vsel %vm3574, %v3351, -inf
        %v4201 = vmax.f32 %v4199, %v4200
        %v4202 = vsel %vm3574, %v3352, -inf
        %v4203 = vmax.f32 %v4201, %v4202
        %v4204 = vsel %vm3574, %v3353, -inf
        %v4205 = vmax.f32 %v4203, %v4204
        %v4206 = vrot.slane %v4205, 4
        %v4207 = vmax.f32 %v4205, %v4206
        %v4208 = vrot.slane %v4207, 2
        %v4209 = vmax.f32 %v4207, %v4208
        %v4210 = vrot.slane %v4209, 1
        %v4211 = vmax.f32 %v4209, %v4210
        %v4212 = vsel %vm3574, %v3354, -inf
        %v4213 = vsel %vm3574, %v3355, -inf
        %v4214 = vmax.f32 %v4212, %v4213
        %v4215 = vsel %vm3574, %v3356, -inf
        %v4216 = vmax.f32 %v4214, %v4215
        %v4217 = vsel %vm3574, %v3357, -inf
        %v4218 = vmax.f32 %v4216, %v4217
        %v4219 = vrot.slane %v4218, 4
        %v4220 = vmax.f32 %v4218, %v4219
        %v4221 = vrot.slane %v4220, 2
        %v4222 = vmax.f32 %v4220, %v4221
        %v4223 = vrot.slane %v4222, 1
        %v4224 = vmax.f32 %v4222, %v4223
        %v4225 = vsel %vm3574, %v3358, -inf
        %v4226 = vsel %vm3574, %v3359, -inf
        %v4227 = vmax.f32 %v4225, %v4226
        %v4228 = vsel %vm3574, %v3360, -inf
        %v4229 = vmax.f32 %v4227, %v4228
        %v4230 = vsel %vm3574, %v3361, -inf
        %v4231 = vmax.f32 %v4229, %v4230
        %v4232 = vrot.slane %v4231, 4
        %v4233 = vmax.f32 %v4231, %v4232
        %v4234 = vrot.slane %v4233, 2
        %v4235 = vmax.f32 %v4233, %v4234
        %v4236 = vrot.slane %v4235, 1
        %v4237 = vmax.f32 %v4235, %v4236
        %v4238 = vsel %vm3574, %v3362, -inf
        %v4239 = vsel %vm3574, %v3363, -inf
        %v4240 = vmax.f32 %v4238, %v4239
        %v4241 = vsel %vm3574, %v3364, -inf
        %v4242 = vmax.f32 %v4240, %v4241
        %v4243 = vsel %vm3574, %v3365, -inf
        %v4244 = vmax.f32 %v4242, %v4243
        %v4245 = vrot.slane %v4244, 4
        %v4246 = vmax.f32 %v4244, %v4245
        %v4247 = vrot.slane %v4246, 2
        %v4248 = vmax.f32 %v4246, %v4247
        %v4249 = vrot.slane %v4248, 1
        %v4250 = vmax.f32 %v4248, %v4249
        %v4251 = vsel %vm3574, %v3366, -inf
        %v4252 = vsel %vm3574, %v3367, -inf
        %v4253 = vmax.f32 %v4251, %v4252
        %v4254 = vsel %vm3574, %v3368, -inf
        %v4255 = vmax.f32 %v4253, %v4254
        %v4256 = vsel %vm3574, %v3369, -inf
        %v4257 = vmax.f32 %v4255, %v4256
        %v4258 = vrot.slane %v4257, 4
        %v4259 = vmax.f32 %v4257, %v4258
        %v4260 = vrot.slane %v4259, 2
        %v4261 = vmax.f32 %v4259, %v4260
        %v4262 = vrot.slane %v4261, 1
        %v4263 = vmax.f32 %v4261, %v4262
        %v4264 = vsel %vm3574, %v3370, -inf
        %v4265 = vsel %vm3574, %v3371, -inf
        %v4266 = vmax.f32 %v4264, %v4265
        %v4267 = vsel %vm3574, %v3372, -inf
        %v4268 = vmax.f32 %v4266, %v4267
        %v4269 = vsel %vm3574, %v3373, -inf
        %v4270 = vmax.f32 %v4268, %v4269
        %v4271 = vrot.slane %v4270, 4
        %v4272 = vmax.f32 %v4270, %v4271
        %v4273 = vrot.slane %v4272, 2
        %v4274 = vmax.f32 %v4272, %v4273
        %v4275 = vrot.slane %v4274, 1
        %v4276 = vmax.f32 %v4274, %v4275
        %v4277 = vsel %vm3574, %v3374, -inf
        %v4278 = vsel %vm3574, %v3375, -inf
        %v4279 = vmax.f32 %v4277, %v4278
        %v4280 = vsel %vm3574, %v3376, -inf
        %v4281 = vmax.f32 %v4279, %v4280
        %v4282 = vsel %vm3574, %v3377, -inf
        %v4283 = vmax.f32 %v4281, %v4282
        %v4284 = vrot.slane %v4283, 4
        %v4285 = vmax.f32 %v4283, %v4284
        %v4286 = vrot.slane %v4285, 2
        %v4287 = vmax.f32 %v4285, %v4286
        %v4288 = vrot.slane %v4287, 1
        %v4289 = vmax.f32 %v4287, %v4288
        %v4290 = vsel %vm3574, %v3378, -inf
        %v4291 = vsel %vm3574, %v3379, -inf
        %v4292 = vmax.f32 %v4290, %v4291
        %v4293 = vsel %vm3574, %v3380, -inf
        %v4294 = vmax.f32 %v4292, %v4293
        %v4295 = vsel %vm3574, %v3381, -inf
        %v4296 = vmax.f32 %v4294, %v4295
        %v4297 = vrot.slane %v4296, 4
        %v4298 = vmax.f32 %v4296, %v4297
        %v4299 = vrot.slane %v4298, 2
        %v4300 = vmax.f32 %v4298, %v4299
        %v4301 = vrot.slane %v4300, 1
        %v4302 = vmax.f32 %v4300, %v4301
        %v4303 = vsel %vm3574, %v3382, -inf
        %v4304 = vsel %vm3574, %v3383, -inf
        %v4305 = vmax.f32 %v4303, %v4304
        %v4306 = vsel %vm3574, %v3384, -inf
        %v4307 = vmax.f32 %v4305, %v4306
        %v4308 = vsel %vm3574, %v3385, -inf
        %v4309 = vmax.f32 %v4307, %v4308
        %v4310 = vrot.slane %v4309, 4
        %v4311 = vmax.f32 %v4309, %v4310
        %v4312 = vrot.slane %v4311, 2
        %v4313 = vmax.f32 %v4311, %v4312
        %v4314 = vrot.slane %v4313, 1
        %v4315 = vmax.f32 %v4313, %v4314
        %v4316 = vsel %vm3574, %v3386, -inf
        %v4317 = vsel %vm3574, %v3387, -inf
        %v4318 = vmax.f32 %v4316, %v4317
        %v4319 = vsel %vm3574, %v3388, -inf
        %v4320 = vmax.f32 %v4318, %v4319
        %v4321 = vsel %vm3574, %v3389, -inf
        %v4322 = vmax.f32 %v4320, %v4321
        %v4323 = vrot.slane %v4322, 4
        %v4324 = vmax.f32 %v4322, %v4323
        %v4325 = vrot.slane %v4324, 2
        %v4326 = vmax.f32 %v4324, %v4325
        %v4327 = vrot.slane %v4326, 1
        %v4328 = vmax.f32 %v4326, %v4327
        %v4329 = vsel %vm3574, %v3390, -inf
        %v4330 = vsel %vm3574, %v3391, -inf
        %v4331 = vmax.f32 %v4329, %v4330
        %v4332 = vsel %vm3574, %v3392, -inf
        %v4333 = vmax.f32 %v4331, %v4332
        %v4334 = vsel %vm3574, %v3393, -inf
        %v4335 = vmax.f32 %v4333, %v4334
        %v4336 = vrot.slane %v4335, 4
        %v4337 = vmax.f32 %v4335, %v4336
        %v4338 = vrot.slane %v4337, 2
        %v4339 = vmax.f32 %v4337, %v4338
        %v4340 = vrot.slane %v4339, 1
        %v4341 = vmax.f32 %v4339, %v4340
        %v4342 = vsel %vm3574, %v3394, -inf
        %v4343 = vsel %vm3574, %v3395, -inf
        %v4344 = vmax.f32 %v4342, %v4343
        %v4345 = vsel %vm3574, %v3396, -inf
        %v4346 = vmax.f32 %v4344, %v4345
        %v4347 = vsel %vm3574, %v3397, -inf
        %v4348 = vmax.f32 %v4346, %v4347
        %v4349 = vrot.slane %v4348, 4
        %v4350 = vmax.f32 %v4348, %v4349
        %v4351 = vrot.slane %v4350, 2
        %v4352 = vmax.f32 %v4350, %v4351
        %v4353 = vrot.slane %v4352, 1
        %v4354 = vmax.f32 %v4352, %v4353
        %v4355 = vsel %vm3574, %v3398, -inf
        %v4356 = vsel %vm3574, %v3399, -inf
        %v4357 = vmax.f32 %v4355, %v4356
        %v4358 = vsel %vm3574, %v3400, -inf
        %v4359 = vmax.f32 %v4357, %v4358
        %v4360 = vsel %vm3574, %v3401, -inf
        %v4361 = vmax.f32 %v4359, %v4360
        %v4362 = vrot.slane %v4361, 4
        %v4363 = vmax.f32 %v4361, %v4362
        %v4364 = vrot.slane %v4363, 2
        %v4365 = vmax.f32 %v4363, %v4364
        %v4366 = vrot.slane %v4365, 1
        %v4367 = vmax.f32 %v4365, %v4366
        %v4368 = vsel %vm3574, %v3402, -inf
        %v4369 = vsel %vm3574, %v3403, -inf
        %v4370 = vmax.f32 %v4368, %v4369
        %v4371 = vsel %vm3574, %v3404, -inf
        %v4372 = vmax.f32 %v4370, %v4371
        %v4373 = vsel %vm3574, %v3405, -inf
        %v4374 = vmax.f32 %v4372, %v4373
        %v4375 = vrot.slane %v4374, 4
        %v4376 = vmax.f32 %v4374, %v4375
        %v4377 = vrot.slane %v4376, 2
        %v4378 = vmax.f32 %v4376, %v4377
        %v4379 = vrot.slane %v4378, 1
        %v4380 = vmax.f32 %v4378, %v4379
        %v4381 = vsel %vm3574, %v3406, -inf
        %v4382 = vsel %vm3574, %v3407, -inf
        %v4383 = vmax.f32 %v4381, %v4382
        %v4384 = vsel %vm3574, %v3408, -inf
        %v4385 = vmax.f32 %v4383, %v4384
        %v4386 = vsel %vm3574, %v3409, -inf
        %v4387 = vmax.f32 %v4385, %v4386
        %v4388 = vrot.slane %v4387, 4
        %v4389 = vmax.f32 %v4387, %v4388
        %v4390 = vrot.slane %v4389, 2
        %v4391 = vmax.f32 %v4389, %v4390
        %v4392 = vrot.slane %v4391, 1
        %v4393 = vmax.f32 %v4391, %v4392
        %v4394 = vsel %vm3574, %v3410, -inf
        %v4395 = vsel %vm3574, %v3411, -inf
        %v4396 = vmax.f32 %v4394, %v4395
        %v4397 = vsel %vm3574, %v3412, -inf
        %v4398 = vmax.f32 %v4396, %v4397
        %v4399 = vsel %vm3574, %v3413, -inf
        %v4400 = vmax.f32 %v4398, %v4399
        %v4401 = vrot.slane %v4400, 4
        %v4402 = vmax.f32 %v4400, %v4401
        %v4403 = vrot.slane %v4402, 2
        %v4404 = vmax.f32 %v4402, %v4403
        %v4405 = vrot.slane %v4404, 1
        %v4406 = vmax.f32 %v4404, %v4405
        %v4407 = vsel %vm3574, %v3414, -inf
        %v4408 = vsel %vm3574, %v3415, -inf
        %v4409 = vmax.f32 %v4407, %v4408
        %v4410 = vsel %vm3574, %v3416, -inf
        %v4411 = vmax.f32 %v4409, %v4410
        %v4412 = vsel %vm3574, %v3417, -inf
        %v4413 = vmax.f32 %v4411, %v4412
        %v4414 = vrot.slane %v4413, 4
        %v4415 = vmax.f32 %v4413, %v4414
        %v4416 = vrot.slane %v4415, 2
        %v4417 = vmax.f32 %v4415, %v4416
        %v4418 = vrot.slane %v4417, 1
        %v4419 = vmax.f32 %v4417, %v4418
        %v4420 = vsel %vm3574, %v3418, -inf
        %v4421 = vsel %vm3574, %v3419, -inf
        %v4422 = vmax.f32 %v4420, %v4421
        %v4423 = vsel %vm3574, %v3420, -inf
        %v4424 = vmax.f32 %v4422, %v4423
        %v4425 = vsel %vm3574, %v3421, -inf
        %v4426 = vmax.f32 %v4424, %v4425
        %v4427 = vrot.slane %v4426, 4
        %v4428 = vmax.f32 %v4426, %v4427
        %v4429 = vrot.slane %v4428, 2
        %v4430 = vmax.f32 %v4428, %v4429
        %v4431 = vrot.slane %v4430, 1
        %v4432 = vmax.f32 %v4430, %v4431
        %v4433 = vsel %vm3574, %v3422, -inf
        %v4434 = vsel %vm3574, %v3423, -inf
        %v4435 = vmax.f32 %v4433, %v4434
        %v4436 = vsel %vm3574, %v3424, -inf
        %v4437 = vmax.f32 %v4435, %v4436
        %v4438 = vsel %vm3574, %v3425, -inf
        %v4439 = vmax.f32 %v4437, %v4438
        %v4440 = vrot.slane %v4439, 4
        %v4441 = vmax.f32 %v4439, %v4440
        %v4442 = vrot.slane %v4441, 2
        %v4443 = vmax.f32 %v4441, %v4442
        %v4444 = vrot.slane %v4443, 1
        %v4445 = vmax.f32 %v4443, %v4444
        %v4446 = vsel %vm3574, %v3426, -inf
        %v4447 = vsel %vm3574, %v3427, -inf
        %v4448 = vmax.f32 %v4446, %v4447
        %v4449 = vsel %vm3574, %v3428, -inf
        %v4450 = vmax.f32 %v4448, %v4449
        %v4451 = vsel %vm3574, %v3429, -inf
        %v4452 = vmax.f32 %v4450, %v4451
        %v4453 = vrot.slane %v4452, 4
        %v4454 = vmax.f32 %v4452, %v4453
        %v4455 = vrot.slane %v4454, 2
        %v4456 = vmax.f32 %v4454, %v4455
        %v4457 = vrot.slane %v4456, 1
        %v4458 = vmax.f32 %v4456, %v4457
        %v4459 = vsel %vm3574, %v3430, -inf
        %v4460 = vsel %vm3574, %v3431, -inf
        %v4461 = vmax.f32 %v4459, %v4460
        %v4462 = vsel %vm3574, %v3432, -inf
        %v4463 = vmax.f32 %v4461, %v4462
        %v4464 = vsel %vm3574, %v3433, -inf
        %v4465 = vmax.f32 %v4463, %v4464
        %v4466 = vrot.slane %v4465, 4
        %v4467 = vmax.f32 %v4465, %v4466
        %v4468 = vrot.slane %v4467, 2
        %v4469 = vmax.f32 %v4467, %v4468
        %v4470 = vrot.slane %v4469, 1
        %v4471 = vmax.f32 %v4469, %v4470
        %v4472 = vsel %vm3574, %v3434, -inf
        %v4473 = vsel %vm3574, %v3435, -inf
        %v4474 = vmax.f32 %v4472, %v4473
        %v4475 = vsel %vm3574, %v3436, -inf
        %v4476 = vmax.f32 %v4474, %v4475
        %v4477 = vsel %vm3574, %v3437, -inf
        %v4478 = vmax.f32 %v4476, %v4477
        %v4479 = vrot.slane %v4478, 4
        %v4480 = vmax.f32 %v4478, %v4479
        %v4481 = vrot.slane %v4480, 2
        %v4482 = vmax.f32 %v4480, %v4481
        %v4483 = vrot.slane %v4482, 1
        %v4484 = vmax.f32 %v4482, %v4483
        %v4485 = vsel %vm3574, %v3438, -inf
        %v4486 = vsel %vm3574, %v3439, -inf
        %v4487 = vmax.f32 %v4485, %v4486
        %v4488 = vsel %vm3574, %v3440, -inf
        %v4489 = vmax.f32 %v4487, %v4488
        %v4490 = vsel %vm3574, %v3441, -inf
        %v4491 = vmax.f32 %v4489, %v4490
        %v4492 = vrot.slane %v4491, 4
        %v4493 = vmax.f32 %v4491, %v4492
        %v4494 = vrot.slane %v4493, 2
        %v4495 = vmax.f32 %v4493, %v4494
        %v4496 = vrot.slane %v4495, 1
        %v4497 = vmax.f32 %v4495, %v4496
        %v4498 = vsel %vm3574, %v3442, -inf
        %v4499 = vsel %vm3574, %v3443, -inf
        %v4500 = vmax.f32 %v4498, %v4499
        %v4501 = vsel %vm3574, %v3444, -inf
        %v4502 = vmax.f32 %v4500, %v4501
        %v4503 = vsel %vm3574, %v3445, -inf
        %v4504 = vmax.f32 %v4502, %v4503
        %v4505 = vrot.slane %v4504, 4
        %v4506 = vmax.f32 %v4504, %v4505
        %v4507 = vrot.slane %v4506, 2
        %v4508 = vmax.f32 %v4506, %v4507
        %v4509 = vrot.slane %v4508, 1
        %v4510 = vmax.f32 %v4508, %v4509
        %v4511 = vsel %vm3574, %v3446, -inf
        %v4512 = vsel %vm3574, %v3447, -inf
        %v4513 = vmax.f32 %v4511, %v4512
        %v4514 = vsel %vm3574, %v3448, -inf
        %v4515 = vmax.f32 %v4513, %v4514
        %v4516 = vsel %vm3574, %v3449, -inf
        %v4517 = vmax.f32 %v4515, %v4516
        %v4518 = vrot.slane %v4517, 4
        %v4519 = vmax.f32 %v4517, %v4518
        %v4520 = vrot.slane %v4519, 2
        %v4521 = vmax.f32 %v4519, %v4520
        %v4522 = vrot.slane %v4521, 1
        %v4523 = vmax.f32 %v4521, %v4522
        %v4524 = vsel %vm3574, %v3450, -inf
        %v4525 = vsel %vm3574, %v3451, -inf
        %v4526 = vmax.f32 %v4524, %v4525
        %v4527 = vsel %vm3574, %v3452, -inf
        %v4528 = vmax.f32 %v4526, %v4527
        %v4529 = vsel %vm3574, %v3453, -inf
        %v4530 = vmax.f32 %v4528, %v4529
        %v4531 = vrot.slane %v4530, 4
        %v4532 = vmax.f32 %v4530, %v4531
        %v4533 = vrot.slane %v4532, 2
        %v4534 = vmax.f32 %v4532, %v4533
        %v4535 = vrot.slane %v4534, 1
        %v4536 = vmax.f32 %v4534, %v4535
        %v4537 = vsel %vm3574, %v3454, -inf
        %v4538 = vsel %vm3574, %v3455, -inf
        %v4539 = vmax.f32 %v4537, %v4538
        %v4540 = vsel %vm3574, %v3456, -inf
        %v4541 = vmax.f32 %v4539, %v4540
        %v4542 = vsel %vm3574, %v3457, -inf
        %v4543 = vmax.f32 %v4541, %v4542
        %v4544 = vrot.slane %v4543, 4
        %v4545 = vmax.f32 %v4543, %v4544
        %v4546 = vrot.slane %v4545, 2
        %v4547 = vmax.f32 %v4545, %v4546
        %v4548 = vrot.slane %v4547, 1
        %v4549 = vmax.f32 %v4547, %v4548
        %v4550 = vsel %vm3574, %v3458, -inf
        %v4551 = vsel %vm3574, %v3459, -inf
        %v4552 = vmax.f32 %v4550, %v4551
        %v4553 = vsel %vm3574, %v3460, -inf
        %v4554 = vmax.f32 %v4552, %v4553
        %v4555 = vsel %vm3574, %v3461, -inf
        %v4556 = vmax.f32 %v4554, %v4555
        %v4557 = vrot.slane %v4556, 4
        %v4558 = vmax.f32 %v4556, %v4557
        %v4559 = vrot.slane %v4558, 2
        %v4560 = vmax.f32 %v4558, %v4559
        %v4561 = vrot.slane %v4560, 1
        %v4562 = vmax.f32 %v4560, %v4561
        %v4563 = vsel %vm3574, %v3462, -inf
        %v4564 = vsel %vm3574, %v3463, -inf
        %v4565 = vmax.f32 %v4563, %v4564
        %v4566 = vsel %vm3574, %v3464, -inf
        %v4567 = vmax.f32 %v4565, %v4566
        %v4568 = vsel %vm3574, %v3465, -inf
        %v4569 = vmax.f32 %v4567, %v4568
        %v4570 = vrot.slane %v4569, 4
        %v4571 = vmax.f32 %v4569, %v4570
        %v4572 = vrot.slane %v4571, 2
        %v4573 = vmax.f32 %v4571, %v4572
        %v4574 = vrot.slane %v4573, 1
        %v4575 = vmax.f32 %v4573, %v4574
        %v4576 = vsel %vm3574, %v3466, -inf
        %v4577 = vsel %vm3574, %v3467, -inf
        %v4578 = vmax.f32 %v4576, %v4577
        %v4579 = vsel %vm3574, %v3468, -inf
        %v4580 = vmax.f32 %v4578, %v4579
        %v4581 = vsel %vm3574, %v3469, -inf
        %v4582 = vmax.f32 %v4580, %v4581
        %v4583 = vrot.slane %v4582, 4
        %v4584 = vmax.f32 %v4582, %v4583
        %v4585 = vrot.slane %v4584, 2
        %v4586 = vmax.f32 %v4584, %v4585
        %v4587 = vrot.slane %v4586, 1
        %v4588 = vmax.f32 %v4586, %v4587
        %v4589 = vsel %vm3574, %v3470, -inf
        %v4590 = vsel %vm3574, %v3471, -inf
        %v4591 = vmax.f32 %v4589, %v4590
        %v4592 = vsel %vm3574, %v3472, -inf
        %v4593 = vmax.f32 %v4591, %v4592
        %v4594 = vsel %vm3574, %v3473, -inf
        %v4595 = vmax.f32 %v4593, %v4594
        %v4596 = vrot.slane %v4595, 4
        %v4597 = vmax.f32 %v4595, %v4596
        %v4598 = vrot.slane %v4597, 2
        %v4599 = vmax.f32 %v4597, %v4598
        %v4600 = vrot.slane %v4599, 1
        %v4601 = vmax.f32 %v4599, %v4600
        %v4602 = vsel %vm3574, %v3474, -inf
        %v4603 = vsel %vm3574, %v3475, -inf
        %v4604 = vmax.f32 %v4602, %v4603
        %v4605 = vsel %vm3574, %v3476, -inf
        %v4606 = vmax.f32 %v4604, %v4605
        %v4607 = vsel %vm3574, %v3477, -inf
        %v4608 = vmax.f32 %v4606, %v4607
        %v4609 = vrot.slane %v4608, 4
        %v4610 = vmax.f32 %v4608, %v4609
        %v4611 = vrot.slane %v4610, 2
        %v4612 = vmax.f32 %v4610, %v4611
        %v4613 = vrot.slane %v4612, 1
        %v4614 = vmax.f32 %v4612, %v4613
        %v4615 = vsel %vm3574, %v3478, -inf
        %v4616 = vsel %vm3574, %v3479, -inf
        %v4617 = vmax.f32 %v4615, %v4616
        %v4618 = vsel %vm3574, %v3480, -inf
        %v4619 = vmax.f32 %v4617, %v4618
        %v4620 = vsel %vm3574, %v3481, -inf
        %v4621 = vmax.f32 %v4619, %v4620
        %v4622 = vrot.slane %v4621, 4
        %v4623 = vmax.f32 %v4621, %v4622
        %v4624 = vrot.slane %v4623, 2
        %v4625 = vmax.f32 %v4623, %v4624
        %v4626 = vrot.slane %v4625, 1
        %v4627 = vmax.f32 %v4625, %v4626
        %v4628 = vsel %vm3574, %v3482, -inf
        %v4629 = vsel %vm3574, %v3483, -inf
        %v4630 = vmax.f32 %v4628, %v4629
        %v4631 = vsel %vm3574, %v3484, -inf
        %v4632 = vmax.f32 %v4630, %v4631
        %v4633 = vsel %vm3574, %v3485, -inf
        %v4634 = vmax.f32 %v4632, %v4633
        %v4635 = vrot.slane %v4634, 4
        %v4636 = vmax.f32 %v4634, %v4635
        %v4637 = vrot.slane %v4636, 2
        %v4638 = vmax.f32 %v4636, %v4637
        %v4639 = vrot.slane %v4638, 1
        %v4640 = vmax.f32 %v4638, %v4639
        %v4641 = vsel %vm3574, %v3486, -inf
        %v4642 = vsel %vm3574, %v3487, -inf
        %v4643 = vmax.f32 %v4641, %v4642
        %v4644 = vsel %vm3574, %v3488, -inf
        %v4645 = vmax.f32 %v4643, %v4644
        %v4646 = vsel %vm3574, %v3489, -inf
        %v4647 = vmax.f32 %v4645, %v4646
        %v4648 = vrot.slane %v4647, 4
        %v4649 = vmax.f32 %v4647, %v4648
        %v4650 = vrot.slane %v4649, 2
        %v4651 = vmax.f32 %v4649, %v4650
        %v4652 = vrot.slane %v4651, 1
        %v4653 = vmax.f32 %v4651, %v4652
        %v4654 = vsel %vm3574, %v3490, -inf
        %v4655 = vsel %vm3574, %v3491, -inf
        %v4656 = vmax.f32 %v4654, %v4655
        %v4657 = vsel %vm3574, %v3492, -inf
        %v4658 = vmax.f32 %v4656, %v4657
        %v4659 = vsel %vm3574, %v3493, -inf
        %v4660 = vmax.f32 %v4658, %v4659
        %v4661 = vrot.slane %v4660, 4
        %v4662 = vmax.f32 %v4660, %v4661
        %v4663 = vrot.slane %v4662, 2
        %v4664 = vmax.f32 %v4662, %v4663
        %v4665 = vrot.slane %v4664, 1
        %v4666 = vmax.f32 %v4664, %v4665
        %v4667 = vsel %vm3574, %v3494, -inf
        %v4668 = vsel %vm3574, %v3495, -inf
        %v4669 = vmax.f32 %v4667, %v4668
        %v4670 = vsel %vm3574, %v3496, -inf
        %v4671 = vmax.f32 %v4669, %v4670
        %v4672 = vsel %vm3574, %v3497, -inf
        %v4673 = vmax.f32 %v4671, %v4672
        %v4674 = vrot.slane %v4673, 4
        %v4675 = vmax.f32 %v4673, %v4674
        %v4676 = vrot.slane %v4675, 2
        %v4677 = vmax.f32 %v4675, %v4676
        %v4678 = vrot.slane %v4677, 1
        %v4679 = vmax.f32 %v4677, %v4678
        %v4680 = vsel %vm3574, %v3498, -inf
        %v4681 = vsel %vm3574, %v3499, -inf
        %v4682 = vmax.f32 %v4680, %v4681
        %v4683 = vsel %vm3574, %v3500, -inf
        %v4684 = vmax.f32 %v4682, %v4683
        %v4685 = vsel %vm3574, %v3501, -inf
        %v4686 = vmax.f32 %v4684, %v4685
        %v4687 = vrot.slane %v4686, 4
        %v4688 = vmax.f32 %v4686, %v4687
        %v4689 = vrot.slane %v4688, 2
        %v4690 = vmax.f32 %v4688, %v4689
        %v4691 = vrot.slane %v4690, 1
        %v4692 = vmax.f32 %v4690, %v4691
        %v4693 = vsel %vm3574, %v3502, -inf
        %v4694 = vsel %vm3574, %v3503, -inf
        %v4695 = vmax.f32 %v4693, %v4694
        %v4696 = vsel %vm3574, %v3504, -inf
        %v4697 = vmax.f32 %v4695, %v4696
        %v4698 = vsel %vm3574, %v3505, -inf
        %v4699 = vmax.f32 %v4697, %v4698
        %v4700 = vrot.slane %v4699, 4
        %v4701 = vmax.f32 %v4699, %v4700
        %v4702 = vrot.slane %v4701, 2
        %v4703 = vmax.f32 %v4701, %v4702
        %v4704 = vrot.slane %v4703, 1
        %v4705 = vmax.f32 %v4703, %v4704
        %v4706 = vsel %vm3574, %v3506, -inf
        %v4707 = vsel %vm3574, %v3507, -inf
        %v4708 = vmax.f32 %v4706, %v4707
        %v4709 = vsel %vm3574, %v3508, -inf
        %v4710 = vmax.f32 %v4708, %v4709
        %v4711 = vsel %vm3574, %v3509, -inf
        %v4712 = vmax.f32 %v4710, %v4711
        %v4713 = vrot.slane %v4712, 4
        %v4714 = vmax.f32 %v4712, %v4713
        %v4715 = vrot.slane %v4714, 2
        %v4716 = vmax.f32 %v4714, %v4715
        %v4717 = vrot.slane %v4716, 1
        %v4718 = vmax.f32 %v4716, %v4717
        %v4719 = vsel %vm3574, %v3510, -inf
        %v4720 = vsel %vm3574, %v3511, -inf
        %v4721 = vmax.f32 %v4719, %v4720
        %v4722 = vsel %vm3574, %v3512, -inf
        %v4723 = vmax.f32 %v4721, %v4722
        %v4724 = vsel %vm3574, %v3513, -inf
        %v4725 = vmax.f32 %v4723, %v4724
        %v4726 = vrot.slane %v4725, 4
        %v4727 = vmax.f32 %v4725, %v4726
        %v4728 = vrot.slane %v4727, 2
        %v4729 = vmax.f32 %v4727, %v4728
        %v4730 = vrot.slane %v4729, 1
        %v4731 = vmax.f32 %v4729, %v4730
        %v4732 = vsel %vm3574, %v3514, -inf
        %v4733 = vsel %vm3574, %v3515, -inf
        %v4734 = vmax.f32 %v4732, %v4733
        %v4735 = vsel %vm3574, %v3516, -inf
        %v4736 = vmax.f32 %v4734, %v4735
        %v4737 = vsel %vm3574, %v3517, -inf
        %v4738 = vmax.f32 %v4736, %v4737
        %v4739 = vrot.slane %v4738, 4
        %v4740 = vmax.f32 %v4738, %v4739
        %v4741 = vrot.slane %v4740, 2
        %v4742 = vmax.f32 %v4740, %v4741
        %v4743 = vrot.slane %v4742, 1
        %v4744 = vmax.f32 %v4742, %v4743
        %v4745 = vsel %vm3574, %v3518, -inf
        %v4746 = vsel %vm3574, %v3519, -inf
        %v4747 = vmax.f32 %v4745, %v4746
        %v4748 = vsel %vm3574, %v3520, -inf
        %v4749 = vmax.f32 %v4747, %v4748
        %v4750 = vsel %vm3574, %v3521, -inf
        %v4751 = vmax.f32 %v4749, %v4750
        %v4752 = vrot.slane %v4751, 4
        %v4753 = vmax.f32 %v4751, %v4752
        %v4754 = vrot.slane %v4753, 2
        %v4755 = vmax.f32 %v4753, %v4754
        %v4756 = vrot.slane %v4755, 1
        %v4757 = vmax.f32 %v4755, %v4756
        %v4758 = vsel %vm3574, %v3522, -inf
        %v4759 = vsel %vm3574, %v3523, -inf
        %v4760 = vmax.f32 %v4758, %v4759
        %v4761 = vsel %vm3574, %v3524, -inf
        %v4762 = vmax.f32 %v4760, %v4761
        %v4763 = vsel %vm3574, %v3525, -inf
        %v4764 = vmax.f32 %v4762, %v4763
        %v4765 = vrot.slane %v4764, 4
        %v4766 = vmax.f32 %v4764, %v4765
        %v4767 = vrot.slane %v4766, 2
        %v4768 = vmax.f32 %v4766, %v4767
        %v4769 = vrot.slane %v4768, 1
        %v4770 = vmax.f32 %v4768, %v4769
        %v4771 = vsel %vm3574, %v3526, -inf
        %v4772 = vsel %vm3574, %v3527, -inf
        %v4773 = vmax.f32 %v4771, %v4772
        %v4774 = vsel %vm3574, %v3528, -inf
        %v4775 = vmax.f32 %v4773, %v4774
        %v4776 = vsel %vm3574, %v3529, -inf
        %v4777 = vmax.f32 %v4775, %v4776
        %v4778 = vrot.slane %v4777, 4
        %v4779 = vmax.f32 %v4777, %v4778
        %v4780 = vrot.slane %v4779, 2
        %v4781 = vmax.f32 %v4779, %v4780
        %v4782 = vrot.slane %v4781, 1
        %v4783 = vmax.f32 %v4781, %v4782
        %v4784 = vsel %vm3574, %v3530, -inf
        %v4785 = vsel %vm3574, %v3531, -inf
        %v4786 = vmax.f32 %v4784, %v4785
        %v4787 = vsel %vm3574, %v3532, -inf
        %v4788 = vmax.f32 %v4786, %v4787
        %v4789 = vsel %vm3574, %v3533, -inf
        %v4790 = vmax.f32 %v4788, %v4789
        %v4791 = vrot.slane %v4790, 4
        %v4792 = vmax.f32 %v4790, %v4791
        %v4793 = vrot.slane %v4792, 2
        %v4794 = vmax.f32 %v4792, %v4793
        %v4795 = vrot.slane %v4794, 1
        %v4796 = vmax.f32 %v4794, %v4795
        %v4797 = vsel %vm3574, %v3534, -inf
        %v4798 = vsel %vm3574, %v3535, -inf
        %v4799 = vmax.f32 %v4797, %v4798
        %v4800 = vsel %vm3574, %v3536, -inf
        %v4801 = vmax.f32 %v4799, %v4800
        %v4802 = vsel %vm3574, %v3537, -inf
        %v4803 = vmax.f32 %v4801, %v4802
        %v4804 = vrot.slane %v4803, 4
        %v4805 = vmax.f32 %v4803, %v4804
        %v4806 = vrot.slane %v4805, 2
        %v4807 = vmax.f32 %v4805, %v4806
        %v4808 = vrot.slane %v4807, 1
        %v4809 = vmax.f32 %v4807, %v4808
        %v4810 = vsel %vm3574, %v3538, -inf
        %v4811 = vsel %vm3574, %v3539, -inf
        %v4812 = vmax.f32 %v4810, %v4811
        %v4813 = vsel %vm3574, %v3540, -inf
        %v4814 = vmax.f32 %v4812, %v4813
        %v4815 = vsel %vm3574, %v3541, -inf
        %v4816 = vmax.f32 %v4814, %v4815
        %v4817 = vrot.slane %v4816, 4
        %v4818 = vmax.f32 %v4816, %v4817
        %v4819 = vrot.slane %v4818, 2
        %v4820 = vmax.f32 %v4818, %v4819
        %v4821 = vrot.slane %v4820, 1
        %v4822 = vmax.f32 %v4820, %v4821
        %v4823 = vsel %vm3574, %v3542, -inf
        %v4824 = vsel %vm3574, %v3543, -inf
        %v4825 = vmax.f32 %v4823, %v4824
        %v4826 = vsel %vm3574, %v3544, -inf
        %v4827 = vmax.f32 %v4825, %v4826
        %v4828 = vsel %vm3574, %v3545, -inf
        %v4829 = vmax.f32 %v4827, %v4828
        %v4830 = vrot.slane %v4829, 4
        %v4831 = vmax.f32 %v4829, %v4830
        %v4832 = vrot.slane %v4831, 2
        %v4833 = vmax.f32 %v4831, %v4832
        %v4834 = vrot.slane %v4833, 1
        %v4835 = vmax.f32 %v4833, %v4834
        %v4836 = vsel %vm3574, %v3546, -inf
        %v4837 = vsel %vm3574, %v3547, -inf
        %v4838 = vmax.f32 %v4836, %v4837
        %v4839 = vsel %vm3574, %v3548, -inf
        %v4840 = vmax.f32 %v4838, %v4839
        %v4841 = vsel %vm3574, %v3549, -inf
        %v4842 = vmax.f32 %v4840, %v4841
        %v4843 = vrot.slane %v4842, 4
        %v4844 = vmax.f32 %v4842, %v4843
        %v4845 = vrot.slane %v4844, 2
        %v4846 = vmax.f32 %v4844, %v4845
        %v4847 = vrot.slane %v4846, 1
        %v4848 = vmax.f32 %v4846, %v4847
        %v4849 = vsel %vm3574, %v3550, -inf
        %v4850 = vsel %vm3574, %v3551, -inf
        %v4851 = vmax.f32 %v4849, %v4850
        %v4852 = vsel %vm3574, %v3552, -inf
        %v4853 = vmax.f32 %v4851, %v4852
        %v4854 = vsel %vm3574, %v3553, -inf
        %v4855 = vmax.f32 %v4853, %v4854
        %v4856 = vrot.slane %v4855, 4
        %v4857 = vmax.f32 %v4855, %v4856
        %v4858 = vrot.slane %v4857, 2
        %v4859 = vmax.f32 %v4857, %v4858
        %v4860 = vrot.slane %v4859, 1
        %v4861 = vmax.f32 %v4859, %v4860
        %v4862 = vsel %vm3574, %v3554, -inf
        %v4863 = vsel %vm3574, %v3555, -inf
        %v4864 = vmax.f32 %v4862, %v4863
        %v4865 = vsel %vm3574, %v3556, -inf
        %v4866 = vmax.f32 %v4864, %v4865
        %v4867 = vsel %vm3574, %v3557, -inf
        %v4868 = vmax.f32 %v4866, %v4867
        %v4869 = vrot.slane %v4868, 4
        %v4870 = vmax.f32 %v4868, %v4869
        %v4871 = vrot.slane %v4870, 2
        %v4872 = vmax.f32 %v4870, %v4871
        %v4873 = vrot.slane %v4872, 1
        %v4874 = vmax.f32 %v4872, %v4873
        %v4875 = vsel %vm3574, %v3558, -inf
        %v4876 = vsel %vm3574, %v3559, -inf
        %v4877 = vmax.f32 %v4875, %v4876
        %v4878 = vsel %vm3574, %v3560, -inf
        %v4879 = vmax.f32 %v4877, %v4878
        %v4880 = vsel %vm3574, %v3561, -inf
        %v4881 = vmax.f32 %v4879, %v4880
        %v4882 = vrot.slane %v4881, 4
        %v4883 = vmax.f32 %v4881, %v4882
        %v4884 = vrot.slane %v4883, 2
        %v4885 = vmax.f32 %v4883, %v4884
        %v4886 = vrot.slane %v4885, 1
        %v4887 = vmax.f32 %v4885, %v4886
        %v4888 = vsel %vm3574, %v3562, -inf
        %v4889 = vsel %vm3574, %v3563, -inf
        %v4890 = vmax.f32 %v4888, %v4889
        %v4891 = vsel %vm3574, %v3564, -inf
        %v4892 = vmax.f32 %v4890, %v4891
        %v4893 = vsel %vm3574, %v3565, -inf
        %v4894 = vmax.f32 %v4892, %v4893
        %v4895 = vrot.slane %v4894, 4
        %v4896 = vmax.f32 %v4894, %v4895
        %v4897 = vrot.slane %v4896, 2
        %v4898 = vmax.f32 %v4896, %v4897
        %v4899 = vrot.slane %v4898, 1
        %v4900 = vmax.f32 %v4898, %v4899
        %v4901 = vsel %vm3574, %v3566, -inf
        %v4902 = vsel %vm3574, %v3567, -inf
        %v4903 = vmax.f32 %v4901, %v4902
        %v4904 = vsel %vm3574, %v3568, -inf
        %v4905 = vmax.f32 %v4903, %v4904
        %v4906 = vsel %vm3574, %v3569, -inf
        %v4907 = vmax.f32 %v4905, %v4906
        %v4908 = vrot.slane %v4907, 4
        %v4909 = vmax.f32 %v4907, %v4908
        %v4910 = vrot.slane %v4909, 2
        %v4911 = vmax.f32 %v4909, %v4910
        %v4912 = vrot.slane %v4911, 1
        %v4913 = vmax.f32 %v4911, %v4912
        %v4914 = vsel %vm3574, %v3570, -inf
        %v4915 = vsel %vm3574, %v3571, -inf
        %v4916 = vmax.f32 %v4914, %v4915
        %v4917 = vsel %vm3574, %v3572, -inf
        %v4918 = vmax.f32 %v4916, %v4917
        %v4919 = vsel %vm3574, %v3573, -inf
        %v4920 = vmax.f32 %v4918, %v4919
        %v4921 = vrot.slane %v4920, 4
        %v4922 = vmax.f32 %v4920, %v4921
        %v4923 = vrot.slane %v4922, 2
        %v4924 = vmax.f32 %v4922, %v4923
        %v4925 = vrot.slane %v4924, 1
        %v4926 = vmax.f32 %v4924, %v4925
        %5031 = vst.msk [vmem:[%s176] sm:$0xff] %vm3574, %v3158
        %5032 = vst.msk [vmem:[%s176 + $0x8] sm:$0xff] %vm3574, %v3159
        %5033 = vst.msk [vmem:[%s176 + $0x10] sm:$0xff] %vm3574, %v3160
        %5034 = vst.msk [vmem:[%s176 + $0x18] sm:$0xff] %vm3574, %v3161
        %5035 = vst.msk [vmem:[%s176 + $0x20] sm:$0xff] %vm3574, %v3162
        %5036 = vst.msk [vmem:[%s176 + $0x28] sm:$0xff] %vm3574, %v3163
        %5037 = vst.msk [vmem:[%s176 + $0x30] sm:$0xff] %vm3574, %v3164
        %5038 = vst.msk [vmem:[%s176 + $0x38] sm:$0xff] %vm3574, %v3165
        %5039 = vst.msk [vmem:[%s176 + $0x40] sm:$0xff] %vm3574, %v3166
        %5040 = vst.msk [vmem:[%s176 + $0x48] sm:$0xff] %vm3574, %v3167
        %5041 = vst.msk [vmem:[%s176 + $0x50] sm:$0xff] %vm3574, %v3168
        %5042 = vst.msk [vmem:[%s176 + $0x58] sm:$0xff] %vm3574, %v3169
        %5043 = vst.msk [vmem:[%s176 + $0x60] sm:$0xff] %vm3574, %v3170
        %5044 = vst.msk [vmem:[%s176 + $0x68] sm:$0xff] %vm3574, %v3171
        %5045 = vst.msk [vmem:[%s176 + $0x70] sm:$0xff] %vm3574, %v3172
        %5046 = vst.msk [vmem:[%s176 + $0x78] sm:$0xff] %vm3574, %v3173
        %5047 = vst.msk [vmem:[%s176 + $0x80] sm:$0xff] %vm3574, %v3174
        %5048 = vst.msk [vmem:[%s176 + $0x88] sm:$0xff] %vm3574, %v3175
        %5049 = vst.msk [vmem:[%s176 + $0x90] sm:$0xff] %vm3574, %v3176
        %5050 = vst.msk [vmem:[%s176 + $0x98] sm:$0xff] %vm3574, %v3177
        %5051 = vst.msk [vmem:[%s176 + $0xa0] sm:$0xff] %vm3574, %v3178
        %5052 = vst.msk [vmem:[%s176 + $0xa8] sm:$0xff] %vm3574, %v3179
        %5053 = vst.msk [vmem:[%s176 + $0xb0] sm:$0xff] %vm3574, %v3180
        %5054 = vst.msk [vmem:[%s176 + $0xb8] sm:$0xff] %vm3574, %v3181
        %5055 = vst.msk [vmem:[%s176 + $0xc0] sm:$0xff] %vm3574, %v3182
        %5056 = vst.msk [vmem:[%s176 + $0xc8] sm:$0xff] %vm3574, %v3183
        %5057 = vst.msk [vmem:[%s176 + $0xd0] sm:$0xff] %vm3574, %v3184
        %5058 = vst.msk [vmem:[%s176 + $0xd8] sm:$0xff] %vm3574, %v3185
        %5059 = vst.msk [vmem:[%s176 + $0xe0] sm:$0xff] %vm3574, %v3186
        %5060 = vst.msk [vmem:[%s176 + $0xe8] sm:$0xff] %vm3574, %v3187
        %5061 = vst.msk [vmem:[%s176 + $0xf0] sm:$0xff] %vm3574, %v3188
        %5062 = vst.msk [vmem:[%s176 + $0xf8] sm:$0xff] %vm3574, %v3189
        %5063 = vst.msk [vmem:[%s176 + $0x100] sm:$0xff] %vm3574, %v3190
        %5064 = vst.msk [vmem:[%s176 + $0x108] sm:$0xff] %vm3574, %v3191
        %5065 = vst.msk [vmem:[%s176 + $0x110] sm:$0xff] %vm3574, %v3192
        %5066 = vst.msk [vmem:[%s176 + $0x118] sm:$0xff] %vm3574, %v3193
        %5067 = vst.msk [vmem:[%s176 + $0x120] sm:$0xff] %vm3574, %v3194
        %5068 = vst.msk [vmem:[%s176 + $0x128] sm:$0xff] %vm3574, %v3195
        %5069 = vst.msk [vmem:[%s176 + $0x130] sm:$0xff] %vm3574, %v3196
        %5070 = vst.msk [vmem:[%s176 + $0x138] sm:$0xff] %vm3574, %v3197
        %5071 = vst.msk [vmem:[%s176 + $0x140] sm:$0xff] %vm3574, %v3198
        %5072 = vst.msk [vmem:[%s176 + $0x148] sm:$0xff] %vm3574, %v3199
        %5073 = vst.msk [vmem:[%s176 + $0x150] sm:$0xff] %vm3574, %v3200
        %5074 = vst.msk [vmem:[%s176 + $0x158] sm:$0xff] %vm3574, %v3201
        %5075 = vst.msk [vmem:[%s176 + $0x160] sm:$0xff] %vm3574, %v3202
        %5076 = vst.msk [vmem:[%s176 + $0x168] sm:$0xff] %vm3574, %v3203
        %5077 = vst.msk [vmem:[%s176 + $0x170] sm:$0xff] %vm3574, %v3204
        %5078 = vst.msk [vmem:[%s176 + $0x178] sm:$0xff] %vm3574, %v3205
        %5079 = vst.msk [vmem:[%s176 + $0x180] sm:$0xff] %vm3574, %v3206
        %5080 = vst.msk [vmem:[%s176 + $0x188] sm:$0xff] %vm3574, %v3207
        %5081 = vst.msk [vmem:[%s176 + $0x190] sm:$0xff] %vm3574, %v3208
        %5082 = vst.msk [vmem:[%s176 + $0x198] sm:$0xff] %vm3574, %v3209
        %5083 = vst.msk [vmem:[%s176 + $0x1a0] sm:$0xff] %vm3574, %v3210
        %5084 = vst.msk [vmem:[%s176 + $0x1a8] sm:$0xff] %vm3574, %v3211
        %5085 = vst.msk [vmem:[%s176 + $0x1b0] sm:$0xff] %vm3574, %v3212
        %5086 = vst.msk [vmem:[%s176 + $0x1b8] sm:$0xff] %vm3574, %v3213
        %5087 = vst.msk [vmem:[%s176 + $0x1c0] sm:$0xff] %vm3574, %v3214
        %5088 = vst.msk [vmem:[%s176 + $0x1c8] sm:$0xff] %vm3574, %v3215
        %5089 = vst.msk [vmem:[%s176 + $0x1d0] sm:$0xff] %vm3574, %v3216
        %5090 = vst.msk [vmem:[%s176 + $0x1d8] sm:$0xff] %vm3574, %v3217
        %5091 = vst.msk [vmem:[%s176 + $0x1e0] sm:$0xff] %vm3574, %v3218
        %5092 = vst.msk [vmem:[%s176 + $0x1e8] sm:$0xff] %vm3574, %v3219
        %5093 = vst.msk [vmem:[%s176 + $0x1f0] sm:$0xff] %vm3574, %v3220
        %5094 = vst.msk [vmem:[%s176 + $0x1f8] sm:$0xff] %vm3574, %v3221
        %5095 = vst.msk [vmem:[%s176 + $0x200] sm:$0xff] %vm3574, %v3222
        %5096 = vst.msk [vmem:[%s176 + $0x208] sm:$0xff] %vm3574, %v3223
        %5097 = vst.msk [vmem:[%s176 + $0x210] sm:$0xff] %vm3574, %v3224
        %5098 = vst.msk [vmem:[%s176 + $0x218] sm:$0xff] %vm3574, %v3225
        %5099 = vst.msk [vmem:[%s176 + $0x220] sm:$0xff] %vm3574, %v3226
        %5100 = vst.msk [vmem:[%s176 + $0x228] sm:$0xff] %vm3574, %v3227
        %5101 = vst.msk [vmem:[%s176 + $0x230] sm:$0xff] %vm3574, %v3228
        %5102 = vst.msk [vmem:[%s176 + $0x238] sm:$0xff] %vm3574, %v3229
        %5103 = vst.msk [vmem:[%s176 + $0x240] sm:$0xff] %vm3574, %v3230
        %5104 = vst.msk [vmem:[%s176 + $0x248] sm:$0xff] %vm3574, %v3231
        %5105 = vst.msk [vmem:[%s176 + $0x250] sm:$0xff] %vm3574, %v3232
        %5106 = vst.msk [vmem:[%s176 + $0x258] sm:$0xff] %vm3574, %v3233
        %5107 = vst.msk [vmem:[%s176 + $0x260] sm:$0xff] %vm3574, %v3234
        %5108 = vst.msk [vmem:[%s176 + $0x268] sm:$0xff] %vm3574, %v3235
        %5109 = vst.msk [vmem:[%s176 + $0x270] sm:$0xff] %vm3574, %v3236
        %5110 = vst.msk [vmem:[%s176 + $0x278] sm:$0xff] %vm3574, %v3237
        %5111 = vst.msk [vmem:[%s176 + $0x280] sm:$0xff] %vm3574, %v3238
        %5112 = vst.msk [vmem:[%s176 + $0x288] sm:$0xff] %vm3574, %v3239
        %5113 = vst.msk [vmem:[%s176 + $0x290] sm:$0xff] %vm3574, %v3240
        %5114 = vst.msk [vmem:[%s176 + $0x298] sm:$0xff] %vm3574, %v3241
        %5115 = vst.msk [vmem:[%s176 + $0x2a0] sm:$0xff] %vm3574, %v3242
        %5116 = vst.msk [vmem:[%s176 + $0x2a8] sm:$0xff] %vm3574, %v3243
        %5117 = vst.msk [vmem:[%s176 + $0x2b0] sm:$0xff] %vm3574, %v3244
        %5118 = vst.msk [vmem:[%s176 + $0x2b8] sm:$0xff] %vm3574, %v3245
        %5119 = vst.msk [vmem:[%s176 + $0x2c0] sm:$0xff] %vm3574, %v3246
        %5120 = vst.msk [vmem:[%s176 + $0x2c8] sm:$0xff] %vm3574, %v3247
        %5121 = vst.msk [vmem:[%s176 + $0x2d0] sm:$0xff] %vm3574, %v3248
        %5122 = vst.msk [vmem:[%s176 + $0x2d8] sm:$0xff] %vm3574, %v3249
        %5123 = vst.msk [vmem:[%s176 + $0x2e0] sm:$0xff] %vm3574, %v3250
        %5124 = vst.msk [vmem:[%s176 + $0x2e8] sm:$0xff] %vm3574, %v3251
        %5125 = vst.msk [vmem:[%s176 + $0x2f0] sm:$0xff] %vm3574, %v3252
        %5126 = vst.msk [vmem:[%s176 + $0x2f8] sm:$0xff] %vm3574, %v3253
        %5127 = vst.msk [vmem:[%s176 + $0x300] sm:$0xff] %vm3574, %v3254
        %5128 = vst.msk [vmem:[%s176 + $0x308] sm:$0xff] %vm3574, %v3255
        %5129 = vst.msk [vmem:[%s176 + $0x310] sm:$0xff] %vm3574, %v3256
        %5130 = vst.msk [vmem:[%s176 + $0x318] sm:$0xff] %vm3574, %v3257
        %5131 = vst.msk [vmem:[%s176 + $0x320] sm:$0xff] %vm3574, %v3258
        %5132 = vst.msk [vmem:[%s176 + $0x328] sm:$0xff] %vm3574, %v3259
        %5133 = vst.msk [vmem:[%s176 + $0x330] sm:$0xff] %vm3574, %v3260
        %5134 = vst.msk [vmem:[%s176 + $0x338] sm:$0xff] %vm3574, %v3261
        %5135 = vst.msk [vmem:[%s176 + $0x340] sm:$0xff] %vm3574, %v3262
        %5136 = vst.msk [vmem:[%s176 + $0x348] sm:$0xff] %vm3574, %v3263
        %5137 = vst.msk [vmem:[%s176 + $0x350] sm:$0xff] %vm3574, %v3264
        %5138 = vst.msk [vmem:[%s176 + $0x358] sm:$0xff] %vm3574, %v3265
        %5139 = vst.msk [vmem:[%s176 + $0x360] sm:$0xff] %vm3574, %v3266
        %5140 = vst.msk [vmem:[%s176 + $0x368] sm:$0xff] %vm3574, %v3267
        %5141 = vst.msk [vmem:[%s176 + $0x370] sm:$0xff] %vm3574, %v3268
        %5142 = vst.msk [vmem:[%s176 + $0x378] sm:$0xff] %vm3574, %v3269
        %5143 = vst.msk [vmem:[%s176 + $0x380] sm:$0xff] %vm3574, %v3270
        %5144 = vst.msk [vmem:[%s176 + $0x388] sm:$0xff] %vm3574, %v3271
        %5145 = vst.msk [vmem:[%s176 + $0x390] sm:$0xff] %vm3574, %v3272
        %5146 = vst.msk [vmem:[%s176 + $0x398] sm:$0xff] %vm3574, %v3273
        %5147 = vst.msk [vmem:[%s176 + $0x3a0] sm:$0xff] %vm3574, %v3274
        %5148 = vst.msk [vmem:[%s176 + $0x3a8] sm:$0xff] %vm3574, %v3275
        %5149 = vst.msk [vmem:[%s176 + $0x3b0] sm:$0xff] %vm3574, %v3276
        %5150 = vst.msk [vmem:[%s176 + $0x3b8] sm:$0xff] %vm3574, %v3277
        %5151 = vst.msk [vmem:[%s176 + $0x3c0] sm:$0xff] %vm3574, %v3278
        %5152 = vst.msk [vmem:[%s176 + $0x3c8] sm:$0xff] %vm3574, %v3279
        %5153 = vst.msk [vmem:[%s176 + $0x3d0] sm:$0xff] %vm3574, %v3280
        %5154 = vst.msk [vmem:[%s176 + $0x3d8] sm:$0xff] %vm3574, %v3281
        %5155 = vst.msk [vmem:[%s176 + $0x3e0] sm:$0xff] %vm3574, %v3282
        %5156 = vst.msk [vmem:[%s176 + $0x3e8] sm:$0xff] %vm3574, %v3283
        %5157 = vst.msk [vmem:[%s176 + $0x3f0] sm:$0xff] %vm3574, %v3284
        %5158 = vst.msk [vmem:[%s176 + $0x3f8] sm:$0xff] %vm3574, %v3285
        %5159 = vst.msk [vmem:[%s176 + $0x400] sm:$0xff] %vm3574, %v3286
        %5160 = vst.msk [vmem:[%s176 + $0x408] sm:$0xff] %vm3574, %v3287
        %5161 = vst.msk [vmem:[%s176 + $0x410] sm:$0xff] %vm3574, %v3288
        %5162 = vst.msk [vmem:[%s176 + $0x418] sm:$0xff] %vm3574, %v3289
        %5163 = vst.msk [vmem:[%s176 + $0x420] sm:$0xff] %vm3574, %v3290
        %5164 = vst.msk [vmem:[%s176 + $0x428] sm:$0xff] %vm3574, %v3291
        %5165 = vst.msk [vmem:[%s176 + $0x430] sm:$0xff] %vm3574, %v3292
        %5166 = vst.msk [vmem:[%s176 + $0x438] sm:$0xff] %vm3574, %v3293
        %5167 = vst.msk [vmem:[%s176 + $0x440] sm:$0xff] %vm3574, %v3294
        %5168 = vst.msk [vmem:[%s176 + $0x448] sm:$0xff] %vm3574, %v3295
        %5169 = vst.msk [vmem:[%s176 + $0x450] sm:$0xff] %vm3574, %v3296
        %5170 = vst.msk [vmem:[%s176 + $0x458] sm:$0xff] %vm3574, %v3297
        %5171 = vst.msk [vmem:[%s176 + $0x460] sm:$0xff] %vm3574, %v3298
        %5172 = vst.msk [vmem:[%s176 + $0x468] sm:$0xff] %vm3574, %v3299
        %5173 = vst.msk [vmem:[%s176 + $0x470] sm:$0xff] %vm3574, %v3300
        %5174 = vst.msk [vmem:[%s176 + $0x478] sm:$0xff] %vm3574, %v3301
        %5175 = vst.msk [vmem:[%s176 + $0x480] sm:$0xff] %vm3574, %v3302
        %5176 = vst.msk [vmem:[%s176 + $0x488] sm:$0xff] %vm3574, %v3303
        %5177 = vst.msk [vmem:[%s176 + $0x490] sm:$0xff] %vm3574, %v3304
        %5178 = vst.msk [vmem:[%s176 + $0x498] sm:$0xff] %vm3574, %v3305
        %5179 = vst.msk [vmem:[%s176 + $0x4a0] sm:$0xff] %vm3574, %v3306
        %5180 = vst.msk [vmem:[%s176 + $0x4a8] sm:$0xff] %vm3574, %v3307
        %5181 = vst.msk [vmem:[%s176 + $0x4b0] sm:$0xff] %vm3574, %v3308
        %5182 = vst.msk [vmem:[%s176 + $0x4b8] sm:$0xff] %vm3574, %v3309
        %5183 = vst.msk [vmem:[%s176 + $0x4c0] sm:$0xff] %vm3574, %v3310
        %5184 = vst.msk [vmem:[%s176 + $0x4c8] sm:$0xff] %vm3574, %v3311
        %5185 = vst.msk [vmem:[%s176 + $0x4d0] sm:$0xff] %vm3574, %v3312
        %5186 = vst.msk [vmem:[%s176 + $0x4d8] sm:$0xff] %vm3574, %v3313
        %5187 = vst.msk [vmem:[%s176 + $0x4e0] sm:$0xff] %vm3574, %v3314
        %5188 = vst.msk [vmem:[%s176 + $0x4e8] sm:$0xff] %vm3574, %v3315
        %5189 = vst.msk [vmem:[%s176 + $0x4f0] sm:$0xff] %vm3574, %v3316
        %5190 = vst.msk [vmem:[%s176 + $0x4f8] sm:$0xff] %vm3574, %v3317
        %5191 = vst.msk [vmem:[%s176 + $0x500] sm:$0xff] %vm3574, %v3318
        %5192 = vst.msk [vmem:[%s176 + $0x508] sm:$0xff] %vm3574, %v3319
        %5193 = vst.msk [vmem:[%s176 + $0x510] sm:$0xff] %vm3574, %v3320
        %5194 = vst.msk [vmem:[%s176 + $0x518] sm:$0xff] %vm3574, %v3321
        %5195 = vst.msk [vmem:[%s176 + $0x520] sm:$0xff] %vm3574, %v3322
        %5196 = vst.msk [vmem:[%s176 + $0x528] sm:$0xff] %vm3574, %v3323
        %5197 = vst.msk [vmem:[%s176 + $0x530] sm:$0xff] %vm3574, %v3324
        %5198 = vst.msk [vmem:[%s176 + $0x538] sm:$0xff] %vm3574, %v3325
        %5199 = vst.msk [vmem:[%s176 + $0x540] sm:$0xff] %vm3574, %v3326
        %5200 = vst.msk [vmem:[%s176 + $0x548] sm:$0xff] %vm3574, %v3327
        %5201 = vst.msk [vmem:[%s176 + $0x550] sm:$0xff] %vm3574, %v3328
        %5202 = vst.msk [vmem:[%s176 + $0x558] sm:$0xff] %vm3574, %v3329
        %5203 = vst.msk [vmem:[%s176 + $0x560] sm:$0xff] %vm3574, %v3330
        %5204 = vst.msk [vmem:[%s176 + $0x568] sm:$0xff] %vm3574, %v3331
        %5205 = vst.msk [vmem:[%s176 + $0x570] sm:$0xff] %vm3574, %v3332
        %5206 = vst.msk [vmem:[%s176 + $0x578] sm:$0xff] %vm3574, %v3333
        %5207 = vst.msk [vmem:[%s176 + $0x580] sm:$0xff] %vm3574, %v3334
        %5208 = vst.msk [vmem:[%s176 + $0x588] sm:$0xff] %vm3574, %v3335
        %5209 = vst.msk [vmem:[%s176 + $0x590] sm:$0xff] %vm3574, %v3336
        %5210 = vst.msk [vmem:[%s176 + $0x598] sm:$0xff] %vm3574, %v3337
        %5211 = vst.msk [vmem:[%s176 + $0x5a0] sm:$0xff] %vm3574, %v3338
        %5212 = vst.msk [vmem:[%s176 + $0x5a8] sm:$0xff] %vm3574, %v3339
        %5213 = vst.msk [vmem:[%s176 + $0x5b0] sm:$0xff] %vm3574, %v3340
        %5214 = vst.msk [vmem:[%s176 + $0x5b8] sm:$0xff] %vm3574, %v3341
        %5215 = vst.msk [vmem:[%s176 + $0x5c0] sm:$0xff] %vm3574, %v3342
        %5216 = vst.msk [vmem:[%s176 + $0x5c8] sm:$0xff] %vm3574, %v3343
        %5217 = vst.msk [vmem:[%s176 + $0x5d0] sm:$0xff] %vm3574, %v3344
        %5218 = vst.msk [vmem:[%s176 + $0x5d8] sm:$0xff] %vm3574, %v3345
        %5219 = vst.msk [vmem:[%s176 + $0x5e0] sm:$0xff] %vm3574, %v3346
        %5220 = vst.msk [vmem:[%s176 + $0x5e8] sm:$0xff] %vm3574, %v3347
        %5221 = vst.msk [vmem:[%s176 + $0x5f0] sm:$0xff] %vm3574, %v3348
        %5222 = vst.msk [vmem:[%s176 + $0x5f8] sm:$0xff] %vm3574, %v3349
        %5223 = vst.msk [vmem:[%s176 + $0x600] sm:$0xff] %vm3574, %v3350
        %5224 = vst.msk [vmem:[%s176 + $0x608] sm:$0xff] %vm3574, %v3351
        %5225 = vst.msk [vmem:[%s176 + $0x610] sm:$0xff] %vm3574, %v3352
        %5226 = vst.msk [vmem:[%s176 + $0x618] sm:$0xff] %vm3574, %v3353
        %5227 = vst.msk [vmem:[%s176 + $0x620] sm:$0xff] %vm3574, %v3354
        %5228 = vst.msk [vmem:[%s176 + $0x628] sm:$0xff] %vm3574, %v3355
        %5229 = vst.msk [vmem:[%s176 + $0x630] sm:$0xff] %vm3574, %v3356
        %5230 = vst.msk [vmem:[%s176 + $0x638] sm:$0xff] %vm3574, %v3357
        %5231 = vst.msk [vmem:[%s176 + $0x640] sm:$0xff] %vm3574, %v3358
        %5232 = vst.msk [vmem:[%s176 + $0x648] sm:$0xff] %vm3574, %v3359
        %5233 = vst.msk [vmem:[%s176 + $0x650] sm:$0xff] %vm3574, %v3360
        %5234 = vst.msk [vmem:[%s176 + $0x658] sm:$0xff] %vm3574, %v3361
        %5235 = vst.msk [vmem:[%s176 + $0x660] sm:$0xff] %vm3574, %v3362
        %5236 = vst.msk [vmem:[%s176 + $0x668] sm:$0xff] %vm3574, %v3363
        %5237 = vst.msk [vmem:[%s176 + $0x670] sm:$0xff] %vm3574, %v3364
        %5238 = vst.msk [vmem:[%s176 + $0x678] sm:$0xff] %vm3574, %v3365
        %5239 = vst.msk [vmem:[%s176 + $0x680] sm:$0xff] %vm3574, %v3366
        %5240 = vst.msk [vmem:[%s176 + $0x688] sm:$0xff] %vm3574, %v3367
        %5241 = vst.msk [vmem:[%s176 + $0x690] sm:$0xff] %vm3574, %v3368
        %5242 = vst.msk [vmem:[%s176 + $0x698] sm:$0xff] %vm3574, %v3369
        %5243 = vst.msk [vmem:[%s176 + $0x6a0] sm:$0xff] %vm3574, %v3370
        %5244 = vst.msk [vmem:[%s176 + $0x6a8] sm:$0xff] %vm3574, %v3371
        %5245 = vst.msk [vmem:[%s176 + $0x6b0] sm:$0xff] %vm3574, %v3372
        %5246 = vst.msk [vmem:[%s176 + $0x6b8] sm:$0xff] %vm3574, %v3373
        %5247 = vst.msk [vmem:[%s176 + $0x6c0] sm:$0xff] %vm3574, %v3374
        %5248 = vst.msk [vmem:[%s176 + $0x6c8] sm:$0xff] %vm3574, %v3375
        %5249 = vst.msk [vmem:[%s176 + $0x6d0] sm:$0xff] %vm3574, %v3376
        %5250 = vst.msk [vmem:[%s176 + $0x6d8] sm:$0xff] %vm3574, %v3377
        %5251 = vst.msk [vmem:[%s176 + $0x6e0] sm:$0xff] %vm3574, %v3378
        %5252 = vst.msk [vmem:[%s176 + $0x6e8] sm:$0xff] %vm3574, %v3379
        %5253 = vst.msk [vmem:[%s176 + $0x6f0] sm:$0xff] %vm3574, %v3380
        %5254 = vst.msk [vmem:[%s176 + $0x6f8] sm:$0xff] %vm3574, %v3381
        %5255 = vst.msk [vmem:[%s176 + $0x700] sm:$0xff] %vm3574, %v3382
        %5256 = vst.msk [vmem:[%s176 + $0x708] sm:$0xff] %vm3574, %v3383
        %5257 = vst.msk [vmem:[%s176 + $0x710] sm:$0xff] %vm3574, %v3384
        %5258 = vst.msk [vmem:[%s176 + $0x718] sm:$0xff] %vm3574, %v3385
        %5259 = vst.msk [vmem:[%s176 + $0x720] sm:$0xff] %vm3574, %v3386
        %5260 = vst.msk [vmem:[%s176 + $0x728] sm:$0xff] %vm3574, %v3387
        %5261 = vst.msk [vmem:[%s176 + $0x730] sm:$0xff] %vm3574, %v3388
        %5262 = vst.msk [vmem:[%s176 + $0x738] sm:$0xff] %vm3574, %v3389
        %5263 = vst.msk [vmem:[%s176 + $0x740] sm:$0xff] %vm3574, %v3390
        %5264 = vst.msk [vmem:[%s176 + $0x748] sm:$0xff] %vm3574, %v3391
        %5265 = vst.msk [vmem:[%s176 + $0x750] sm:$0xff] %vm3574, %v3392
        %5266 = vst.msk [vmem:[%s176 + $0x758] sm:$0xff] %vm3574, %v3393
        %5267 = vst.msk [vmem:[%s176 + $0x760] sm:$0xff] %vm3574, %v3394
        %5268 = vst.msk [vmem:[%s176 + $0x768] sm:$0xff] %vm3574, %v3395
        %5269 = vst.msk [vmem:[%s176 + $0x770] sm:$0xff] %vm3574, %v3396
        %5270 = vst.msk [vmem:[%s176 + $0x778] sm:$0xff] %vm3574, %v3397
        %5271 = vst.msk [vmem:[%s176 + $0x780] sm:$0xff] %vm3574, %v3398
        %5272 = vst.msk [vmem:[%s176 + $0x788] sm:$0xff] %vm3574, %v3399
        %5273 = vst.msk [vmem:[%s176 + $0x790] sm:$0xff] %vm3574, %v3400
        %5274 = vst.msk [vmem:[%s176 + $0x798] sm:$0xff] %vm3574, %v3401
        %5275 = vst.msk [vmem:[%s176 + $0x7a0] sm:$0xff] %vm3574, %v3402
        %5276 = vst.msk [vmem:[%s176 + $0x7a8] sm:$0xff] %vm3574, %v3403
        %5277 = vst.msk [vmem:[%s176 + $0x7b0] sm:$0xff] %vm3574, %v3404
        %5278 = vst.msk [vmem:[%s176 + $0x7b8] sm:$0xff] %vm3574, %v3405
        %5279 = vst.msk [vmem:[%s176 + $0x7c0] sm:$0xff] %vm3574, %v3406
        %5280 = vst.msk [vmem:[%s176 + $0x7c8] sm:$0xff] %vm3574, %v3407
        %5281 = vst.msk [vmem:[%s176 + $0x7d0] sm:$0xff] %vm3574, %v3408
        %5282 = vst.msk [vmem:[%s176 + $0x7d8] sm:$0xff] %vm3574, %v3409
        %5283 = vst.msk [vmem:[%s176 + $0x7e0] sm:$0xff] %vm3574, %v3410
        %5284 = vst.msk [vmem:[%s176 + $0x7e8] sm:$0xff] %vm3574, %v3411
        %5285 = vst.msk [vmem:[%s176 + $0x7f0] sm:$0xff] %vm3574, %v3412
        %5286 = vst.msk [vmem:[%s176 + $0x7f8] sm:$0xff] %vm3574, %v3413
        %5287 = vst.msk [vmem:[%s176 + $0x800] sm:$0xff] %vm3574, %v3414
        %5288 = vst.msk [vmem:[%s176 + $0x808] sm:$0xff] %vm3574, %v3415
        %5289 = vst.msk [vmem:[%s176 + $0x810] sm:$0xff] %vm3574, %v3416
        %5290 = vst.msk [vmem:[%s176 + $0x818] sm:$0xff] %vm3574, %v3417
        %5291 = vst.msk [vmem:[%s176 + $0x820] sm:$0xff] %vm3574, %v3418
        %5292 = vst.msk [vmem:[%s176 + $0x828] sm:$0xff] %vm3574, %v3419
        %5293 = vst.msk [vmem:[%s176 + $0x830] sm:$0xff] %vm3574, %v3420
        %5294 = vst.msk [vmem:[%s176 + $0x838] sm:$0xff] %vm3574, %v3421
        %5295 = vst.msk [vmem:[%s176 + $0x840] sm:$0xff] %vm3574, %v3422
        %5296 = vst.msk [vmem:[%s176 + $0x848] sm:$0xff] %vm3574, %v3423
        %5297 = vst.msk [vmem:[%s176 + $0x850] sm:$0xff] %vm3574, %v3424
        %5298 = vst.msk [vmem:[%s176 + $0x858] sm:$0xff] %vm3574, %v3425
        %5299 = vst.msk [vmem:[%s176 + $0x860] sm:$0xff] %vm3574, %v3426
        %5300 = vst.msk [vmem:[%s176 + $0x868] sm:$0xff] %vm3574, %v3427
        %5301 = vst.msk [vmem:[%s176 + $0x870] sm:$0xff] %vm3574, %v3428
        %5302 = vst.msk [vmem:[%s176 + $0x878] sm:$0xff] %vm3574, %v3429
        %5303 = vst.msk [vmem:[%s176 + $0x880] sm:$0xff] %vm3574, %v3430
        %5304 = vst.msk [vmem:[%s176 + $0x888] sm:$0xff] %vm3574, %v3431
        %5305 = vst.msk [vmem:[%s176 + $0x890] sm:$0xff] %vm3574, %v3432
        %5306 = vst.msk [vmem:[%s176 + $0x898] sm:$0xff] %vm3574, %v3433
        %5307 = vst.msk [vmem:[%s176 + $0x8a0] sm:$0xff] %vm3574, %v3434
        %5308 = vst.msk [vmem:[%s176 + $0x8a8] sm:$0xff] %vm3574, %v3435
        %5309 = vst.msk [vmem:[%s176 + $0x8b0] sm:$0xff] %vm3574, %v3436
        %5310 = vst.msk [vmem:[%s176 + $0x8b8] sm:$0xff] %vm3574, %v3437
        %5311 = vst.msk [vmem:[%s176 + $0x8c0] sm:$0xff] %vm3574, %v3438
        %5312 = vst.msk [vmem:[%s176 + $0x8c8] sm:$0xff] %vm3574, %v3439
        %5313 = vst.msk [vmem:[%s176 + $0x8d0] sm:$0xff] %vm3574, %v3440
        %5314 = vst.msk [vmem:[%s176 + $0x8d8] sm:$0xff] %vm3574, %v3441
        %5315 = vst.msk [vmem:[%s176 + $0x8e0] sm:$0xff] %vm3574, %v3442
        %5316 = vst.msk [vmem:[%s176 + $0x8e8] sm:$0xff] %vm3574, %v3443
        %5317 = vst.msk [vmem:[%s176 + $0x8f0] sm:$0xff] %vm3574, %v3444
        %5318 = vst.msk [vmem:[%s176 + $0x8f8] sm:$0xff] %vm3574, %v3445
        %5319 = vst.msk [vmem:[%s176 + $0x900] sm:$0xff] %vm3574, %v3446
        %5320 = vst.msk [vmem:[%s176 + $0x908] sm:$0xff] %vm3574, %v3447
        %5321 = vst.msk [vmem:[%s176 + $0x910] sm:$0xff] %vm3574, %v3448
        %5322 = vst.msk [vmem:[%s176 + $0x918] sm:$0xff] %vm3574, %v3449
        %5323 = vst.msk [vmem:[%s176 + $0x920] sm:$0xff] %vm3574, %v3450
        %5324 = vst.msk [vmem:[%s176 + $0x928] sm:$0xff] %vm3574, %v3451
        %5325 = vst.msk [vmem:[%s176 + $0x930] sm:$0xff] %vm3574, %v3452
        %5326 = vst.msk [vmem:[%s176 + $0x938] sm:$0xff] %vm3574, %v3453
        %5327 = vst.msk [vmem:[%s176 + $0x940] sm:$0xff] %vm3574, %v3454
        %5328 = vst.msk [vmem:[%s176 + $0x948] sm:$0xff] %vm3574, %v3455
        %5329 = vst.msk [vmem:[%s176 + $0x950] sm:$0xff] %vm3574, %v3456
        %5330 = vst.msk [vmem:[%s176 + $0x958] sm:$0xff] %vm3574, %v3457
        %5331 = vst.msk [vmem:[%s176 + $0x960] sm:$0xff] %vm3574, %v3458
        %5332 = vst.msk [vmem:[%s176 + $0x968] sm:$0xff] %vm3574, %v3459
        %5333 = vst.msk [vmem:[%s176 + $0x970] sm:$0xff] %vm3574, %v3460
        %5334 = vst.msk [vmem:[%s176 + $0x978] sm:$0xff] %vm3574, %v3461
        %5335 = vst.msk [vmem:[%s176 + $0x980] sm:$0xff] %vm3574, %v3462
        %5336 = vst.msk [vmem:[%s176 + $0x988] sm:$0xff] %vm3574, %v3463
        %5337 = vst.msk [vmem:[%s176 + $0x990] sm:$0xff] %vm3574, %v3464
        %5338 = vst.msk [vmem:[%s176 + $0x998] sm:$0xff] %vm3574, %v3465
        %5339 = vst.msk [vmem:[%s176 + $0x9a0] sm:$0xff] %vm3574, %v3466
        %5340 = vst.msk [vmem:[%s176 + $0x9a8] sm:$0xff] %vm3574, %v3467
        %5341 = vst.msk [vmem:[%s176 + $0x9b0] sm:$0xff] %vm3574, %v3468
        %5342 = vst.msk [vmem:[%s176 + $0x9b8] sm:$0xff] %vm3574, %v3469
        %5343 = vst.msk [vmem:[%s176 + $0x9c0] sm:$0xff] %vm3574, %v3470
        %5344 = vst.msk [vmem:[%s176 + $0x9c8] sm:$0xff] %vm3574, %v3471
        %5345 = vst.msk [vmem:[%s176 + $0x9d0] sm:$0xff] %vm3574, %v3472
        %5346 = vst.msk [vmem:[%s176 + $0x9d8] sm:$0xff] %vm3574, %v3473
        %5347 = vst.msk [vmem:[%s176 + $0x9e0] sm:$0xff] %vm3574, %v3474
        %5348 = vst.msk [vmem:[%s176 + $0x9e8] sm:$0xff] %vm3574, %v3475
        %5349 = vst.msk [vmem:[%s176 + $0x9f0] sm:$0xff] %vm3574, %v3476
        %5350 = vst.msk [vmem:[%s176 + $0x9f8] sm:$0xff] %vm3574, %v3477
        %5351 = vst.msk [vmem:[%s176 + $0xa00] sm:$0xff] %vm3574, %v3478
        %5352 = vst.msk [vmem:[%s176 + $0xa08] sm:$0xff] %vm3574, %v3479
        %5353 = vst.msk [vmem:[%s176 + $0xa10] sm:$0xff] %vm3574, %v3480
        %5354 = vst.msk [vmem:[%s176 + $0xa18] sm:$0xff] %vm3574, %v3481
        %5355 = vst.msk [vmem:[%s176 + $0xa20] sm:$0xff] %vm3574, %v3482
        %5356 = vst.msk [vmem:[%s176 + $0xa28] sm:$0xff] %vm3574, %v3483
        %5357 = vst.msk [vmem:[%s176 + $0xa30] sm:$0xff] %vm3574, %v3484
        %5358 = vst.msk [vmem:[%s176 + $0xa38] sm:$0xff] %vm3574, %v3485
        %5359 = vst.msk [vmem:[%s176 + $0xa40] sm:$0xff] %vm3574, %v3486
        %5360 = vst.msk [vmem:[%s176 + $0xa48] sm:$0xff] %vm3574, %v3487
        %5361 = vst.msk [vmem:[%s176 + $0xa50] sm:$0xff] %vm3574, %v3488
        %5362 = vst.msk [vmem:[%s176 + $0xa58] sm:$0xff] %vm3574, %v3489
        %5363 = vst.msk [vmem:[%s176 + $0xa60] sm:$0xff] %vm3574, %v3490
        %5364 = vst.msk [vmem:[%s176 + $0xa68] sm:$0xff] %vm3574, %v3491
        %5365 = vst.msk [vmem:[%s176 + $0xa70] sm:$0xff] %vm3574, %v3492
        %5366 = vst.msk [vmem:[%s176 + $0xa78] sm:$0xff] %vm3574, %v3493
        %5367 = vst.msk [vmem:[%s176 + $0xa80] sm:$0xff] %vm3574, %v3494
        %5368 = vst.msk [vmem:[%s176 + $0xa88] sm:$0xff] %vm3574, %v3495
        %5369 = vst.msk [vmem:[%s176 + $0xa90] sm:$0xff] %vm3574, %v3496
        %5370 = vst.msk [vmem:[%s176 + $0xa98] sm:$0xff] %vm3574, %v3497
        %5371 = vst.msk [vmem:[%s176 + $0xaa0] sm:$0xff] %vm3574, %v3498
        %5372 = vst.msk [vmem:[%s176 + $0xaa8] sm:$0xff] %vm3574, %v3499
        %5373 = vst.msk [vmem:[%s176 + $0xab0] sm:$0xff] %vm3574, %v3500
        %5374 = vst.msk [vmem:[%s176 + $0xab8] sm:$0xff] %vm3574, %v3501
        %5375 = vst.msk [vmem:[%s176 + $0xac0] sm:$0xff] %vm3574, %v3502
        %5376 = vst.msk [vmem:[%s176 + $0xac8] sm:$0xff] %vm3574, %v3503
        %5377 = vst.msk [vmem:[%s176 + $0xad0] sm:$0xff] %vm3574, %v3504
        %5378 = vst.msk [vmem:[%s176 + $0xad8] sm:$0xff] %vm3574, %v3505
        %5379 = vst.msk [vmem:[%s176 + $0xae0] sm:$0xff] %vm3574, %v3506
        %5380 = vst.msk [vmem:[%s176 + $0xae8] sm:$0xff] %vm3574, %v3507
        %5381 = vst.msk [vmem:[%s176 + $0xaf0] sm:$0xff] %vm3574, %v3508
        %5382 = vst.msk [vmem:[%s176 + $0xaf8] sm:$0xff] %vm3574, %v3509
        %5383 = vst.msk [vmem:[%s176 + $0xb00] sm:$0xff] %vm3574, %v3510
        %5384 = vst.msk [vmem:[%s176 + $0xb08] sm:$0xff] %vm3574, %v3511
        %5385 = vst.msk [vmem:[%s176 + $0xb10] sm:$0xff] %vm3574, %v3512
        %5386 = vst.msk [vmem:[%s176 + $0xb18] sm:$0xff] %vm3574, %v3513
        %5387 = vst.msk [vmem:[%s176 + $0xb20] sm:$0xff] %vm3574, %v3514
        %5388 = vst.msk [vmem:[%s176 + $0xb28] sm:$0xff] %vm3574, %v3515
        %5389 = vst.msk [vmem:[%s176 + $0xb30] sm:$0xff] %vm3574, %v3516
        %5390 = vst.msk [vmem:[%s176 + $0xb38] sm:$0xff] %vm3574, %v3517
        %5391 = vst.msk [vmem:[%s176 + $0xb40] sm:$0xff] %vm3574, %v3518
        %5392 = vst.msk [vmem:[%s176 + $0xb48] sm:$0xff] %vm3574, %v3519
        %5393 = vst.msk [vmem:[%s176 + $0xb50] sm:$0xff] %vm3574, %v3520
        %5394 = vst.msk [vmem:[%s176 + $0xb58] sm:$0xff] %vm3574, %v3521
        %5395 = vst.msk [vmem:[%s176 + $0xb60] sm:$0xff] %vm3574, %v3522
        %5396 = vst.msk [vmem:[%s176 + $0xb68] sm:$0xff] %vm3574, %v3523
        %5397 = vst.msk [vmem:[%s176 + $0xb70] sm:$0xff] %vm3574, %v3524
        %5398 = vst.msk [vmem:[%s176 + $0xb78] sm:$0xff] %vm3574, %v3525
        %5399 = vst.msk [vmem:[%s176 + $0xb80] sm:$0xff] %vm3574, %v3526
        %5400 = vst.msk [vmem:[%s176 + $0xb88] sm:$0xff] %vm3574, %v3527
        %5401 = vst.msk [vmem:[%s176 + $0xb90] sm:$0xff] %vm3574, %v3528
        %5402 = vst.msk [vmem:[%s176 + $0xb98] sm:$0xff] %vm3574, %v3529
        %5403 = vst.msk [vmem:[%s176 + $0xba0] sm:$0xff] %vm3574, %v3530
        %5404 = vst.msk [vmem:[%s176 + $0xba8] sm:$0xff] %vm3574, %v3531
        %5405 = vst.msk [vmem:[%s176 + $0xbb0] sm:$0xff] %vm3574, %v3532
        %5406 = vst.msk [vmem:[%s176 + $0xbb8] sm:$0xff] %vm3574, %v3533
        %5407 = vst.msk [vmem:[%s176 + $0xbc0] sm:$0xff] %vm3574, %v3534
        %5408 = vst.msk [vmem:[%s176 + $0xbc8] sm:$0xff] %vm3574, %v3535
        %5409 = vst.msk [vmem:[%s176 + $0xbd0] sm:$0xff] %vm3574, %v3536
        %5410 = vst.msk [vmem:[%s176 + $0xbd8] sm:$0xff] %vm3574, %v3537
        %5411 = vst.msk [vmem:[%s176 + $0xbe0] sm:$0xff] %vm3574, %v3538
        %5412 = vst.msk [vmem:[%s176 + $0xbe8] sm:$0xff] %vm3574, %v3539
        %5413 = vst.msk [vmem:[%s176 + $0xbf0] sm:$0xff] %vm3574, %v3540
        %5414 = vst.msk [vmem:[%s176 + $0xbf8] sm:$0xff] %vm3574, %v3541
        %5415 = vst.msk [vmem:[%s176 + $0xc00] sm:$0xff] %vm3574, %v3542
        %5416 = vst.msk [vmem:[%s176 + $0xc08] sm:$0xff] %vm3574, %v3543
        %5417 = vst.msk [vmem:[%s176 + $0xc10] sm:$0xff] %vm3574, %v3544
        %5418 = vst.msk [vmem:[%s176 + $0xc18] sm:$0xff] %vm3574, %v3545
        %5419 = vst.msk [vmem:[%s176 + $0xc20] sm:$0xff] %vm3574, %v3546
        %5420 = vst.msk [vmem:[%s176 + $0xc28] sm:$0xff] %vm3574, %v3547
        %5421 = vst.msk [vmem:[%s176 + $0xc30] sm:$0xff] %vm3574, %v3548
        %5422 = vst.msk [vmem:[%s176 + $0xc38] sm:$0xff] %vm3574, %v3549
        %5423 = vst.msk [vmem:[%s176 + $0xc40] sm:$0xff] %vm3574, %v3550
        %5424 = vst.msk [vmem:[%s176 + $0xc48] sm:$0xff] %vm3574, %v3551
        %5425 = vst.msk [vmem:[%s176 + $0xc50] sm:$0xff] %vm3574, %v3552
        %5426 = vst.msk [vmem:[%s176 + $0xc58] sm:$0xff] %vm3574, %v3553
        %5427 = vst.msk [vmem:[%s176 + $0xc60] sm:$0xff] %vm3574, %v3554
        %5428 = vst.msk [vmem:[%s176 + $0xc68] sm:$0xff] %vm3574, %v3555
        %5429 = vst.msk [vmem:[%s176 + $0xc70] sm:$0xff] %vm3574, %v3556
        %5430 = vst.msk [vmem:[%s176 + $0xc78] sm:$0xff] %vm3574, %v3557
        %5431 = vst.msk [vmem:[%s176 + $0xc80] sm:$0xff] %vm3574, %v3558
        %5432 = vst.msk [vmem:[%s176 + $0xc88] sm:$0xff] %vm3574, %v3559
        %5433 = vst.msk [vmem:[%s176 + $0xc90] sm:$0xff] %vm3574, %v3560
        %5434 = vst.msk [vmem:[%s176 + $0xc98] sm:$0xff] %vm3574, %v3561
        %5435 = vst.msk [vmem:[%s176 + $0xca0] sm:$0xff] %vm3574, %v3562
        %5436 = vst.msk [vmem:[%s176 + $0xca8] sm:$0xff] %vm3574, %v3563
        %5437 = vst.msk [vmem:[%s176 + $0xcb0] sm:$0xff] %vm3574, %v3564
        %5438 = vst.msk [vmem:[%s176 + $0xcb8] sm:$0xff] %vm3574, %v3565
        %5439 = vst.msk [vmem:[%s176 + $0xcc0] sm:$0xff] %vm3574, %v3566
        %5440 = vst.msk [vmem:[%s176 + $0xcc8] sm:$0xff] %vm3574, %v3567
        %5441 = vst.msk [vmem:[%s176 + $0xcd0] sm:$0xff] %vm3574, %v3568
        %5442 = vst.msk [vmem:[%s176 + $0xcd8] sm:$0xff] %vm3574, %v3569
        %5443 = vst.msk [vmem:[%s176 + $0xce0] sm:$0xff] %vm3574, %v3570
        %5444 = vst.msk [vmem:[%s176 + $0xce8] sm:$0xff] %vm3574, %v3571
        %5445 = vst.msk [vmem:[%s176 + $0xcf0] sm:$0xff] %vm3574, %v3572
        %5446 = vst.msk [vmem:[%s176 + $0xcf8] sm:$0xff] %vm3574, %v3573
        %5447 = vrot.lane.b32.xlu0 %v3587, 64
        %v5448 = vpop.permute.xlu0 %5447
        %5449 = vrot.lane.b32.xlu0 %v3600, 64
        %v5450 = vpop.permute.xlu0 %5449
        %5451 = vrot.lane.b32.xlu0 %v3613, 64
        %v5452 = vpop.permute.xlu0 %5451
        %5453 = vrot.lane.b32.xlu0 %v3626, 64
        %v5454 = vpop.permute.xlu0 %5453
        %5455 = vrot.lane.b32.xlu0 %v3639, 64
        %v5456 = vpop.permute.xlu0 %5455
        %5457 = vrot.lane.b32.xlu0 %v3652, 64
        %v5458 = vpop.permute.xlu0 %5457
        %5459 = vrot.lane.b32.xlu0 %v3665, 64
        %v5460 = vpop.permute.xlu0 %5459
        %5461 = vrot.lane.b32.xlu0 %v3678, 64
        %v5462 = vpop.permute.xlu0 %5461
        %5463 = vrot.lane.b32.xlu0 %v3691, 64
        %v5464 = vpop.permute.xlu0 %5463
        %5465 = vrot.lane.b32.xlu0 %v3704, 64
        %v5466 = vpop.permute.xlu0 %5465
        %5467 = vrot.lane.b32.xlu0 %v3717, 64
        %v5468 = vpop.permute.xlu0 %5467
        %5469 = vrot.lane.b32.xlu0 %v3730, 64
        %v5470 = vpop.permute.xlu0 %5469
        %5471 = vrot.lane.b32.xlu0 %v3743, 64
        %v5472 = vpop.permute.xlu0 %5471
        %5473 = vrot.lane.b32.xlu0 %v3756, 64
        %v5474 = vpop.permute.xlu0 %5473
        %5475 = vrot.lane.b32.xlu0 %v3769, 64
        %v5476 = vpop.permute.xlu0 %5475
        %5477 = vrot.lane.b32.xlu0 %v3782, 64
        %v5478 = vpop.permute.xlu0 %5477
        %5479 = vrot.lane.b32.xlu0 %v3795, 64
        %v5480 = vpop.permute.xlu0 %5479
        %5481 = vrot.lane.b32.xlu0 %v3808, 64
        %v5482 = vpop.permute.xlu0 %5481
        %5483 = vrot.lane.b32.xlu0 %v3821, 64
        %v5484 = vpop.permute.xlu0 %5483
        %5485 = vrot.lane.b32.xlu0 %v3834, 64
        %v5486 = vpop.permute.xlu0 %5485
        %5487 = vrot.lane.b32.xlu0 %v3847, 64
        %v5488 = vpop.permute.xlu0 %5487
        %5489 = vrot.lane.b32.xlu0 %v3860, 64
        %v5490 = vpop.permute.xlu0 %5489
        %5491 = vrot.lane.b32.xlu0 %v3873, 64
        %v5492 = vpop.permute.xlu0 %5491
        %5493 = vrot.lane.b32.xlu0 %v3886, 64
        %v5494 = vpop.permute.xlu0 %5493
        %5495 = vrot.lane.b32.xlu0 %v3899, 64
        %v5496 = vpop.permute.xlu0 %5495
        %5497 = vrot.lane.b32.xlu0 %v3912, 64
        %v5498 = vpop.permute.xlu0 %5497
        %5499 = vrot.lane.b32.xlu0 %v3925, 64
        %v5500 = vpop.permute.xlu0 %5499
        %5501 = vrot.lane.b32.xlu0 %v3938, 64
        %v5502 = vpop.permute.xlu0 %5501
        %5503 = vrot.lane.b32.xlu0 %v3951, 64
        %v5504 = vpop.permute.xlu0 %5503
        %5505 = vrot.lane.b32.xlu0 %v3964, 64
        %v5506 = vpop.permute.xlu0 %5505
        %5507 = vrot.lane.b32.xlu0 %v3977, 64
        %v5508 = vpop.permute.xlu0 %5507
        %5509 = vrot.lane.b32.xlu0 %v3990, 64
        %v5510 = vpop.permute.xlu0 %5509
        %5511 = vrot.lane.b32.xlu0 %v4003, 64
        %v5512 = vpop.permute.xlu0 %5511
        %5513 = vrot.lane.b32.xlu0 %v4016, 64
        %v5514 = vpop.permute.xlu0 %5513
        %5515 = vrot.lane.b32.xlu0 %v4029, 64
        %v5516 = vpop.permute.xlu0 %5515
        %5517 = vrot.lane.b32.xlu0 %v4042, 64
        %v5518 = vpop.permute.xlu0 %5517
        %5519 = vrot.lane.b32.xlu0 %v4055, 64
        %v5520 = vpop.permute.xlu0 %5519
        %5521 = vrot.lane.b32.xlu0 %v4068, 64
        %v5522 = vpop.permute.xlu0 %5521
        %5523 = vrot.lane.b32.xlu0 %v4081, 64
        %v5524 = vpop.permute.xlu0 %5523
        %5525 = vrot.lane.b32.xlu0 %v4094, 64
        %v5526 = vpop.permute.xlu0 %5525
        %5527 = vrot.lane.b32.xlu0 %v4107, 64
        %v5528 = vpop.permute.xlu0 %5527
        %5529 = vrot.lane.b32.xlu0 %v4120, 64
        %v5530 = vpop.permute.xlu0 %5529
        %5531 = vrot.lane.b32.xlu0 %v4133, 64
        %v5532 = vpop.permute.xlu0 %5531
        %5533 = vrot.lane.b32.xlu0 %v4146, 64
        %v5534 = vpop.permute.xlu0 %5533
        %5535 = vrot.lane.b32.xlu0 %v4159, 64
        %v5536 = vpop.permute.xlu0 %5535
        %5537 = vrot.lane.b32.xlu0 %v4172, 64
        %v5538 = vpop.permute.xlu0 %5537
        %5539 = vrot.lane.b32.xlu0 %v4185, 64
        %v5540 = vpop.permute.xlu0 %5539
        %5541 = vrot.lane.b32.xlu0 %v4198, 64
        %v5542 = vpop.permute.xlu0 %5541
        %5543 = vrot.lane.b32.xlu0 %v4211, 64
        %v5544 = vpop.permute.xlu0 %5543
        %5545 = vrot.lane.b32.xlu0 %v4224, 64
        %v5546 = vpop.permute.xlu0 %5545
        %5547 = vrot.lane.b32.xlu0 %v4237, 64
        %v5548 = vpop.permute.xlu0 %5547
        %5549 = vrot.lane.b32.xlu0 %v4250, 64
        %v5550 = vpop.permute.xlu0 %5549
        %5551 = vrot.lane.b32.xlu0 %v4263, 64
        %v5552 = vpop.permute.xlu0 %5551
        %5553 = vrot.lane.b32.xlu0 %v4276, 64
        %v5554 = vpop.permute.xlu0 %5553
        %5555 = vrot.lane.b32.xlu0 %v4289, 64
        %v5556 = vpop.permute.xlu0 %5555
        %5557 = vrot.lane.b32.xlu0 %v4302, 64
        %v5558 = vpop.permute.xlu0 %5557
        %5559 = vrot.lane.b32.xlu0 %v4315, 64
        %v5560 = vpop.permute.xlu0 %5559
        %5561 = vrot.lane.b32.xlu0 %v4328, 64
        %v5562 = vpop.permute.xlu0 %5561
        %5563 = vrot.lane.b32.xlu0 %v4341, 64
        %v5564 = vpop.permute.xlu0 %5563
        %5565 = vrot.lane.b32.xlu0 %v4354, 64
        %v5566 = vpop.permute.xlu0 %5565
        %5567 = vrot.lane.b32.xlu0 %v4367, 64
        %v5568 = vpop.permute.xlu0 %5567
        %5569 = vrot.lane.b32.xlu0 %v4380, 64
        %v5570 = vpop.permute.xlu0 %5569
        %5571 = vrot.lane.b32.xlu0 %v4393, 64
        %v5572 = vpop.permute.xlu0 %5571
        %5573 = vrot.lane.b32.xlu0 %v4406, 64
        %v5574 = vpop.permute.xlu0 %5573
        %5575 = vrot.lane.b32.xlu0 %v4419, 64
        %v5576 = vpop.permute.xlu0 %5575
        %5577 = vrot.lane.b32.xlu0 %v4432, 64
        %v5578 = vpop.permute.xlu0 %5577
        %5579 = vrot.lane.b32.xlu0 %v4445, 64
        %v5580 = vpop.permute.xlu0 %5579
        %5581 = vrot.lane.b32.xlu0 %v4458, 64
        %v5582 = vpop.permute.xlu0 %5581
        %5583 = vrot.lane.b32.xlu0 %v4471, 64
        %v5584 = vpop.permute.xlu0 %5583
        %5585 = vrot.lane.b32.xlu0 %v4484, 64
        %v5586 = vpop.permute.xlu0 %5585
        %5587 = vrot.lane.b32.xlu0 %v4497, 64
        %v5588 = vpop.permute.xlu0 %5587
        %5589 = vrot.lane.b32.xlu0 %v4510, 64
        %v5590 = vpop.permute.xlu0 %5589
        %5591 = vrot.lane.b32.xlu0 %v4523, 64
        %v5592 = vpop.permute.xlu0 %5591
        %5593 = vrot.lane.b32.xlu0 %v4536, 64
        %v5594 = vpop.permute.xlu0 %5593
        %5595 = vrot.lane.b32.xlu0 %v4549, 64
        %v5596 = vpop.permute.xlu0 %5595
        %5597 = vrot.lane.b32.xlu0 %v4562, 64
        %v5598 = vpop.permute.xlu0 %5597
        %5599 = vrot.lane.b32.xlu0 %v4575, 64
        %v5600 = vpop.permute.xlu0 %5599
        %5601 = vrot.lane.b32.xlu0 %v4588, 64
        %v5602 = vpop.permute.xlu0 %5601
        %5603 = vrot.lane.b32.xlu0 %v4601, 64
        %v5604 = vpop.permute.xlu0 %5603
        %5605 = vrot.lane.b32.xlu0 %v4614, 64
        %v5606 = vpop.permute.xlu0 %5605
        %5607 = vrot.lane.b32.xlu0 %v4627, 64
        %v5608 = vpop.permute.xlu0 %5607
        %5609 = vrot.lane.b32.xlu0 %v4640, 64
        %v5610 = vpop.permute.xlu0 %5609
        %5611 = vrot.lane.b32.xlu0 %v4653, 64
        %v5612 = vpop.permute.xlu0 %5611
        %5613 = vrot.lane.b32.xlu0 %v4666, 64
        %v5614 = vpop.permute.xlu0 %5613
        %5615 = vrot.lane.b32.xlu0 %v4679, 64
        %v5616 = vpop.permute.xlu0 %5615
        %5617 = vrot.lane.b32.xlu0 %v4692, 64
        %v5618 = vpop.permute.xlu0 %5617
        %5619 = vrot.lane.b32.xlu0 %v4705, 64
        %v5620 = vpop.permute.xlu0 %5619
        %5621 = vrot.lane.b32.xlu0 %v4718, 64
        %v5622 = vpop.permute.xlu0 %5621
        %5623 = vrot.lane.b32.xlu0 %v4731, 64
        %v5624 = vpop.permute.xlu0 %5623
        %5625 = vrot.lane.b32.xlu0 %v4744, 64
        %v5626 = vpop.permute.xlu0 %5625
        %5627 = vrot.lane.b32.xlu0 %v4757, 64
        %v5628 = vpop.permute.xlu0 %5627
        %5629 = vrot.lane.b32.xlu0 %v4770, 64
        %v5630 = vpop.permute.xlu0 %5629
        %5631 = vrot.lane.b32.xlu0 %v4783, 64
        %v5632 = vpop.permute.xlu0 %5631
        %5633 = vrot.lane.b32.xlu0 %v4796, 64
        %v5634 = vpop.permute.xlu0 %5633
        %5635 = vrot.lane.b32.xlu0 %v4809, 64
        %v5636 = vpop.permute.xlu0 %5635
        %5637 = vrot.lane.b32.xlu0 %v4822, 64
        %v5638 = vpop.permute.xlu0 %5637
        %5639 = vrot.lane.b32.xlu0 %v4835, 64
        %v5640 = vpop.permute.xlu0 %5639
        %5641 = vrot.lane.b32.xlu0 %v4848, 64
        %v5642 = vpop.permute.xlu0 %5641
        %5643 = vrot.lane.b32.xlu0 %v4861, 64
        %v5644 = vpop.permute.xlu0 %5643
        %5645 = vrot.lane.b32.xlu0 %v4874, 64
        %v5646 = vpop.permute.xlu0 %5645
        %5647 = vrot.lane.b32.xlu0 %v4887, 64
        %v5648 = vpop.permute.xlu0 %5647
        %5649 = vrot.lane.b32.xlu0 %v4900, 64
        %v5650 = vpop.permute.xlu0 %5649
        %5651 = vrot.lane.b32.xlu0 %v4913, 64
        %v5652 = vpop.permute.xlu0 %5651
        %5653 = vrot.lane.b32.xlu0 %v4926, 64
        %v5654 = vpop.permute.xlu0 %5653
        %vm5759 = vcmask 1048064
        %5760 = vst.msk [vmem:[%s176] sm:$0xff] %vm5759, %v5448
        %5761 = vst.msk [vmem:[%s176 + $0x8] sm:$0xff] %vm5759, %v5448
        %5762 = vst.msk [vmem:[%s176 + $0x10] sm:$0xff] %vm5759, %v5448
        %5763 = vst.msk [vmem:[%s176 + $0x18] sm:$0xff] %vm5759, %v5448
        %5764 = vst.msk [vmem:[%s176 + $0x20] sm:$0xff] %vm5759, %v5450
        %5765 = vst.msk [vmem:[%s176 + $0x28] sm:$0xff] %vm5759, %v5450
        %5766 = vst.msk [vmem:[%s176 + $0x30] sm:$0xff] %vm5759, %v5450
        %5767 = vst.msk [vmem:[%s176 + $0x38] sm:$0xff] %vm5759, %v5450
        %5768 = vst.msk [vmem:[%s176 + $0x40] sm:$0xff] %vm5759, %v5452
        %5769 = vst.msk [vmem:[%s176 + $0x48] sm:$0xff] %vm5759, %v5452
        %5770 = vst.msk [vmem:[%s176 + $0x50] sm:$0xff] %vm5759, %v5452
        %5771 = vst.msk [vmem:[%s176 + $0x58] sm:$0xff] %vm5759, %v5452
        %5772 = vst.msk [vmem:[%s176 + $0x60] sm:$0xff] %vm5759, %v5454
        %5773 = vst.msk [vmem:[%s176 + $0x68] sm:$0xff] %vm5759, %v5454
        %5774 = vst.msk [vmem:[%s176 + $0x70] sm:$0xff] %vm5759, %v5454
        %5775 = vst.msk [vmem:[%s176 + $0x78] sm:$0xff] %vm5759, %v5454
        %5776 = vst.msk [vmem:[%s176 + $0x80] sm:$0xff] %vm5759, %v5456
        %5777 = vst.msk [vmem:[%s176 + $0x88] sm:$0xff] %vm5759, %v5456
        %5778 = vst.msk [vmem:[%s176 + $0x90] sm:$0xff] %vm5759, %v5456
        %5779 = vst.msk [vmem:[%s176 + $0x98] sm:$0xff] %vm5759, %v5456
        %5780 = vst.msk [vmem:[%s176 + $0xa0] sm:$0xff] %vm5759, %v5458
        %5781 = vst.msk [vmem:[%s176 + $0xa8] sm:$0xff] %vm5759, %v5458
        %5782 = vst.msk [vmem:[%s176 + $0xb0] sm:$0xff] %vm5759, %v5458
        %5783 = vst.msk [vmem:[%s176 + $0xb8] sm:$0xff] %vm5759, %v5458
        %5784 = vst.msk [vmem:[%s176 + $0xc0] sm:$0xff] %vm5759, %v5460
        %5785 = vst.msk [vmem:[%s176 + $0xc8] sm:$0xff] %vm5759, %v5460
        %5786 = vst.msk [vmem:[%s176 + $0xd0] sm:$0xff] %vm5759, %v5460
        %5787 = vst.msk [vmem:[%s176 + $0xd8] sm:$0xff] %vm5759, %v5460
        %5788 = vst.msk [vmem:[%s176 + $0xe0] sm:$0xff] %vm5759, %v5462
        %5789 = vst.msk [vmem:[%s176 + $0xe8] sm:$0xff] %vm5759, %v5462
        %5790 = vst.msk [vmem:[%s176 + $0xf0] sm:$0xff] %vm5759, %v5462
        %5791 = vst.msk [vmem:[%s176 + $0xf8] sm:$0xff] %vm5759, %v5462
        %5792 = vst.msk [vmem:[%s176 + $0x100] sm:$0xff] %vm5759, %v5464
        %5793 = vst.msk [vmem:[%s176 + $0x108] sm:$0xff] %vm5759, %v5464
        %5794 = vst.msk [vmem:[%s176 + $0x110] sm:$0xff] %vm5759, %v5464
        %5795 = vst.msk [vmem:[%s176 + $0x118] sm:$0xff] %vm5759, %v5464
        %5796 = vst.msk [vmem:[%s176 + $0x120] sm:$0xff] %vm5759, %v5466
        %5797 = vst.msk [vmem:[%s176 + $0x128] sm:$0xff] %vm5759, %v5466
        %5798 = vst.msk [vmem:[%s176 + $0x130] sm:$0xff] %vm5759, %v5466
        %5799 = vst.msk [vmem:[%s176 + $0x138] sm:$0xff] %vm5759, %v5466
        %5800 = vst.msk [vmem:[%s176 + $0x140] sm:$0xff] %vm5759, %v5468
        %5801 = vst.msk [vmem:[%s176 + $0x148] sm:$0xff] %vm5759, %v5468
        %5802 = vst.msk [vmem:[%s176 + $0x150] sm:$0xff] %vm5759, %v5468
        %5803 = vst.msk [vmem:[%s176 + $0x158] sm:$0xff] %vm5759, %v5468
        %5804 = vst.msk [vmem:[%s176 + $0x160] sm:$0xff] %vm5759, %v5470
        %5805 = vst.msk [vmem:[%s176 + $0x168] sm:$0xff] %vm5759, %v5470
        %5806 = vst.msk [vmem:[%s176 + $0x170] sm:$0xff] %vm5759, %v5470
        %5807 = vst.msk [vmem:[%s176 + $0x178] sm:$0xff] %vm5759, %v5470
        %5808 = vst.msk [vmem:[%s176 + $0x180] sm:$0xff] %vm5759, %v5472
        %5809 = vst.msk [vmem:[%s176 + $0x188] sm:$0xff] %vm5759, %v5472
        %5810 = vst.msk [vmem:[%s176 + $0x190] sm:$0xff] %vm5759, %v5472
        %5811 = vst.msk [vmem:[%s176 + $0x198] sm:$0xff] %vm5759, %v5472
        %5812 = vst.msk [vmem:[%s176 + $0x1a0] sm:$0xff] %vm5759, %v5474
        %5813 = vst.msk [vmem:[%s176 + $0x1a8] sm:$0xff] %vm5759, %v5474
        %5814 = vst.msk [vmem:[%s176 + $0x1b0] sm:$0xff] %vm5759, %v5474
        %5815 = vst.msk [vmem:[%s176 + $0x1b8] sm:$0xff] %vm5759, %v5474
        %5816 = vst.msk [vmem:[%s176 + $0x1c0] sm:$0xff] %vm5759, %v5476
        %5817 = vst.msk [vmem:[%s176 + $0x1c8] sm:$0xff] %vm5759, %v5476
        %5818 = vst.msk [vmem:[%s176 + $0x1d0] sm:$0xff] %vm5759, %v5476
        %5819 = vst.msk [vmem:[%s176 + $0x1d8] sm:$0xff] %vm5759, %v5476
        %5820 = vst.msk [vmem:[%s176 + $0x1e0] sm:$0xff] %vm5759, %v5478
        %5821 = vst.msk [vmem:[%s176 + $0x1e8] sm:$0xff] %vm5759, %v5478
        %5822 = vst.msk [vmem:[%s176 + $0x1f0] sm:$0xff] %vm5759, %v5478
        %5823 = vst.msk [vmem:[%s176 + $0x1f8] sm:$0xff] %vm5759, %v5478
        %5824 = vst.msk [vmem:[%s176 + $0x200] sm:$0xff] %vm5759, %v5480
        %5825 = vst.msk [vmem:[%s176 + $0x208] sm:$0xff] %vm5759, %v5480
        %5826 = vst.msk [vmem:[%s176 + $0x210] sm:$0xff] %vm5759, %v5480
        %5827 = vst.msk [vmem:[%s176 + $0x218] sm:$0xff] %vm5759, %v5480
        %5828 = vst.msk [vmem:[%s176 + $0x220] sm:$0xff] %vm5759, %v5482
        %5829 = vst.msk [vmem:[%s176 + $0x228] sm:$0xff] %vm5759, %v5482
        %5830 = vst.msk [vmem:[%s176 + $0x230] sm:$0xff] %vm5759, %v5482
        %5831 = vst.msk [vmem:[%s176 + $0x238] sm:$0xff] %vm5759, %v5482
        %5832 = vst.msk [vmem:[%s176 + $0x240] sm:$0xff] %vm5759, %v5484
        %5833 = vst.msk [vmem:[%s176 + $0x248] sm:$0xff] %vm5759, %v5484
        %5834 = vst.msk [vmem:[%s176 + $0x250] sm:$0xff] %vm5759, %v5484
        %5835 = vst.msk [vmem:[%s176 + $0x258] sm:$0xff] %vm5759, %v5484
        %5836 = vst.msk [vmem:[%s176 + $0x260] sm:$0xff] %vm5759, %v5486
        %5837 = vst.msk [vmem:[%s176 + $0x268] sm:$0xff] %vm5759, %v5486
        %5838 = vst.msk [vmem:[%s176 + $0x270] sm:$0xff] %vm5759, %v5486
        %5839 = vst.msk [vmem:[%s176 + $0x278] sm:$0xff] %vm5759, %v5486
        %5840 = vst.msk [vmem:[%s176 + $0x280] sm:$0xff] %vm5759, %v5488
        %5841 = vst.msk [vmem:[%s176 + $0x288] sm:$0xff] %vm5759, %v5488
        %5842 = vst.msk [vmem:[%s176 + $0x290] sm:$0xff] %vm5759, %v5488
        %5843 = vst.msk [vmem:[%s176 + $0x298] sm:$0xff] %vm5759, %v5488
        %5844 = vst.msk [vmem:[%s176 + $0x2a0] sm:$0xff] %vm5759, %v5490
        %5845 = vst.msk [vmem:[%s176 + $0x2a8] sm:$0xff] %vm5759, %v5490
        %5846 = vst.msk [vmem:[%s176 + $0x2b0] sm:$0xff] %vm5759, %v5490
        %5847 = vst.msk [vmem:[%s176 + $0x2b8] sm:$0xff] %vm5759, %v5490
        %5848 = vst.msk [vmem:[%s176 + $0x2c0] sm:$0xff] %vm5759, %v5492
        %5849 = vst.msk [vmem:[%s176 + $0x2c8] sm:$0xff] %vm5759, %v5492
        %5850 = vst.msk [vmem:[%s176 + $0x2d0] sm:$0xff] %vm5759, %v5492
        %5851 = vst.msk [vmem:[%s176 + $0x2d8] sm:$0xff] %vm5759, %v5492
        %5852 = vst.msk [vmem:[%s176 + $0x2e0] sm:$0xff] %vm5759, %v5494
        %5853 = vst.msk [vmem:[%s176 + $0x2e8] sm:$0xff] %vm5759, %v5494
        %5854 = vst.msk [vmem:[%s176 + $0x2f0] sm:$0xff] %vm5759, %v5494
        %5855 = vst.msk [vmem:[%s176 + $0x2f8] sm:$0xff] %vm5759, %v5494
        %5856 = vst.msk [vmem:[%s176 + $0x300] sm:$0xff] %vm5759, %v5496
        %5857 = vst.msk [vmem:[%s176 + $0x308] sm:$0xff] %vm5759, %v5496
        %5858 = vst.msk [vmem:[%s176 + $0x310] sm:$0xff] %vm5759, %v5496
        %5859 = vst.msk [vmem:[%s176 + $0x318] sm:$0xff] %vm5759, %v5496
        %5860 = vst.msk [vmem:[%s176 + $0x320] sm:$0xff] %vm5759, %v5498
        %5861 = vst.msk [vmem:[%s176 + $0x328] sm:$0xff] %vm5759, %v5498
        %5862 = vst.msk [vmem:[%s176 + $0x330] sm:$0xff] %vm5759, %v5498
        %5863 = vst.msk [vmem:[%s176 + $0x338] sm:$0xff] %vm5759, %v5498
        %5864 = vst.msk [vmem:[%s176 + $0x340] sm:$0xff] %vm5759, %v5500
        %5865 = vst.msk [vmem:[%s176 + $0x348] sm:$0xff] %vm5759, %v5500
        %5866 = vst.msk [vmem:[%s176 + $0x350] sm:$0xff] %vm5759, %v5500
        %5867 = vst.msk [vmem:[%s176 + $0x358] sm:$0xff] %vm5759, %v5500
        %5868 = vst.msk [vmem:[%s176 + $0x360] sm:$0xff] %vm5759, %v5502
        %5869 = vst.msk [vmem:[%s176 + $0x368] sm:$0xff] %vm5759, %v5502
        %5870 = vst.msk [vmem:[%s176 + $0x370] sm:$0xff] %vm5759, %v5502
        %5871 = vst.msk [vmem:[%s176 + $0x378] sm:$0xff] %vm5759, %v5502
        %5872 = vst.msk [vmem:[%s176 + $0x380] sm:$0xff] %vm5759, %v5504
        %5873 = vst.msk [vmem:[%s176 + $0x388] sm:$0xff] %vm5759, %v5504
        %5874 = vst.msk [vmem:[%s176 + $0x390] sm:$0xff] %vm5759, %v5504
        %5875 = vst.msk [vmem:[%s176 + $0x398] sm:$0xff] %vm5759, %v5504
        %5876 = vst.msk [vmem:[%s176 + $0x3a0] sm:$0xff] %vm5759, %v5506
        %5877 = vst.msk [vmem:[%s176 + $0x3a8] sm:$0xff] %vm5759, %v5506
        %5878 = vst.msk [vmem:[%s176 + $0x3b0] sm:$0xff] %vm5759, %v5506
        %5879 = vst.msk [vmem:[%s176 + $0x3b8] sm:$0xff] %vm5759, %v5506
        %5880 = vst.msk [vmem:[%s176 + $0x3c0] sm:$0xff] %vm5759, %v5508
        %5881 = vst.msk [vmem:[%s176 + $0x3c8] sm:$0xff] %vm5759, %v5508
        %5882 = vst.msk [vmem:[%s176 + $0x3d0] sm:$0xff] %vm5759, %v5508
        %5883 = vst.msk [vmem:[%s176 + $0x3d8] sm:$0xff] %vm5759, %v5508
        %5884 = vst.msk [vmem:[%s176 + $0x3e0] sm:$0xff] %vm5759, %v5510
        %5885 = vst.msk [vmem:[%s176 + $0x3e8] sm:$0xff] %vm5759, %v5510
        %5886 = vst.msk [vmem:[%s176 + $0x3f0] sm:$0xff] %vm5759, %v5510
        %5887 = vst.msk [vmem:[%s176 + $0x3f8] sm:$0xff] %vm5759, %v5510
        %5888 = vst.msk [vmem:[%s176 + $0x400] sm:$0xff] %vm5759, %v5512
        %5889 = vst.msk [vmem:[%s176 + $0x408] sm:$0xff] %vm5759, %v5512
        %5890 = vst.msk [vmem:[%s176 + $0x410] sm:$0xff] %vm5759, %v5512
        %5891 = vst.msk [vmem:[%s176 + $0x418] sm:$0xff] %vm5759, %v5512
        %5892 = vst.msk [vmem:[%s176 + $0x420] sm:$0xff] %vm5759, %v5514
        %5893 = vst.msk [vmem:[%s176 + $0x428] sm:$0xff] %vm5759, %v5514
        %5894 = vst.msk [vmem:[%s176 + $0x430] sm:$0xff] %vm5759, %v5514
        %5895 = vst.msk [vmem:[%s176 + $0x438] sm:$0xff] %vm5759, %v5514
        %5896 = vst.msk [vmem:[%s176 + $0x440] sm:$0xff] %vm5759, %v5516
        %5897 = vst.msk [vmem:[%s176 + $0x448] sm:$0xff] %vm5759, %v5516
        %5898 = vst.msk [vmem:[%s176 + $0x450] sm:$0xff] %vm5759, %v5516
        %5899 = vst.msk [vmem:[%s176 + $0x458] sm:$0xff] %vm5759, %v5516
        %5900 = vst.msk [vmem:[%s176 + $0x460] sm:$0xff] %vm5759, %v5518
        %5901 = vst.msk [vmem:[%s176 + $0x468] sm:$0xff] %vm5759, %v5518
        %5902 = vst.msk [vmem:[%s176 + $0x470] sm:$0xff] %vm5759, %v5518
        %5903 = vst.msk [vmem:[%s176 + $0x478] sm:$0xff] %vm5759, %v5518
        %5904 = vst.msk [vmem:[%s176 + $0x480] sm:$0xff] %vm5759, %v5520
        %5905 = vst.msk [vmem:[%s176 + $0x488] sm:$0xff] %vm5759, %v5520
        %5906 = vst.msk [vmem:[%s176 + $0x490] sm:$0xff] %vm5759, %v5520
        %5907 = vst.msk [vmem:[%s176 + $0x498] sm:$0xff] %vm5759, %v5520
        %5908 = vst.msk [vmem:[%s176 + $0x4a0] sm:$0xff] %vm5759, %v5522
        %5909 = vst.msk [vmem:[%s176 + $0x4a8] sm:$0xff] %vm5759, %v5522
        %5910 = vst.msk [vmem:[%s176 + $0x4b0] sm:$0xff] %vm5759, %v5522
        %5911 = vst.msk [vmem:[%s176 + $0x4b8] sm:$0xff] %vm5759, %v5522
        %5912 = vst.msk [vmem:[%s176 + $0x4c0] sm:$0xff] %vm5759, %v5524
        %5913 = vst.msk [vmem:[%s176 + $0x4c8] sm:$0xff] %vm5759, %v5524
        %5914 = vst.msk [vmem:[%s176 + $0x4d0] sm:$0xff] %vm5759, %v5524
        %5915 = vst.msk [vmem:[%s176 + $0x4d8] sm:$0xff] %vm5759, %v5524
        %5916 = vst.msk [vmem:[%s176 + $0x4e0] sm:$0xff] %vm5759, %v5526
        %5917 = vst.msk [vmem:[%s176 + $0x4e8] sm:$0xff] %vm5759, %v5526
        %5918 = vst.msk [vmem:[%s176 + $0x4f0] sm:$0xff] %vm5759, %v5526
        %5919 = vst.msk [vmem:[%s176 + $0x4f8] sm:$0xff] %vm5759, %v5526
        %5920 = vst.msk [vmem:[%s176 + $0x500] sm:$0xff] %vm5759, %v5528
        %5921 = vst.msk [vmem:[%s176 + $0x508] sm:$0xff] %vm5759, %v5528
        %5922 = vst.msk [vmem:[%s176 + $0x510] sm:$0xff] %vm5759, %v5528
        %5923 = vst.msk [vmem:[%s176 + $0x518] sm:$0xff] %vm5759, %v5528
        %5924 = vst.msk [vmem:[%s176 + $0x520] sm:$0xff] %vm5759, %v5530
        %5925 = vst.msk [vmem:[%s176 + $0x528] sm:$0xff] %vm5759, %v5530
        %5926 = vst.msk [vmem:[%s176 + $0x530] sm:$0xff] %vm5759, %v5530
        %5927 = vst.msk [vmem:[%s176 + $0x538] sm:$0xff] %vm5759, %v5530
        %5928 = vst.msk [vmem:[%s176 + $0x540] sm:$0xff] %vm5759, %v5532
        %5929 = vst.msk [vmem:[%s176 + $0x548] sm:$0xff] %vm5759, %v5532
        %5930 = vst.msk [vmem:[%s176 + $0x550] sm:$0xff] %vm5759, %v5532
        %5931 = vst.msk [vmem:[%s176 + $0x558] sm:$0xff] %vm5759, %v5532
        %5932 = vst.msk [vmem:[%s176 + $0x560] sm:$0xff] %vm5759, %v5534
        %5933 = vst.msk [vmem:[%s176 + $0x568] sm:$0xff] %vm5759, %v5534
        %5934 = vst.msk [vmem:[%s176 + $0x570] sm:$0xff] %vm5759, %v5534
        %5935 = vst.msk [vmem:[%s176 + $0x578] sm:$0xff] %vm5759, %v5534
        %5936 = vst.msk [vmem:[%s176 + $0x580] sm:$0xff] %vm5759, %v5536
        %5937 = vst.msk [vmem:[%s176 + $0x588] sm:$0xff] %vm5759, %v5536
        %5938 = vst.msk [vmem:[%s176 + $0x590] sm:$0xff] %vm5759, %v5536
        %5939 = vst.msk [vmem:[%s176 + $0x598] sm:$0xff] %vm5759, %v5536
        %5940 = vst.msk [vmem:[%s176 + $0x5a0] sm:$0xff] %vm5759, %v5538
        %5941 = vst.msk [vmem:[%s176 + $0x5a8] sm:$0xff] %vm5759, %v5538
        %5942 = vst.msk [vmem:[%s176 + $0x5b0] sm:$0xff] %vm5759, %v5538
        %5943 = vst.msk [vmem:[%s176 + $0x5b8] sm:$0xff] %vm5759, %v5538
        %5944 = vst.msk [vmem:[%s176 + $0x5c0] sm:$0xff] %vm5759, %v5540
        %5945 = vst.msk [vmem:[%s176 + $0x5c8] sm:$0xff] %vm5759, %v5540
        %5946 = vst.msk [vmem:[%s176 + $0x5d0] sm:$0xff] %vm5759, %v5540
        %5947 = vst.msk [vmem:[%s176 + $0x5d8] sm:$0xff] %vm5759, %v5540
        %5948 = vst.msk [vmem:[%s176 + $0x5e0] sm:$0xff] %vm5759, %v5542
        %5949 = vst.msk [vmem:[%s176 + $0x5e8] sm:$0xff] %vm5759, %v5542
        %5950 = vst.msk [vmem:[%s176 + $0x5f0] sm:$0xff] %vm5759, %v5542
        %5951 = vst.msk [vmem:[%s176 + $0x5f8] sm:$0xff] %vm5759, %v5542
        %5952 = vst.msk [vmem:[%s176 + $0x600] sm:$0xff] %vm5759, %v5544
        %5953 = vst.msk [vmem:[%s176 + $0x608] sm:$0xff] %vm5759, %v5544
        %5954 = vst.msk [vmem:[%s176 + $0x610] sm:$0xff] %vm5759, %v5544
        %5955 = vst.msk [vmem:[%s176 + $0x618] sm:$0xff] %vm5759, %v5544
        %5956 = vst.msk [vmem:[%s176 + $0x620] sm:$0xff] %vm5759, %v5546
        %5957 = vst.msk [vmem:[%s176 + $0x628] sm:$0xff] %vm5759, %v5546
        %5958 = vst.msk [vmem:[%s176 + $0x630] sm:$0xff] %vm5759, %v5546
        %5959 = vst.msk [vmem:[%s176 + $0x638] sm:$0xff] %vm5759, %v5546
        %5960 = vst.msk [vmem:[%s176 + $0x640] sm:$0xff] %vm5759, %v5548
        %5961 = vst.msk [vmem:[%s176 + $0x648] sm:$0xff] %vm5759, %v5548
        %5962 = vst.msk [vmem:[%s176 + $0x650] sm:$0xff] %vm5759, %v5548
        %5963 = vst.msk [vmem:[%s176 + $0x658] sm:$0xff] %vm5759, %v5548
        %5964 = vst.msk [vmem:[%s176 + $0x660] sm:$0xff] %vm5759, %v5550
        %5965 = vst.msk [vmem:[%s176 + $0x668] sm:$0xff] %vm5759, %v5550
        %5966 = vst.msk [vmem:[%s176 + $0x670] sm:$0xff] %vm5759, %v5550
        %5967 = vst.msk [vmem:[%s176 + $0x678] sm:$0xff] %vm5759, %v5550
        %5968 = vst.msk [vmem:[%s176 + $0x680] sm:$0xff] %vm5759, %v5552
        %5969 = vst.msk [vmem:[%s176 + $0x688] sm:$0xff] %vm5759, %v5552
        %5970 = vst.msk [vmem:[%s176 + $0x690] sm:$0xff] %vm5759, %v5552
        %5971 = vst.msk [vmem:[%s176 + $0x698] sm:$0xff] %vm5759, %v5552
        %5972 = vst.msk [vmem:[%s176 + $0x6a0] sm:$0xff] %vm5759, %v5554
        %5973 = vst.msk [vmem:[%s176 + $0x6a8] sm:$0xff] %vm5759, %v5554
        %5974 = vst.msk [vmem:[%s176 + $0x6b0] sm:$0xff] %vm5759, %v5554
        %5975 = vst.msk [vmem:[%s176 + $0x6b8] sm:$0xff] %vm5759, %v5554
        %5976 = vst.msk [vmem:[%s176 + $0x6c0] sm:$0xff] %vm5759, %v5556
        %5977 = vst.msk [vmem:[%s176 + $0x6c8] sm:$0xff] %vm5759, %v5556
        %5978 = vst.msk [vmem:[%s176 + $0x6d0] sm:$0xff] %vm5759, %v5556
        %5979 = vst.msk [vmem:[%s176 + $0x6d8] sm:$0xff] %vm5759, %v5556
        %5980 = vst.msk [vmem:[%s176 + $0x6e0] sm:$0xff] %vm5759, %v5558
        %5981 = vst.msk [vmem:[%s176 + $0x6e8] sm:$0xff] %vm5759, %v5558
        %5982 = vst.msk [vmem:[%s176 + $0x6f0] sm:$0xff] %vm5759, %v5558
        %5983 = vst.msk [vmem:[%s176 + $0x6f8] sm:$0xff] %vm5759, %v5558
        %5984 = vst.msk [vmem:[%s176 + $0x700] sm:$0xff] %vm5759, %v5560
        %5985 = vst.msk [vmem:[%s176 + $0x708] sm:$0xff] %vm5759, %v5560
        %5986 = vst.msk [vmem:[%s176 + $0x710] sm:$0xff] %vm5759, %v5560
        %5987 = vst.msk [vmem:[%s176 + $0x718] sm:$0xff] %vm5759, %v5560
        %5988 = vst.msk [vmem:[%s176 + $0x720] sm:$0xff] %vm5759, %v5562
        %5989 = vst.msk [vmem:[%s176 + $0x728] sm:$0xff] %vm5759, %v5562
        %5990 = vst.msk [vmem:[%s176 + $0x730] sm:$0xff] %vm5759, %v5562
        %5991 = vst.msk [vmem:[%s176 + $0x738] sm:$0xff] %vm5759, %v5562
        %5992 = vst.msk [vmem:[%s176 + $0x740] sm:$0xff] %vm5759, %v5564
        %5993 = vst.msk [vmem:[%s176 + $0x748] sm:$0xff] %vm5759, %v5564
        %5994 = vst.msk [vmem:[%s176 + $0x750] sm:$0xff] %vm5759, %v5564
        %5995 = vst.msk [vmem:[%s176 + $0x758] sm:$0xff] %vm5759, %v5564
        %5996 = vst.msk [vmem:[%s176 + $0x760] sm:$0xff] %vm5759, %v5566
        %5997 = vst.msk [vmem:[%s176 + $0x768] sm:$0xff] %vm5759, %v5566
        %5998 = vst.msk [vmem:[%s176 + $0x770] sm:$0xff] %vm5759, %v5566
        %5999 = vst.msk [vmem:[%s176 + $0x778] sm:$0xff] %vm5759, %v5566
        %6000 = vst.msk [vmem:[%s176 + $0x780] sm:$0xff] %vm5759, %v5568
        %6001 = vst.msk [vmem:[%s176 + $0x788] sm:$0xff] %vm5759, %v5568
        %6002 = vst.msk [vmem:[%s176 + $0x790] sm:$0xff] %vm5759, %v5568
        %6003 = vst.msk [vmem:[%s176 + $0x798] sm:$0xff] %vm5759, %v5568
        %6004 = vst.msk [vmem:[%s176 + $0x7a0] sm:$0xff] %vm5759, %v5570
        %6005 = vst.msk [vmem:[%s176 + $0x7a8] sm:$0xff] %vm5759, %v5570
        %6006 = vst.msk [vmem:[%s176 + $0x7b0] sm:$0xff] %vm5759, %v5570
        %6007 = vst.msk [vmem:[%s176 + $0x7b8] sm:$0xff] %vm5759, %v5570
        %6008 = vst.msk [vmem:[%s176 + $0x7c0] sm:$0xff] %vm5759, %v5572
        %6009 = vst.msk [vmem:[%s176 + $0x7c8] sm:$0xff] %vm5759, %v5572
        %6010 = vst.msk [vmem:[%s176 + $0x7d0] sm:$0xff] %vm5759, %v5572
        %6011 = vst.msk [vmem:[%s176 + $0x7d8] sm:$0xff] %vm5759, %v5572
        %6012 = vst.msk [vmem:[%s176 + $0x7e0] sm:$0xff] %vm5759, %v5574
        %6013 = vst.msk [vmem:[%s176 + $0x7e8] sm:$0xff] %vm5759, %v5574
        %6014 = vst.msk [vmem:[%s176 + $0x7f0] sm:$0xff] %vm5759, %v5574
        %6015 = vst.msk [vmem:[%s176 + $0x7f8] sm:$0xff] %vm5759, %v5574
        %6016 = vst.msk [vmem:[%s176 + $0x800] sm:$0xff] %vm5759, %v5576
        %6017 = vst.msk [vmem:[%s176 + $0x808] sm:$0xff] %vm5759, %v5576
        %6018 = vst.msk [vmem:[%s176 + $0x810] sm:$0xff] %vm5759, %v5576
        %6019 = vst.msk [vmem:[%s176 + $0x818] sm:$0xff] %vm5759, %v5576
        %6020 = vst.msk [vmem:[%s176 + $0x820] sm:$0xff] %vm5759, %v5578
        %6021 = vst.msk [vmem:[%s176 + $0x828] sm:$0xff] %vm5759, %v5578
        %6022 = vst.msk [vmem:[%s176 + $0x830] sm:$0xff] %vm5759, %v5578
        %6023 = vst.msk [vmem:[%s176 + $0x838] sm:$0xff] %vm5759, %v5578
        %6024 = vst.msk [vmem:[%s176 + $0x840] sm:$0xff] %vm5759, %v5580
        %6025 = vst.msk [vmem:[%s176 + $0x848] sm:$0xff] %vm5759, %v5580
        %6026 = vst.msk [vmem:[%s176 + $0x850] sm:$0xff] %vm5759, %v5580
        %6027 = vst.msk [vmem:[%s176 + $0x858] sm:$0xff] %vm5759, %v5580
        %6028 = vst.msk [vmem:[%s176 + $0x860] sm:$0xff] %vm5759, %v5582
        %6029 = vst.msk [vmem:[%s176 + $0x868] sm:$0xff] %vm5759, %v5582
        %6030 = vst.msk [vmem:[%s176 + $0x870] sm:$0xff] %vm5759, %v5582
        %6031 = vst.msk [vmem:[%s176 + $0x878] sm:$0xff] %vm5759, %v5582
        %6032 = vst.msk [vmem:[%s176 + $0x880] sm:$0xff] %vm5759, %v5584
        %6033 = vst.msk [vmem:[%s176 + $0x888] sm:$0xff] %vm5759, %v5584
        %6034 = vst.msk [vmem:[%s176 + $0x890] sm:$0xff] %vm5759, %v5584
        %6035 = vst.msk [vmem:[%s176 + $0x898] sm:$0xff] %vm5759, %v5584
        %6036 = vst.msk [vmem:[%s176 + $0x8a0] sm:$0xff] %vm5759, %v5586
        %6037 = vst.msk [vmem:[%s176 + $0x8a8] sm:$0xff] %vm5759, %v5586
        %6038 = vst.msk [vmem:[%s176 + $0x8b0] sm:$0xff] %vm5759, %v5586
        %6039 = vst.msk [vmem:[%s176 + $0x8b8] sm:$0xff] %vm5759, %v5586
        %6040 = vst.msk [vmem:[%s176 + $0x8c0] sm:$0xff] %vm5759, %v5588
        %6041 = vst.msk [vmem:[%s176 + $0x8c8] sm:$0xff] %vm5759, %v5588
        %6042 = vst.msk [vmem:[%s176 + $0x8d0] sm:$0xff] %vm5759, %v5588
        %6043 = vst.msk [vmem:[%s176 + $0x8d8] sm:$0xff] %vm5759, %v5588
        %6044 = vst.msk [vmem:[%s176 + $0x8e0] sm:$0xff] %vm5759, %v5590
        %6045 = vst.msk [vmem:[%s176 + $0x8e8] sm:$0xff] %vm5759, %v5590
        %6046 = vst.msk [vmem:[%s176 + $0x8f0] sm:$0xff] %vm5759, %v5590
        %6047 = vst.msk [vmem:[%s176 + $0x8f8] sm:$0xff] %vm5759, %v5590
        %6048 = vst.msk [vmem:[%s176 + $0x900] sm:$0xff] %vm5759, %v5592
        %6049 = vst.msk [vmem:[%s176 + $0x908] sm:$0xff] %vm5759, %v5592
        %6050 = vst.msk [vmem:[%s176 + $0x910] sm:$0xff] %vm5759, %v5592
        %6051 = vst.msk [vmem:[%s176 + $0x918] sm:$0xff] %vm5759, %v5592
        %6052 = vst.msk [vmem:[%s176 + $0x920] sm:$0xff] %vm5759, %v5594
        %6053 = vst.msk [vmem:[%s176 + $0x928] sm:$0xff] %vm5759, %v5594
        %6054 = vst.msk [vmem:[%s176 + $0x930] sm:$0xff] %vm5759, %v5594
        %6055 = vst.msk [vmem:[%s176 + $0x938] sm:$0xff] %vm5759, %v5594
        %6056 = vst.msk [vmem:[%s176 + $0x940] sm:$0xff] %vm5759, %v5596
        %6057 = vst.msk [vmem:[%s176 + $0x948] sm:$0xff] %vm5759, %v5596
        %6058 = vst.msk [vmem:[%s176 + $0x950] sm:$0xff] %vm5759, %v5596
        %6059 = vst.msk [vmem:[%s176 + $0x958] sm:$0xff] %vm5759, %v5596
        %6060 = vst.msk [vmem:[%s176 + $0x960] sm:$0xff] %vm5759, %v5598
        %6061 = vst.msk [vmem:[%s176 + $0x968] sm:$0xff] %vm5759, %v5598
        %6062 = vst.msk [vmem:[%s176 + $0x970] sm:$0xff] %vm5759, %v5598
        %6063 = vst.msk [vmem:[%s176 + $0x978] sm:$0xff] %vm5759, %v5598
        %6064 = vst.msk [vmem:[%s176 + $0x980] sm:$0xff] %vm5759, %v5600
        %6065 = vst.msk [vmem:[%s176 + $0x988] sm:$0xff] %vm5759, %v5600
        %6066 = vst.msk [vmem:[%s176 + $0x990] sm:$0xff] %vm5759, %v5600
        %6067 = vst.msk [vmem:[%s176 + $0x998] sm:$0xff] %vm5759, %v5600
        %6068 = vst.msk [vmem:[%s176 + $0x9a0] sm:$0xff] %vm5759, %v5602
        %6069 = vst.msk [vmem:[%s176 + $0x9a8] sm:$0xff] %vm5759, %v5602
        %6070 = vst.msk [vmem:[%s176 + $0x9b0] sm:$0xff] %vm5759, %v5602
        %6071 = vst.msk [vmem:[%s176 + $0x9b8] sm:$0xff] %vm5759, %v5602
        %6072 = vst.msk [vmem:[%s176 + $0x9c0] sm:$0xff] %vm5759, %v5604
        %6073 = vst.msk [vmem:[%s176 + $0x9c8] sm:$0xff] %vm5759, %v5604
        %6074 = vst.msk [vmem:[%s176 + $0x9d0] sm:$0xff] %vm5759, %v5604
        %6075 = vst.msk [vmem:[%s176 + $0x9d8] sm:$0xff] %vm5759, %v5604
        %6076 = vst.msk [vmem:[%s176 + $0x9e0] sm:$0xff] %vm5759, %v5606
        %6077 = vst.msk [vmem:[%s176 + $0x9e8] sm:$0xff] %vm5759, %v5606
        %6078 = vst.msk [vmem:[%s176 + $0x9f0] sm:$0xff] %vm5759, %v5606
        %6079 = vst.msk [vmem:[%s176 + $0x9f8] sm:$0xff] %vm5759, %v5606
        %6080 = vst.msk [vmem:[%s176 + $0xa00] sm:$0xff] %vm5759, %v5608
        %6081 = vst.msk [vmem:[%s176 + $0xa08] sm:$0xff] %vm5759, %v5608
        %6082 = vst.msk [vmem:[%s176 + $0xa10] sm:$0xff] %vm5759, %v5608
        %6083 = vst.msk [vmem:[%s176 + $0xa18] sm:$0xff] %vm5759, %v5608
        %6084 = vst.msk [vmem:[%s176 + $0xa20] sm:$0xff] %vm5759, %v5610
        %6085 = vst.msk [vmem:[%s176 + $0xa28] sm:$0xff] %vm5759, %v5610
        %6086 = vst.msk [vmem:[%s176 + $0xa30] sm:$0xff] %vm5759, %v5610
        %6087 = vst.msk [vmem:[%s176 + $0xa38] sm:$0xff] %vm5759, %v5610
        %6088 = vst.msk [vmem:[%s176 + $0xa40] sm:$0xff] %vm5759, %v5612
        %6089 = vst.msk [vmem:[%s176 + $0xa48] sm:$0xff] %vm5759, %v5612
        %6090 = vst.msk [vmem:[%s176 + $0xa50] sm:$0xff] %vm5759, %v5612
        %6091 = vst.msk [vmem:[%s176 + $0xa58] sm:$0xff] %vm5759, %v5612
        %6092 = vst.msk [vmem:[%s176 + $0xa60] sm:$0xff] %vm5759, %v5614
        %6093 = vst.msk [vmem:[%s176 + $0xa68] sm:$0xff] %vm5759, %v5614
        %6094 = vst.msk [vmem:[%s176 + $0xa70] sm:$0xff] %vm5759, %v5614
        %6095 = vst.msk [vmem:[%s176 + $0xa78] sm:$0xff] %vm5759, %v5614
        %6096 = vst.msk [vmem:[%s176 + $0xa80] sm:$0xff] %vm5759, %v5616
        %6097 = vst.msk [vmem:[%s176 + $0xa88] sm:$0xff] %vm5759, %v5616
        %6098 = vst.msk [vmem:[%s176 + $0xa90] sm:$0xff] %vm5759, %v5616
        %6099 = vst.msk [vmem:[%s176 + $0xa98] sm:$0xff] %vm5759, %v5616
        %6100 = vst.msk [vmem:[%s176 + $0xaa0] sm:$0xff] %vm5759, %v5618
        %6101 = vst.msk [vmem:[%s176 + $0xaa8] sm:$0xff] %vm5759, %v5618
        %6102 = vst.msk [vmem:[%s176 + $0xab0] sm:$0xff] %vm5759, %v5618
        %6103 = vst.msk [vmem:[%s176 + $0xab8] sm:$0xff] %vm5759, %v5618
        %6104 = vst.msk [vmem:[%s176 + $0xac0] sm:$0xff] %vm5759, %v5620
        %6105 = vst.msk [vmem:[%s176 + $0xac8] sm:$0xff] %vm5759, %v5620
        %6106 = vst.msk [vmem:[%s176 + $0xad0] sm:$0xff] %vm5759, %v5620
        %6107 = vst.msk [vmem:[%s176 + $0xad8] sm:$0xff] %vm5759, %v5620
        %6108 = vst.msk [vmem:[%s176 + $0xae0] sm:$0xff] %vm5759, %v5622
        %6109 = vst.msk [vmem:[%s176 + $0xae8] sm:$0xff] %vm5759, %v5622
        %6110 = vst.msk [vmem:[%s176 + $0xaf0] sm:$0xff] %vm5759, %v5622
        %6111 = vst.msk [vmem:[%s176 + $0xaf8] sm:$0xff] %vm5759, %v5622
        %6112 = vst.msk [vmem:[%s176 + $0xb00] sm:$0xff] %vm5759, %v5624
        %6113 = vst.msk [vmem:[%s176 + $0xb08] sm:$0xff] %vm5759, %v5624
        %6114 = vst.msk [vmem:[%s176 + $0xb10] sm:$0xff] %vm5759, %v5624
        %6115 = vst.msk [vmem:[%s176 + $0xb18] sm:$0xff] %vm5759, %v5624
        %6116 = vst.msk [vmem:[%s176 + $0xb20] sm:$0xff] %vm5759, %v5626
        %6117 = vst.msk [vmem:[%s176 + $0xb28] sm:$0xff] %vm5759, %v5626
        %6118 = vst.msk [vmem:[%s176 + $0xb30] sm:$0xff] %vm5759, %v5626
        %6119 = vst.msk [vmem:[%s176 + $0xb38] sm:$0xff] %vm5759, %v5626
        %6120 = vst.msk [vmem:[%s176 + $0xb40] sm:$0xff] %vm5759, %v5628
        %6121 = vst.msk [vmem:[%s176 + $0xb48] sm:$0xff] %vm5759, %v5628
        %6122 = vst.msk [vmem:[%s176 + $0xb50] sm:$0xff] %vm5759, %v5628
        %6123 = vst.msk [vmem:[%s176 + $0xb58] sm:$0xff] %vm5759, %v5628
        %6124 = vst.msk [vmem:[%s176 + $0xb60] sm:$0xff] %vm5759, %v5630
        %6125 = vst.msk [vmem:[%s176 + $0xb68] sm:$0xff] %vm5759, %v5630
        %6126 = vst.msk [vmem:[%s176 + $0xb70] sm:$0xff] %vm5759, %v5630
        %6127 = vst.msk [vmem:[%s176 + $0xb78] sm:$0xff] %vm5759, %v5630
        %6128 = vst.msk [vmem:[%s176 + $0xb80] sm:$0xff] %vm5759, %v5632
        %6129 = vst.msk [vmem:[%s176 + $0xb88] sm:$0xff] %vm5759, %v5632
        %6130 = vst.msk [vmem:[%s176 + $0xb90] sm:$0xff] %vm5759, %v5632
        %6131 = vst.msk [vmem:[%s176 + $0xb98] sm:$0xff] %vm5759, %v5632
        %6132 = vst.msk [vmem:[%s176 + $0xba0] sm:$0xff] %vm5759, %v5634
        %6133 = vst.msk [vmem:[%s176 + $0xba8] sm:$0xff] %vm5759, %v5634
        %6134 = vst.msk [vmem:[%s176 + $0xbb0] sm:$0xff] %vm5759, %v5634
        %6135 = vst.msk [vmem:[%s176 + $0xbb8] sm:$0xff] %vm5759, %v5634
        %6136 = vst.msk [vmem:[%s176 + $0xbc0] sm:$0xff] %vm5759, %v5636
        %6137 = vst.msk [vmem:[%s176 + $0xbc8] sm:$0xff] %vm5759, %v5636
        %6138 = vst.msk [vmem:[%s176 + $0xbd0] sm:$0xff] %vm5759, %v5636
        %6139 = vst.msk [vmem:[%s176 + $0xbd8] sm:$0xff] %vm5759, %v5636
        %6140 = vst.msk [vmem:[%s176 + $0xbe0] sm:$0xff] %vm5759, %v5638
        %6141 = vst.msk [vmem:[%s176 + $0xbe8] sm:$0xff] %vm5759, %v5638
        %6142 = vst.msk [vmem:[%s176 + $0xbf0] sm:$0xff] %vm5759, %v5638
        %6143 = vst.msk [vmem:[%s176 + $0xbf8] sm:$0xff] %vm5759, %v5638
        %6144 = vst.msk [vmem:[%s176 + $0xc00] sm:$0xff] %vm5759, %v5640
        %6145 = vst.msk [vmem:[%s176 + $0xc08] sm:$0xff] %vm5759, %v5640
        %6146 = vst.msk [vmem:[%s176 + $0xc10] sm:$0xff] %vm5759, %v5640
        %6147 = vst.msk [vmem:[%s176 + $0xc18] sm:$0xff] %vm5759, %v5640
        %6148 = vst.msk [vmem:[%s176 + $0xc20] sm:$0xff] %vm5759, %v5642
        %6149 = vst.msk [vmem:[%s176 + $0xc28] sm:$0xff] %vm5759, %v5642
        %6150 = vst.msk [vmem:[%s176 + $0xc30] sm:$0xff] %vm5759, %v5642
        %6151 = vst.msk [vmem:[%s176 + $0xc38] sm:$0xff] %vm5759, %v5642
        %6152 = vst.msk [vmem:[%s176 + $0xc40] sm:$0xff] %vm5759, %v5644
        %6153 = vst.msk [vmem:[%s176 + $0xc48] sm:$0xff] %vm5759, %v5644
        %6154 = vst.msk [vmem:[%s176 + $0xc50] sm:$0xff] %vm5759, %v5644
        %6155 = vst.msk [vmem:[%s176 + $0xc58] sm:$0xff] %vm5759, %v5644
        %6156 = vst.msk [vmem:[%s176 + $0xc60] sm:$0xff] %vm5759, %v5646
        %6157 = vst.msk [vmem:[%s176 + $0xc68] sm:$0xff] %vm5759, %v5646
        %6158 = vst.msk [vmem:[%s176 + $0xc70] sm:$0xff] %vm5759, %v5646
        %6159 = vst.msk [vmem:[%s176 + $0xc78] sm:$0xff] %vm5759, %v5646
        %6160 = vst.msk [vmem:[%s176 + $0xc80] sm:$0xff] %vm5759, %v5648
        %6161 = vst.msk [vmem:[%s176 + $0xc88] sm:$0xff] %vm5759, %v5648
        %6162 = vst.msk [vmem:[%s176 + $0xc90] sm:$0xff] %vm5759, %v5648
        %6163 = vst.msk [vmem:[%s176 + $0xc98] sm:$0xff] %vm5759, %v5648
        %6164 = vst.msk [vmem:[%s176 + $0xca0] sm:$0xff] %vm5759, %v5650
        %6165 = vst.msk [vmem:[%s176 + $0xca8] sm:$0xff] %vm5759, %v5650
        %6166 = vst.msk [vmem:[%s176 + $0xcb0] sm:$0xff] %vm5759, %v5650
        %6167 = vst.msk [vmem:[%s176 + $0xcb8] sm:$0xff] %vm5759, %v5650
        %6168 = vst.msk [vmem:[%s176 + $0xcc0] sm:$0xff] %vm5759, %v5652
        %6169 = vst.msk [vmem:[%s176 + $0xcc8] sm:$0xff] %vm5759, %v5652
        %6170 = vst.msk [vmem:[%s176 + $0xcd0] sm:$0xff] %vm5759, %v5652
        %6171 = vst.msk [vmem:[%s176 + $0xcd8] sm:$0xff] %vm5759, %v5652
        %6172 = vst.msk [vmem:[%s176 + $0xce0] sm:$0xff] %vm5759, %v5654
        %6173 = vst.msk [vmem:[%s176 + $0xce8] sm:$0xff] %vm5759, %v5654
        %6174 = vst.msk [vmem:[%s176 + $0xcf0] sm:$0xff] %vm5759, %v5654
        %6175 = vst.msk [vmem:[%s176 + $0xcf8] sm:$0xff] %vm5759, %v5654
        %s6176 = sand.u32 %s93, 1
        %s6177 = scalar_lea.sflag [#allocation3], %s6176
        %s6178 = sand.u32 %s93, 1
        %s6179 = smul.addr %s6178, 3328
        %s6180 = scalar_lea.vmem [#allocation2], %s6179
        // Predicated region
        $region33: #{tpu_custom_call.1} parent=31 // pred_check
          %p6181 = pneg %p103
        $region34: #{tpu_custom_call.1} parent=31 // pred_check_branch
          %6183 = sbr.rel (%p6181) target = $region36
        $region35: #{tpu_custom_call.1} parent=31 // pred_region
          %s6184 = smul.u32 416, %s17
          %s6185 = ssub.s32 800, %s6184
          %p6186 = scmp.lt.s32.totalorder %s6185, 416
          %s6187 = scalar_select %p6186, %s6185, 416
          %s6188 = smul.u32 128, %s6187
          %s6190 = ssub.s32 53248, %s6188
          %6191 = vsyncadd %s6177, %s6190
          %p6192 = scmp.ne.s32.totalorder 0, %s6188
          %s6193 = smul.addr %s6184, 128
          %s6194 = scalar_lea.hbm %s3, %s6193
          %s6195 = smul.u32 8, %s6187
          %s6196 = sshll.u32 %s6180, 4
          %s6197 = int_to_ptr.vmem [resolvable:$true] %s6196
          %s6198 = sshll.u32 %s6195, 4
          %6202 = dma.vmem_to_hbm [thread:$0]  (%p6192), %s6197, %s6198, %s6194, %s6177, 128, 128, 8
        $region36: #{tpu_custom_call.1} parent=31 // pred_fallthru
          _
      $region32: #{tpu_custom_call.1} parent=5 // pred_fallthru
        _
      %p6203 = scmp.le.s32.totalorder 2, %s12
      // Predicated region
      $region37: #{tpu_custom_call.1} parent=5 // pred_check
        %p6204 = pneg %p6203
      $region38: #{tpu_custom_call.1} parent=5 // pred_check_branch
        %6206 = sbr.rel (%p6204) target = $region40
      $region39: #{tpu_custom_call.1} parent=5 // pred_region
        %s6207 = ssub.s32 %s12, 2
        // Predicated region
        $region41: #{tpu_custom_call.1} parent=39 // pred_check
          %p6208 = pneg %p109
        $region42: #{tpu_custom_call.1} parent=39 // pred_check_branch
          %6210 = sbr.rel (%p6208) target = $region44
        $region43: #{tpu_custom_call.1} parent=39 // pred_region
          %s6211 = sand.u32 %s94, 1
          %s6212 = scalar_lea.sflag [#allocation3], %s6211
          %s6213 = sand.u32 %s94, 1
          %s6214 = smul.addr %s6213, 3328
          %s6215 = scalar_lea.vmem [#allocation2], %s6214
          %6216 = dma.done %s6212, 53248
        $region44: #{tpu_custom_call.1} parent=39 // pred_fallthru
          _
      $region40: #{tpu_custom_call.1} parent=5 // pred_fallthru
        _
    $region6: #{tpu_custom_call.1} parent=1 // loop_footer
      %s16 = sadd.s32 1, %s12
    $region7: #{tpu_custom_call.1} parent=1 // loop_footer_branch
      %11 = sbr.rel target = $region3
    $region8: #{tpu_custom_call.1} parent=1 // loop_exit
      _
    %6217 = vsyncpa [#allocation3], 1
    %s6218 = scalar_lea.sflag [#allocation3], 1
    %6219 = vsyncpa %s6218, 1

</llo_original>
